<compile_context>
chip_gen: v7x
topology: tpu7x:2x2x1
jax: 0.10.0
libtpu: 0.0.40
codegen_flags: <defaults>
</compile_context>

<pallas_src>
import functools

import jax
import jax.numpy as jnp
import numpy as np
from jax.experimental import pallas as pl
from jax.experimental.pallas import tpu as pltpu

HIGH = jax.lax.Precision.HIGHEST  # only used by the pure-JAX reference


def _autoenc_kernel(x_ref,
                    wx1_ref, wh1_ref, b1_ref,
                    w2_ref, b2_ref,
                    w3_ref, b3_ref,
                    wo_ref, bo_ref,
                    out_ref,
                    h1_ref, c1_ref, h2_ref, c2_ref, h3_ref, c3_ref,
                    gx1_ref, h3all_ref,
                    *, batch_p, t_block, hidden_dim, latent_dim):
    Bp = batch_p
    T = t_block
    H = hidden_dim
    L = latent_dim

    # Zero the recurrent state on the first time-block; scratch persists across grid steps.
    @pl.when(pl.program_id(0) == 0)
    def _():
        h1_ref[...] = jnp.zeros_like(h1_ref)
        c1_ref[...] = jnp.zeros_like(c1_ref)
        h2_ref[...] = jnp.zeros_like(h2_ref)
        c2_ref[...] = jnp.zeros_like(c2_ref)
        h3_ref[...] = jnp.zeros_like(h3_ref)
        c3_ref[...] = jnp.zeros_like(c3_ref)

    # ---- Phase 1: time-parallel encoder1 input projection as ONE dense matmul. ----
    gx1_ref[...] = (jnp.dot(x_ref[...], wx1_ref[...],
                            preferred_element_type=jnp.float32)
                    + b1_ref[...])

    # Gate order is [i, f, o, g] (permuted in the wrapper): one sigmoid over the first
    # 3*n gate lanes, one tanh over the last n.
    def cell(gates, c, n):
        sig = jax.nn.sigmoid(gates[:, :3 * n])
        g = jnp.tanh(gates[:, 3 * n:])
        i = sig[:, 0 * n:1 * n]
        f = sig[:, 1 * n:2 * n]
        o = sig[:, 2 * n:3 * n]
        c_new = f * c + i * g
        h_new = o * jnp.tanh(c_new)
        return h_new, c_new

    # ---- Phase 2: recurrent loop over the T timesteps of this block. ----
    # Weights are re-read from VMEM refs each step (cheap vld) instead of being pinned
    # in vregs across the unrolled loop, to avoid spills at larger H.
    def step(t, carry):
        h1, c1, h2, c2, h3, c3 = carry
        row = pl.multiple_of(t * Bp, 8)  # Bp is a multiple of 8 -> aligned slices

        # encoder1: input projection precomputed; only the recurrent dot remains.
        gates1 = gx1_ref[pl.ds(row, Bp), :] + jnp.dot(
            h1, wh1_ref[...], preferred_element_type=jnp.float32)
        h1, c1 = cell(gates1, c1, H)

        # encoder2: single fused dot on [h1 | h2] @ [Wx2; Wh2]
        gates2 = jnp.dot(jnp.concatenate([h1, h2], axis=-1), w2_ref[...],
                         preferred_element_type=jnp.float32) + b2_ref[...]
        h2, c2 = cell(gates2, c2, L)

        # decoder1: single fused dot on [h2 | h3] @ [Wx3; Wh3]
        gates3 = jnp.dot(jnp.concatenate([h2, h3], axis=-1), w3_ref[...],
                         preferred_element_type=jnp.float32) + b3_ref[...]
        h3, c3 = cell(gates3, c3, H)

        # Buffer h3 for the time-parallel output Linear after the loop.
        h3all_ref[pl.ds(row, Bp), :] = h3
        return (h1, c1, h2, c2, h3, c3)

    init = (h1_ref[...], c1_ref[...], h2_ref[...], c2_ref[...],
            h3_ref[...], c3_ref[...])
    unroll = True if T <= 32 else 8
    h1, c1, h2, c2, h3, c3 = jax.lax.fori_loop(0, T, step, init, unroll=unroll)

    # Persist recurrent state for the next time-block.
    h1_ref[...] = h1
    c1_ref[...] = c1
    h2_ref[...] = h2
    c2_ref[...] = c2
    h3_ref[...] = h3
    c3_ref[...] = c3

    # ---- Phase 3: time-parallel output Linear, single lane-dense slab store. ----
    out_ref[...] = (jnp.dot(h3all_ref[...], wo_ref[...],
                            preferred_element_type=jnp.float32)
                    + bo_ref[...])


def _permute_gates_ifog(a):
    """Permute PyTorch gate order [i, f, g, o] -> [i, f, o, g] along the last axis."""
    i, f, g, o = jnp.split(a, 4, axis=-1)
    return jnp.concatenate([i, f, o, g], axis=-1)


def lstm_autoencoder_forward(x, params, block_t=None):
    """x: (B, S, input_dim) float32, batch_first like PyTorch. Returns (B, S, input_dim)."""
    B, S, D_in = x.shape
    hidden_dim = params["wh1"].shape[0]
    latent_dim = params["wh2"].shape[0]

    SUB = 8          # f32 sublane grain
    LANE = 128       # lane width
    Bp = ((B + SUB - 1) // SUB) * SUB              # padded batch
    Dp_out = ((D_in + LANE - 1) // LANE) * LANE    # lane-dense output width

    # ---- Weight prep: gate permutation, per-layer Wx/Wh fusion, lane-padded output. ----
    wx1 = _permute_gates_ifog(params["wx1"])
    wh1 = _permute_gates_ifog(params["wh1"])
    b1 = _permute_gates_ifog(params["b1"])
    wx2 = _permute_gates_ifog(params["wx2"])
    wh2 = _permute_gates_ifog(params["wh2"])
    b2 = _permute_gates_ifog(params["b2"])
    wx3 = _permute_gates_ifog(params["wx3"])
    wh3 = _permute_gates_ifog(params["wh3"])
    b3 = _permute_gates_ifog(params["b3"])

    w2f = jnp.concatenate([wx2, wh2], axis=0)      # (H + L, 4L)
    w3f = jnp.concatenate([wx3, wh3], axis=0)      # (L + H, 4H)

    wo_p = jnp.pad(params["wo"], ((0, 0), (0, Dp_out - D_in)))
    bo_p = jnp.pad(params["bo"], ((0, 0), (0, Dp_out - D_in)))

    weight_args = (wx1, wh1, b1, w2f, b2, w3f, b3, wo_p, bo_p)
    weight_bytes = sum(int(np.prod(w.shape)) * 4 for w in weight_args)

    # ---- VMEM-aware time-block selection (safe for v7x's 64 MiB VMEM). ----
    def vmem_bytes(bt):
        rows = bt * Bp
        slab = rows * (D_in + Dp_out) * 4 * 2                       # double-buffered in/out
        scratch = rows * (4 * hidden_dim + hidden_dim) * 4          # gx1 + h3all
        states = Bp * (4 * hidden_dim + 2 * latent_dim) * 4
        return slab + scratch + states + weight_bytes

    if block_t is None:
        budget = 48 * 1024 * 1024
        block_t = 1
        for bt in sorted({d for d in range(1, S + 1) if S % d == 0}, reverse=True):
            if vmem_bytes(bt) <= budget:
                block_t = bt
                break
    assert S % block_t == 0, "block_t must divide the sequence length"
    nt = S // block_t

    vmem_limit = int(min(64 * 1024 * 1024,
                         max(32 * 1024 * 1024, 1.5 * vmem_bytes(block_t))))

    # ---- Input prep: time-major, batch padded to Bp, time folded into rows. ----
    x_t = jnp.transpose(x, (1, 0, 2)).astype(jnp.float32)           # (S, B, D_in)
    if Bp != B:
        x_t = jnp.pad(x_t, ((0, 0), (0, Bp - B), (0, 0)))
    x2d = x_t.reshape(S * Bp, D_in)

    # Weights/biases: untiled, VMEM-resident, no per-step pipelining.
    weight_specs = [pl.BlockSpec(memory_space=pltpu.MemorySpace.VMEM)
                    for _ in weight_args]

    kernel = functools.partial(_autoenc_kernel,
                               batch_p=Bp, t_block=block_t,
                               hidden_dim=hidden_dim, latent_dim=latent_dim)

    out2d = pl.pallas_call(
        kernel,
        out_shape=jax.ShapeDtypeStruct((S * Bp, Dp_out), jnp.float32),
        grid_spec=pltpu.PrefetchScalarGridSpec(
            num_scalar_prefetch=0,
            grid=(nt,),
            in_specs=[pl.BlockSpec((block_t * Bp, D_in), lambda tb: (tb, 0))]
                     + weight_specs,
            out_specs=pl.BlockSpec((block_t * Bp, Dp_out), lambda tb: (tb, 0)),
            scratch_shapes=[
                pltpu.VMEM((Bp, hidden_dim), jnp.float32),               # h1
                pltpu.VMEM((Bp, hidden_dim), jnp.float32),               # c1
                pltpu.VMEM((Bp, latent_dim), jnp.float32),               # h2
                pltpu.VMEM((Bp, latent_dim), jnp.float32),               # c2
                pltpu.VMEM((Bp, hidden_dim), jnp.float32),               # h3
                pltpu.VMEM((Bp, hidden_dim), jnp.float32),               # c3
                pltpu.VMEM((block_t * Bp, 4 * hidden_dim), jnp.float32),  # gx1 (pre-gates)
                pltpu.VMEM((block_t * Bp, hidden_dim), jnp.float32),      # h3 buffer
            ]),
        compiler_params=pltpu.CompilerParams(
            # Recurrent state is carried in scratch: the time-block axis MUST stay
            # sequential ("arbitrary").  Any future parallel axis must be batch.
            dimension_semantics=("arbitrary",),
            vmem_limit_bytes=vmem_limit),
    )(x2d, *weight_args)

    out = out2d.reshape(S, Bp, Dp_out)[:, :B, :D_in]
    return jnp.transpose(out, (1, 0, 2))


def init_params(key, input_dim, hidden_dim, output_dim):
    """Deterministic PyTorch-style uniform(-1/sqrt(H), 1/sqrt(H)) init (PyTorch gate order)."""
    def lstm_params(k, d_in, d_h):
        k1, k2, k3, k4 = jax.random.split(k, 4)
        bound = 1.0 / np.sqrt(d_h)
        wx = jax.random.uniform(k1, (d_in, 4 * d_h), jnp.float32, -bound, bound)
        wh = jax.random.uniform(k2, (d_h, 4 * d_h), jnp.float32, -bound, bound)
        b_ih = jax.random.uniform(k3, (4 * d_h,), jnp.float32, -bound, bound)
        b_hh = jax.random.uniform(k4, (4 * d_h,), jnp.float32, -bound, bound)
        return wx, wh, (b_ih + b_hh).reshape(1, 4 * d_h)

    k1, k2, k3, k4 = jax.random.split(key, 4)
    wx1, wh1, b1 = lstm_params(k1, input_dim, hidden_dim)
    wx2, wh2, b2 = lstm_params(k2, hidden_dim, output_dim)
    wx3, wh3, b3 = lstm_params(k3, output_dim, hidden_dim)

    kb_w, kb_b = jax.random.split(k4)
    bound = 1.0 / np.sqrt(hidden_dim)
    wo = jax.random.uniform(kb_w, (hidden_dim, input_dim), jnp.float32, -bound, bound)
    bo = jax.random.uniform(kb_b, (1, input_dim), jnp.float32, -bound, bound)

    return dict(wx1=wx1, wh1=wh1, b1=b1,
                wx2=wx2, wh2=wh2, b2=b2,
                wx3=wx3, wh3=wh3, b3=b3,
                wo=wo, bo=bo)


def reference_forward(x, params):
    """Pure-JAX reference (lax.scan, full f32 precision) matching nn.LSTM/nn.Linear."""
    def run_lstm(xs, wx, wh, b, H):
        B = xs.shape[0]

        def step(carry, x_t):
            h, c = carry
            gates = (jnp.dot(x_t, wx, precision=HIGH)
                     + jnp.dot(h, wh, precision=HIGH) + b)
            i = jax.nn.sigmoid(gates[:, 0 * H:1 * H])
            f = jax.nn.sigmoid(gates[:, 1 * H:2 * H])
            g = jnp.tanh(gates[:, 2 * H:3 * H])
            o = jax.nn.sigmoid(gates[:, 3 * H:4 * H])
            c = f * c + i * g
            h = o * jnp.tanh(c)
            return (h, c), h

        init = (jnp.zeros((B, H), jnp.float32), jnp.zeros((B, H), jnp.float32))
        _, hs = jax.lax.scan(step, init, jnp.transpose(xs, (1, 0, 2)))
        return jnp.transpose(hs, (1, 0, 2))

    h1 = run_lstm(x, params["wx1"], params["wh1"], params["b1"], params["wh1"].shape[0])
    h2 = run_lstm(h1, params["wx2"], params["wh2"], params["b2"], params["wh2"].shape[0])
    h3 = run_lstm(h2, params["wx3"], params["wh3"], params["b3"], params["wh3"].shape[0])
    return jnp.dot(h3, params["wo"], precision=HIGH) + params["bo"]


if __name__ == "__main__":
    B, S = 2, 8
    input_dim, hidden_dim, output_dim = 16, 32, 8

    key = jax.random.PRNGKey(0)
    k_x, k_p = jax.random.split(key)
    x = jax.random.normal(k_x, (B, S, input_dim), jnp.float32)
    params = init_params(k_p, input_dim, hidden_dim, output_dim)

    y = lstm_autoencoder_forward(x, params)
    y = jax.block_until_ready(y)

    y_ref = jax.block_until_ready(reference_forward(x, params))
    # Kernel dots run at default (bf16-pass) MXU precision vs. an f32 HIGHEST reference.
    np.testing.assert_allclose(np.asarray(y), np.asarray(y_ref), rtol=2e-2, atol=2e-2)
    assert y.shape == (B, S, input_dim)

    print("KERNEL_OK")
</pallas_src>

<mosaic_0001>
module attributes {stable_mosaic.version = 11 : i64} {
  func.func @_autoenc_kernel(%arg0: i32, %arg1: memref<64x16xf32, #tpu.memory_space<vmem>>, %arg2: memref<16x128xf32, #tpu.memory_space<vmem>>, %arg3: memref<32x128xf32, #tpu.memory_space<vmem>>, %arg4: memref<1x128xf32, #tpu.memory_space<vmem>>, %arg5: memref<40x32xf32, #tpu.memory_space<vmem>>, %arg6: memref<1x32xf32, #tpu.memory_space<vmem>>, %arg7: memref<40x128xf32, #tpu.memory_space<vmem>>, %arg8: memref<1x128xf32, #tpu.memory_space<vmem>>, %arg9: memref<32x128xf32, #tpu.memory_space<vmem>>, %arg10: memref<1x128xf32, #tpu.memory_space<vmem>>, %arg11: memref<64x128xf32, #tpu.memory_space<vmem>>, %arg12: memref<8x32xf32, #tpu.memory_space<vmem>>, %arg13: memref<8x32xf32, #tpu.memory_space<vmem>>, %arg14: memref<8x8xf32, #tpu.memory_space<vmem>>, %arg15: memref<8x8xf32, #tpu.memory_space<vmem>>, %arg16: memref<8x32xf32, #tpu.memory_space<vmem>>, %arg17: memref<8x32xf32, #tpu.memory_space<vmem>>, %arg18: memref<64x128xf32, #tpu.memory_space<vmem>>, %arg19: memref<64x32xf32, #tpu.memory_space<vmem>>) attributes {dimension_semantics = [#tpu.dimension_semantics<arbitrary>], iteration_bounds = array<i64: 1>, scalar_prefetch = 0 : i64, scratch_operands = 8 : i64, tpu.core_type = #tpu.core_type<tc>, window_params = [{transform_indices = @transform_0, window_bounds = array<i64: 64, 16>}, {pipeline_mode = #tpu.pipeline_mode<synchronous>, transform_indices = @transform_1, window_bounds = array<i64: 16, 128>}, {pipeline_mode = #tpu.pipeline_mode<synchronous>, transform_indices = @transform_2, window_bounds = array<i64: 32, 128>}, {pipeline_mode = #tpu.pipeline_mode<synchronous>, transform_indices = @transform_3, window_bounds = array<i64: 1, 128>}, {pipeline_mode = #tpu.pipeline_mode<synchronous>, transform_indices = @transform_4, window_bounds = array<i64: 40, 32>}, {pipeline_mode = #tpu.pipeline_mode<synchronous>, transform_indices = @transform_5, window_bounds = array<i64: 1, 32>}, {pipeline_mode = #tpu.pipeline_mode<synchronous>, transform_indices = @transform_6, window_bounds = array<i64: 40, 128>}, {pipeline_mode = #tpu.pipeline_mode<synchronous>, transform_indices = @transform_7, window_bounds = array<i64: 1, 128>}, {pipeline_mode = #tpu.pipeline_mode<synchronous>, transform_indices = @transform_8, window_bounds = array<i64: 32, 128>}, {pipeline_mode = #tpu.pipeline_mode<synchronous>, transform_indices = @transform_9, window_bounds = array<i64: 1, 128>}, {transform_indices = @transform_10, window_bounds = array<i64: 64, 128>}]} {
    %c0_i32 = arith.constant 0 : i32
    %0 = arith.cmpi eq, %arg0, %c0_i32 : i32
    %1 = arith.extui %0 : i1 to i32
    %c0_i32_0 = arith.constant 0 : i32
    %2 = arith.cmpi ne, %1, %c0_i32_0 : i32
    scf.if %2 {
      %cst_194 = arith.constant 0.000000e+00 : f32
      %581 = vector.broadcast %cst_194 : f32 to vector<8x32xf32>
      %c0_195 = arith.constant 0 : index
      %c0_196 = arith.constant 0 : index
      %582 = vector.load %arg12[%c0_195, %c0_196] : memref<8x32xf32, #tpu.memory_space<vmem>>, vector<8x32xf32>
      tpu.vector_store %arg12[%c0_195, %c0_196], %581 {strides = array<i32>} : memref<8x32xf32, #tpu.memory_space<vmem>>, vector<8x32xf32>,
      %cst_197 = arith.constant 0.000000e+00 : f32
      %583 = vector.broadcast %cst_197 : f32 to vector<8x32xf32>
      %c0_198 = arith.constant 0 : index
      %c0_199 = arith.constant 0 : index
      %584 = vector.load %arg13[%c0_198, %c0_199] : memref<8x32xf32, #tpu.memory_space<vmem>>, vector<8x32xf32>
      tpu.vector_store %arg13[%c0_198, %c0_199], %583 {strides = array<i32>} : memref<8x32xf32, #tpu.memory_space<vmem>>, vector<8x32xf32>,
      %cst_200 = arith.constant 0.000000e+00 : f32
      %585 = vector.broadcast %cst_200 : f32 to vector<8x8xf32>
      %c0_201 = arith.constant 0 : index
      %c0_202 = arith.constant 0 : index
      %586 = vector.load %arg14[%c0_201, %c0_202] : memref<8x8xf32, #tpu.memory_space<vmem>>, vector<8x8xf32>
      tpu.vector_store %arg14[%c0_201, %c0_202], %585 {strides = array<i32>} : memref<8x8xf32, #tpu.memory_space<vmem>>, vector<8x8xf32>,
      %cst_203 = arith.constant 0.000000e+00 : f32
      %587 = vector.broadcast %cst_203 : f32 to vector<8x8xf32>
      %c0_204 = arith.constant 0 : index
      %c0_205 = arith.constant 0 : index
      %588 = vector.load %arg15[%c0_204, %c0_205] : memref<8x8xf32, #tpu.memory_space<vmem>>, vector<8x8xf32>
      tpu.vector_store %arg15[%c0_204, %c0_205], %587 {strides = array<i32>} : memref<8x8xf32, #tpu.memory_space<vmem>>, vector<8x8xf32>,
      %cst_206 = arith.constant 0.000000e+00 : f32
      %589 = vector.broadcast %cst_206 : f32 to vector<8x32xf32>
      %c0_207 = arith.constant 0 : index
      %c0_208 = arith.constant 0 : index
      %590 = vector.load %arg16[%c0_207, %c0_208] : memref<8x32xf32, #tpu.memory_space<vmem>>, vector<8x32xf32>
      tpu.vector_store %arg16[%c0_207, %c0_208], %589 {strides = array<i32>} : memref<8x32xf32, #tpu.memory_space<vmem>>, vector<8x32xf32>,
      %cst_209 = arith.constant 0.000000e+00 : f32
      %591 = vector.broadcast %cst_209 : f32 to vector<8x32xf32>
      %c0_210 = arith.constant 0 : index
      %c0_211 = arith.constant 0 : index
      %592 = vector.load %arg17[%c0_210, %c0_211] : memref<8x32xf32, #tpu.memory_space<vmem>>, vector<8x32xf32>
      tpu.vector_store %arg17[%c0_210, %c0_211], %591 {strides = array<i32>} : memref<8x32xf32, #tpu.memory_space<vmem>>, vector<8x32xf32>,
    } else {
    }
    %c0 = arith.constant 0 : index
    %c0_1 = arith.constant 0 : index
    %3 = vector.load %arg1[%c0, %c0_1] : memref<64x16xf32, #tpu.memory_space<vmem>>, vector<64x16xf32>
    %c0_2 = arith.constant 0 : index
    %c0_3 = arith.constant 0 : index
    %4 = vector.load %arg2[%c0_2, %c0_3] : memref<16x128xf32, #tpu.memory_space<vmem>>, vector<16x128xf32>
    %cst = arith.constant dense<0.000000e+00> : vector<64x128xf32>
    %5 = tpu.matmul %3, %4, %cst {dimension_numbers = #tpu.dot_dimension_numbers<[1], [0], [0], [1], [0, 0, 1, 1], [], []>} : vector<64x16xf32>, vector<16x128xf32>, vector<64x128xf32> -> vector<64x128xf32>
    %c0_4 = arith.constant 0 : index
    %c0_5 = arith.constant 0 : index
    %6 = vector.load %arg4[%c0_4, %c0_5] : memref<1x128xf32, #tpu.memory_space<vmem>>, vector<1x128xf32>
    %7 = vector.broadcast %6 : vector<1x128xf32> to vector<64x128xf32>
    %8 = arith.addf %5, %7 : vector<64x128xf32>
    %c0_6 = arith.constant 0 : index
    %c0_7 = arith.constant 0 : index
    %9 = vector.load %arg18[%c0_6, %c0_7] : memref<64x128xf32, #tpu.memory_space<vmem>>, vector<64x128xf32>
    tpu.vector_store %arg18[%c0_6, %c0_7], %8 {strides = array<i32>} : memref<64x128xf32, #tpu.memory_space<vmem>>, vector<64x128xf32>,
    %c0_8 = arith.constant 0 : index
    %c0_9 = arith.constant 0 : index
    %10 = vector.load %arg12[%c0_8, %c0_9] : memref<8x32xf32, #tpu.memory_space<vmem>>, vector<8x32xf32>
    %c0_10 = arith.constant 0 : index
    %c0_11 = arith.constant 0 : index
    %11 = vector.load %arg13[%c0_10, %c0_11] : memref<8x32xf32, #tpu.memory_space<vmem>>, vector<8x32xf32>
    %c0_12 = arith.constant 0 : index
    %c0_13 = arith.constant 0 : index
    %12 = vector.load %arg14[%c0_12, %c0_13] : memref<8x8xf32, #tpu.memory_space<vmem>>, vector<8x8xf32>
    %c0_14 = arith.constant 0 : index
    %c0_15 = arith.constant 0 : index
    %13 = vector.load %arg15[%c0_14, %c0_15] : memref<8x8xf32, #tpu.memory_space<vmem>>, vector<8x8xf32>
    %c0_16 = arith.constant 0 : index
    %c0_17 = arith.constant 0 : index
    %14 = vector.load %arg16[%c0_16, %c0_17] : memref<8x32xf32, #tpu.memory_space<vmem>>, vector<8x32xf32>
    %c0_18 = arith.constant 0 : index
    %c0_19 = arith.constant 0 : index
    %15 = vector.load %arg17[%c0_18, %c0_19] : memref<8x32xf32, #tpu.memory_space<vmem>>, vector<8x32xf32>
    %c0_i32_20 = arith.constant 0 : i32
    %c8_i32 = arith.constant 8 : i32
    %16 = arith.muli %c0_i32_20, %c8_i32 : i32
    %17 = tpu.assume_multiple %16, 8 : i32
    %18 = arith.index_cast %17 : i32 to index
    %c0_21 = arith.constant 0 : index
    %19 = vector.load %arg18[%18, %c0_21] : memref<64x128xf32, #tpu.memory_space<vmem>>, vector<8x128xf32>
    %c0_22 = arith.constant 0 : index
    %c0_23 = arith.constant 0 : index
    %20 = vector.load %arg3[%c0_22, %c0_23] : memref<32x128xf32, #tpu.memory_space<vmem>>, vector<32x128xf32>
    %cst_24 = arith.constant dense<0.000000e+00> : vector<8x128xf32>
    %21 = tpu.matmul %10, %20, %cst_24 {dimension_numbers = #tpu.dot_dimension_numbers<[1], [0], [0], [1], [0, 0, 1, 1], [], []>} : vector<8x32xf32>, vector<32x128xf32>, vector<8x128xf32> -> vector<8x128xf32>
    %22 = arith.addf %19, %21 : vector<8x128xf32>
    %23 = vector.extract_strided_slice %22 {offsets = [0, 0], sizes = [8, 96], strides = [1, 1]} : vector<8x128xf32> to vector<8x96xf32>
    %24 = arith.negf %23 : vector<8x96xf32>
    %25 = math.exp %24 : vector<8x96xf32>
    %cst_25 = arith.constant 1.000000e+00 : f32
    %26 = vector.broadcast %cst_25 : f32 to vector<8x96xf32>
    %27 = arith.addf %26, %25 : vector<8x96xf32>
    %28 = arith.divf %26, %27 : vector<8x96xf32>
    %29 = vector.extract_strided_slice %22 {offsets = [0, 96], sizes = [8, 32], strides = [1, 1]} : vector<8x128xf32> to vector<8x32xf32>
    %30 = math.tanh %29 : vector<8x32xf32>
    %31 = vector.extract_strided_slice %28 {offsets = [0, 0], sizes = [8, 32], strides = [1, 1]} : vector<8x96xf32> to vector<8x32xf32>
    %32 = vector.extract_strided_slice %28 {offsets = [0, 32], sizes = [8, 32], strides = [1, 1]} : vector<8x96xf32> to vector<8x32xf32>
    %33 = vector.extract_strided_slice %28 {offsets = [0, 64], sizes = [8, 32], strides = [1, 1]} : vector<8x96xf32> to vector<8x32xf32>
    %34 = arith.mulf %32, %11 : vector<8x32xf32>
    %35 = arith.mulf %31, %30 : vector<8x32xf32>
    %36 = arith.addf %34, %35 : vector<8x32xf32>
    %37 = math.tanh %36 : vector<8x32xf32>
    %38 = arith.mulf %33, %37 : vector<8x32xf32>
    %39 = tpu.concatenate %38, %12 in 1 : vector<8x32xf32>, vector<8x8xf32> -> vector<8x40xf32>
    %c0_26 = arith.constant 0 : index
    %c0_27 = arith.constant 0 : index
    %40 = vector.load %arg5[%c0_26, %c0_27] : memref<40x32xf32, #tpu.memory_space<vmem>>, vector<40x32xf32>
    %cst_28 = arith.constant dense<0.000000e+00> : vector<8x32xf32>
    %41 = tpu.matmul %39, %40, %cst_28 {dimension_numbers = #tpu.dot_dimension_numbers<[1], [0], [0], [1], [0, 0, 1, 1], [], []>} : vector<8x40xf32>, vector<40x32xf32>, vector<8x32xf32> -> vector<8x32xf32>
    %c0_29 = arith.constant 0 : index
    %c0_30 = arith.constant 0 : index
    %42 = vector.load %arg6[%c0_29, %c0_30] : memref<1x32xf32, #tpu.memory_space<vmem>>, vector<1x32xf32>
    %43 = vector.broadcast %42 : vector<1x32xf32> to vector<8x32xf32>
    %44 = arith.addf %41, %43 : vector<8x32xf32>
    %45 = vector.extract_strided_slice %44 {offsets = [0, 0], sizes = [8, 24], strides = [1, 1]} : vector<8x32xf32> to vector<8x24xf32>
    %46 = arith.negf %45 : vector<8x24xf32>
    %47 = math.exp %46 : vector<8x24xf32>
    %cst_31 = arith.constant 1.000000e+00 : f32
    %48 = vector.broadcast %cst_31 : f32 to vector<8x24xf32>
    %49 = arith.addf %48, %47 : vector<8x24xf32>
    %50 = arith.divf %48, %49 : vector<8x24xf32>
    %51 = vector.extract_strided_slice %44 {offsets = [0, 24], sizes = [8, 8], strides = [1, 1]} : vector<8x32xf32> to vector<8x8xf32>
    %52 = math.tanh %51 : vector<8x8xf32>
    %53 = vector.extract_strided_slice %50 {offsets = [0, 0], sizes = [8, 8], strides = [1, 1]} : vector<8x24xf32> to vector<8x8xf32>
    %54 = vector.extract_strided_slice %50 {offsets = [0, 8], sizes = [8, 8], strides = [1, 1]} : vector<8x24xf32> to vector<8x8xf32>
    %55 = vector.extract_strided_slice %50 {offsets = [0, 16], sizes = [8, 8], strides = [1, 1]} : vector<8x24xf32> to vector<8x8xf32>
    %56 = arith.mulf %54, %13 : vector<8x8xf32>
    %57 = arith.mulf %53, %52 : vector<8x8xf32>
    %58 = arith.addf %56, %57 : vector<8x8xf32>
    %59 = math.tanh %58 : vector<8x8xf32>
    %60 = arith.mulf %55, %59 : vector<8x8xf32>
    %61 = tpu.concatenate %60, %14 in 1 : vector<8x8xf32>, vector<8x32xf32> -> vector<8x40xf32>
    %c0_32 = arith.constant 0 : index
    %c0_33 = arith.constant 0 : index
    %62 = vector.load %arg7[%c0_32, %c0_33] : memref<40x128xf32, #tpu.memory_space<vmem>>, vector<40x128xf32>
    %cst_34 = arith.constant dense<0.000000e+00> : vector<8x128xf32>
    %63 = tpu.matmul %61, %62, %cst_34 {dimension_numbers = #tpu.dot_dimension_numbers<[1], [0], [0], [1], [0, 0, 1, 1], [], []>} : vector<8x40xf32>, vector<40x128xf32>, vector<8x128xf32> -> vector<8x128xf32>
    %c0_35 = arith.constant 0 : index
    %c0_36 = arith.constant 0 : index
    %64 = vector.load %arg8[%c0_35, %c0_36] : memref<1x128xf32, #tpu.memory_space<vmem>>, vector<1x128xf32>
    %65 = vector.broadcast %64 : vector<1x128xf32> to vector<8x128xf32>
    %66 = arith.addf %63, %65 : vector<8x128xf32>
    %67 = vector.extract_strided_slice %66 {offsets = [0, 0], sizes = [8, 96], strides = [1, 1]} : vector<8x128xf32> to vector<8x96xf32>
    %68 = arith.negf %67 : vector<8x96xf32>
    %69 = math.exp %68 : vector<8x96xf32>
    %cst_37 = arith.constant 1.000000e+00 : f32
    %70 = vector.broadcast %cst_37 : f32 to vector<8x96xf32>
    %71 = arith.addf %70, %69 : vector<8x96xf32>
    %72 = arith.divf %70, %71 : vector<8x96xf32>
    %73 = vector.extract_strided_slice %66 {offsets = [0, 96], sizes = [8, 32], strides = [1, 1]} : vector<8x128xf32> to vector<8x32xf32>
    %74 = math.tanh %73 : vector<8x32xf32>
    %75 = vector.extract_strided_slice %72 {offsets = [0, 0], sizes = [8, 32], strides = [1, 1]} : vector<8x96xf32> to vector<8x32xf32>
    %76 = vector.extract_strided_slice %72 {offsets = [0, 32], sizes = [8, 32], strides = [1, 1]} : vector<8x96xf32> to vector<8x32xf32>
    %77 = vector.extract_strided_slice %72 {offsets = [0, 64], sizes = [8, 32], strides = [1, 1]} : vector<8x96xf32> to vector<8x32xf32>
    %78 = arith.mulf %76, %15 : vector<8x32xf32>
    %79 = arith.mulf %75, %74 : vector<8x32xf32>
    %80 = arith.addf %78, %79 : vector<8x32xf32>
    %81 = math.tanh %80 : vector<8x32xf32>
    %82 = arith.mulf %77, %81 : vector<8x32xf32>
    %83 = arith.index_cast %17 : i32 to index
    %c0_38 = arith.constant 0 : index
    %84 = vector.load %arg19[%83, %c0_38] : memref<64x32xf32, #tpu.memory_space<vmem>>, vector<8x32xf32>
    tpu.vector_store %arg19[%83, %c0_38], %82 {strides = array<i32>} : memref<64x32xf32, #tpu.memory_space<vmem>>, vector<8x32xf32>,
    %c1_i32 = arith.constant 1 : i32
    %c8_i32_39 = arith.constant 8 : i32
    %85 = arith.muli %c1_i32, %c8_i32_39 : i32
    %86 = tpu.assume_multiple %85, 8 : i32
    %87 = arith.index_cast %86 : i32 to index
    %c0_40 = arith.constant 0 : index
    %88 = vector.load %arg18[%87, %c0_40] : memref<64x128xf32, #tpu.memory_space<vmem>>, vector<8x128xf32>
    %c0_41 = arith.constant 0 : index
    %c0_42 = arith.constant 0 : index
    %89 = vector.load %arg3[%c0_41, %c0_42] : memref<32x128xf32, #tpu.memory_space<vmem>>, vector<32x128xf32>
    %cst_43 = arith.constant dense<0.000000e+00> : vector<8x128xf32>
    %90 = tpu.matmul %38, %89, %cst_43 {dimension_numbers = #tpu.dot_dimension_numbers<[1], [0], [0], [1], [0, 0, 1, 1], [], []>} : vector<8x32xf32>, vector<32x128xf32>, vector<8x128xf32> -> vector<8x128xf32>
    %91 = arith.addf %88, %90 : vector<8x128xf32>
    %92 = vector.extract_strided_slice %91 {offsets = [0, 0], sizes = [8, 96], strides = [1, 1]} : vector<8x128xf32> to vector<8x96xf32>
    %93 = arith.negf %92 : vector<8x96xf32>
    %94 = math.exp %93 : vector<8x96xf32>
    %cst_44 = arith.constant 1.000000e+00 : f32
    %95 = vector.broadcast %cst_44 : f32 to vector<8x96xf32>
    %96 = arith.addf %95, %94 : vector<8x96xf32>
    %97 = arith.divf %95, %96 : vector<8x96xf32>
    %98 = vector.extract_strided_slice %91 {offsets = [0, 96], sizes = [8, 32], strides = [1, 1]} : vector<8x128xf32> to vector<8x32xf32>
    %99 = math.tanh %98 : vector<8x32xf32>
    %100 = vector.extract_strided_slice %97 {offsets = [0, 0], sizes = [8, 32], strides = [1, 1]} : vector<8x96xf32> to vector<8x32xf32>
    %101 = vector.extract_strided_slice %97 {offsets = [0, 32], sizes = [8, 32], strides = [1, 1]} : vector<8x96xf32> to vector<8x32xf32>
    %102 = vector.extract_strided_slice %97 {offsets = [0, 64], sizes = [8, 32], strides = [1, 1]} : vector<8x96xf32> to vector<8x32xf32>
    %103 = arith.mulf %101, %36 : vector<8x32xf32>
    %104 = arith.mulf %100, %99 : vector<8x32xf32>
    %105 = arith.addf %103, %104 : vector<8x32xf32>
    %106 = math.tanh %105 : vector<8x32xf32>
    %107 = arith.mulf %102, %106 : vector<8x32xf32>
    %108 = tpu.concatenate %107, %60 in 1 : vector<8x32xf32>, vector<8x8xf32> -> vector<8x40xf32>
    %c0_45 = arith.constant 0 : index
    %c0_46 = arith.constant 0 : index
    %109 = vector.load %arg5[%c0_45, %c0_46] : memref<40x32xf32, #tpu.memory_space<vmem>>, vector<40x32xf32>
    %cst_47 = arith.constant dense<0.000000e+00> : vector<8x32xf32>
    %110 = tpu.matmul %108, %109, %cst_47 {dimension_numbers = #tpu.dot_dimension_numbers<[1], [0], [0], [1], [0, 0, 1, 1], [], []>} : vector<8x40xf32>, vector<40x32xf32>, vector<8x32xf32> -> vector<8x32xf32>
    %c0_48 = arith.constant 0 : index
    %c0_49 = arith.constant 0 : index
    %111 = vector.load %arg6[%c0_48, %c0_49] : memref<1x32xf32, #tpu.memory_space<vmem>>, vector<1x32xf32>
    %112 = vector.broadcast %111 : vector<1x32xf32> to vector<8x32xf32>
    %113 = arith.addf %110, %112 : vector<8x32xf32>
    %114 = vector.extract_strided_slice %113 {offsets = [0, 0], sizes = [8, 24], strides = [1, 1]} : vector<8x32xf32> to vector<8x24xf32>
    %115 = arith.negf %114 : vector<8x24xf32>
    %116 = math.exp %115 : vector<8x24xf32>
    %cst_50 = arith.constant 1.000000e+00 : f32
    %117 = vector.broadcast %cst_50 : f32 to vector<8x24xf32>
    %118 = arith.addf %117, %116 : vector<8x24xf32>
    %119 = arith.divf %117, %118 : vector<8x24xf32>
    %120 = vector.extract_strided_slice %113 {offsets = [0, 24], sizes = [8, 8], strides = [1, 1]} : vector<8x32xf32> to vector<8x8xf32>
    %121 = math.tanh %120 : vector<8x8xf32>
    %122 = vector.extract_strided_slice %119 {offsets = [0, 0], sizes = [8, 8], strides = [1, 1]} : vector<8x24xf32> to vector<8x8xf32>
    %123 = vector.extract_strided_slice %119 {offsets = [0, 8], sizes = [8, 8], strides = [1, 1]} : vector<8x24xf32> to vector<8x8xf32>
    %124 = vector.extract_strided_slice %119 {offsets = [0, 16], sizes = [8, 8], strides = [1, 1]} : vector<8x24xf32> to vector<8x8xf32>
    %125 = arith.mulf %123, %58 : vector<8x8xf32>
    %126 = arith.mulf %122, %121 : vector<8x8xf32>
    %127 = arith.addf %125, %126 : vector<8x8xf32>
    %128 = math.tanh %127 : vector<8x8xf32>
    %129 = arith.mulf %124, %128 : vector<8x8xf32>
    %130 = tpu.concatenate %129, %82 in 1 : vector<8x8xf32>, vector<8x32xf32> -> vector<8x40xf32>
    %c0_51 = arith.constant 0 : index
    %c0_52 = arith.constant 0 : index
    %131 = vector.load %arg7[%c0_51, %c0_52] : memref<40x128xf32, #tpu.memory_space<vmem>>, vector<40x128xf32>
    %cst_53 = arith.constant dense<0.000000e+00> : vector<8x128xf32>
    %132 = tpu.matmul %130, %131, %cst_53 {dimension_numbers = #tpu.dot_dimension_numbers<[1], [0], [0], [1], [0, 0, 1, 1], [], []>} : vector<8x40xf32>, vector<40x128xf32>, vector<8x128xf32> -> vector<8x128xf32>
    %c0_54 = arith.constant 0 : index
    %c0_55 = arith.constant 0 : index
    %133 = vector.load %arg8[%c0_54, %c0_55] : memref<1x128xf32, #tpu.memory_space<vmem>>, vector<1x128xf32>
    %134 = vector.broadcast %133 : vector<1x128xf32> to vector<8x128xf32>
    %135 = arith.addf %132, %134 : vector<8x128xf32>
    %136 = vector.extract_strided_slice %135 {offsets = [0, 0], sizes = [8, 96], strides = [1, 1]} : vector<8x128xf32> to vector<8x96xf32>
    %137 = arith.negf %136 : vector<8x96xf32>
    %138 = math.exp %137 : vector<8x96xf32>
    %cst_56 = arith.constant 1.000000e+00 : f32
    %139 = vector.broadcast %cst_56 : f32 to vector<8x96xf32>
    %140 = arith.addf %139, %138 : vector<8x96xf32>
    %141 = arith.divf %139, %140 : vector<8x96xf32>
    %142 = vector.extract_strided_slice %135 {offsets = [0, 96], sizes = [8, 32], strides = [1, 1]} : vector<8x128xf32> to vector<8x32xf32>
    %143 = math.tanh %142 : vector<8x32xf32>
    %144 = vector.extract_strided_slice %141 {offsets = [0, 0], sizes = [8, 32], strides = [1, 1]} : vector<8x96xf32> to vector<8x32xf32>
    %145 = vector.extract_strided_slice %141 {offsets = [0, 32], sizes = [8, 32], strides = [1, 1]} : vector<8x96xf32> to vector<8x32xf32>
    %146 = vector.extract_strided_slice %141 {offsets = [0, 64], sizes = [8, 32], strides = [1, 1]} : vector<8x96xf32> to vector<8x32xf32>
    %147 = arith.mulf %145, %80 : vector<8x32xf32>
    %148 = arith.mulf %144, %143 : vector<8x32xf32>
    %149 = arith.addf %147, %148 : vector<8x32xf32>
    %150 = math.tanh %149 : vector<8x32xf32>
    %151 = arith.mulf %146, %150 : vector<8x32xf32>
    %152 = arith.index_cast %86 : i32 to index
    %c0_57 = arith.constant 0 : index
    %153 = vector.load %arg19[%152, %c0_57] : memref<64x32xf32, #tpu.memory_space<vmem>>, vector<8x32xf32>
    tpu.vector_store %arg19[%152, %c0_57], %151 {strides = array<i32>} : memref<64x32xf32, #tpu.memory_space<vmem>>, vector<8x32xf32>,
    %c2_i32 = arith.constant 2 : i32
    %c8_i32_58 = arith.constant 8 : i32
    %154 = arith.muli %c2_i32, %c8_i32_58 : i32
    %155 = tpu.assume_multiple %154, 8 : i32
    %156 = arith.index_cast %155 : i32 to index
    %c0_59 = arith.constant 0 : index
    %157 = vector.load %arg18[%156, %c0_59] : memref<64x128xf32, #tpu.memory_space<vmem>>, vector<8x128xf32>
    %c0_60 = arith.constant 0 : index
    %c0_61 = arith.constant 0 : index
    %158 = vector.load %arg3[%c0_60, %c0_61] : memref<32x128xf32, #tpu.memory_space<vmem>>, vector<32x128xf32>
    %cst_62 = arith.constant dense<0.000000e+00> : vector<8x128xf32>
    %159 = tpu.matmul %107, %158, %cst_62 {dimension_numbers = #tpu.dot_dimension_numbers<[1], [0], [0], [1], [0, 0, 1, 1], [], []>} : vector<8x32xf32>, vector<32x128xf32>, vector<8x128xf32> -> vector<8x128xf32>
    %160 = arith.addf %157, %159 : vector<8x128xf32>
    %161 = vector.extract_strided_slice %160 {offsets = [0, 0], sizes = [8, 96], strides = [1, 1]} : vector<8x128xf32> to vector<8x96xf32>
    %162 = arith.negf %161 : vector<8x96xf32>
    %163 = math.exp %162 : vector<8x96xf32>
    %cst_63 = arith.constant 1.000000e+00 : f32
    %164 = vector.broadcast %cst_63 : f32 to vector<8x96xf32>
    %165 = arith.addf %164, %163 : vector<8x96xf32>
    %166 = arith.divf %164, %165 : vector<8x96xf32>
    %167 = vector.extract_strided_slice %160 {offsets = [0, 96], sizes = [8, 32], strides = [1, 1]} : vector<8x128xf32> to vector<8x32xf32>
    %168 = math.tanh %167 : vector<8x32xf32>
    %169 = vector.extract_strided_slice %166 {offsets = [0, 0], sizes = [8, 32], strides = [1, 1]} : vector<8x96xf32> to vector<8x32xf32>
    %170 = vector.extract_strided_slice %166 {offsets = [0, 32], sizes = [8, 32], strides = [1, 1]} : vector<8x96xf32> to vector<8x32xf32>
    %171 = vector.extract_strided_slice %166 {offsets = [0, 64], sizes = [8, 32], strides = [1, 1]} : vector<8x96xf32> to vector<8x32xf32>
    %172 = arith.mulf %170, %105 : vector<8x32xf32>
    %173 = arith.mulf %169, %168 : vector<8x32xf32>
    %174 = arith.addf %172, %173 : vector<8x32xf32>
    %175 = math.tanh %174 : vector<8x32xf32>
    %176 = arith.mulf %171, %175 : vector<8x32xf32>
    %177 = tpu.concatenate %176, %129 in 1 : vector<8x32xf32>, vector<8x8xf32> -> vector<8x40xf32>
    %c0_64 = arith.constant 0 : index
    %c0_65 = arith.constant 0 : index
    %178 = vector.load %arg5[%c0_64, %c0_65] : memref<40x32xf32, #tpu.memory_space<vmem>>, vector<40x32xf32>
    %cst_66 = arith.constant dense<0.000000e+00> : vector<8x32xf32>
    %179 = tpu.matmul %177, %178, %cst_66 {dimension_numbers = #tpu.dot_dimension_numbers<[1], [0], [0], [1], [0, 0, 1, 1], [], []>} : vector<8x40xf32>, vector<40x32xf32>, vector<8x32xf32> -> vector<8x32xf32>
    %c0_67 = arith.constant 0 : index
    %c0_68 = arith.constant 0 : index
    %180 = vector.load %arg6[%c0_67, %c0_68] : memref<1x32xf32, #tpu.memory_space<vmem>>, vector<1x32xf32>
    %181 = vector.broadcast %180 : vector<1x32xf32> to vector<8x32xf32>
    %182 = arith.addf %179, %181 : vector<8x32xf32>
    %183 = vector.extract_strided_slice %182 {offsets = [0, 0], sizes = [8, 24], strides = [1, 1]} : vector<8x32xf32> to vector<8x24xf32>
    %184 = arith.negf %183 : vector<8x24xf32>
    %185 = math.exp %184 : vector<8x24xf32>
    %cst_69 = arith.constant 1.000000e+00 : f32
    %186 = vector.broadcast %cst_69 : f32 to vector<8x24xf32>
    %187 = arith.addf %186, %185 : vector<8x24xf32>
    %188 = arith.divf %186, %187 : vector<8x24xf32>
    %189 = vector.extract_strided_slice %182 {offsets = [0, 24], sizes = [8, 8], strides = [1, 1]} : vector<8x32xf32> to vector<8x8xf32>
    %190 = math.tanh %189 : vector<8x8xf32>
    %191 = vector.extract_strided_slice %188 {offsets = [0, 0], sizes = [8, 8], strides = [1, 1]} : vector<8x24xf32> to vector<8x8xf32>
    %192 = vector.extract_strided_slice %188 {offsets = [0, 8], sizes = [8, 8], strides = [1, 1]} : vector<8x24xf32> to vector<8x8xf32>
    %193 = vector.extract_strided_slice %188 {offsets = [0, 16], sizes = [8, 8], strides = [1, 1]} : vector<8x24xf32> to vector<8x8xf32>
    %194 = arith.mulf %192, %127 : vector<8x8xf32>
    %195 = arith.mulf %191, %190 : vector<8x8xf32>
    %196 = arith.addf %194, %195 : vector<8x8xf32>
    %197 = math.tanh %196 : vector<8x8xf32>
    %198 = arith.mulf %193, %197 : vector<8x8xf32>
    %199 = tpu.concatenate %198, %151 in 1 : vector<8x8xf32>, vector<8x32xf32> -> vector<8x40xf32>
    %c0_70 = arith.constant 0 : index
    %c0_71 = arith.constant 0 : index
    %200 = vector.load %arg7[%c0_70, %c0_71] : memref<40x128xf32, #tpu.memory_space<vmem>>, vector<40x128xf32>
    %cst_72 = arith.constant dense<0.000000e+00> : vector<8x128xf32>
    %201 = tpu.matmul %199, %200, %cst_72 {dimension_numbers = #tpu.dot_dimension_numbers<[1], [0], [0], [1], [0, 0, 1, 1], [], []>} : vector<8x40xf32>, vector<40x128xf32>, vector<8x128xf32> -> vector<8x128xf32>
    %c0_73 = arith.constant 0 : index
    %c0_74 = arith.constant 0 : index
    %202 = vector.load %arg8[%c0_73, %c0_74] : memref<1x128xf32, #tpu.memory_space<vmem>>, vector<1x128xf32>
    %203 = vector.broadcast %202 : vector<1x128xf32> to vector<8x128xf32>
    %204 = arith.addf %201, %203 : vector<8x128xf32>
    %205 = vector.extract_strided_slice %204 {offsets = [0, 0], sizes = [8, 96], strides = [1, 1]} : vector<8x128xf32> to vector<8x96xf32>
    %206 = arith.negf %205 : vector<8x96xf32>
    %207 = math.exp %206 : vector<8x96xf32>
    %cst_75 = arith.constant 1.000000e+00 : f32
    %208 = vector.broadcast %cst_75 : f32 to vector<8x96xf32>
    %209 = arith.addf %208, %207 : vector<8x96xf32>
    %210 = arith.divf %208, %209 : vector<8x96xf32>
    %211 = vector.extract_strided_slice %204 {offsets = [0, 96], sizes = [8, 32], strides = [1, 1]} : vector<8x128xf32> to vector<8x32xf32>
    %212 = math.tanh %211 : vector<8x32xf32>
    %213 = vector.extract_strided_slice %210 {offsets = [0, 0], sizes = [8, 32], strides = [1, 1]} : vector<8x96xf32> to vector<8x32xf32>
    %214 = vector.extract_strided_slice %210 {offsets = [0, 32], sizes = [8, 32], strides = [1, 1]} : vector<8x96xf32> to vector<8x32xf32>
    %215 = vector.extract_strided_slice %210 {offsets = [0, 64], sizes = [8, 32], strides = [1, 1]} : vector<8x96xf32> to vector<8x32xf32>
    %216 = arith.mulf %214, %149 : vector<8x32xf32>
    %217 = arith.mulf %213, %212 : vector<8x32xf32>
    %218 = arith.addf %216, %217 : vector<8x32xf32>
    %219 = math.tanh %218 : vector<8x32xf32>
    %220 = arith.mulf %215, %219 : vector<8x32xf32>
    %221 = arith.index_cast %155 : i32 to index
    %c0_76 = arith.constant 0 : index
    %222 = vector.load %arg19[%221, %c0_76] : memref<64x32xf32, #tpu.memory_space<vmem>>, vector<8x32xf32>
    tpu.vector_store %arg19[%221, %c0_76], %220 {strides = array<i32>} : memref<64x32xf32, #tpu.memory_space<vmem>>, vector<8x32xf32>,
    %c3_i32 = arith.constant 3 : i32
    %c8_i32_77 = arith.constant 8 : i32
    %223 = arith.muli %c3_i32, %c8_i32_77 : i32
    %224 = tpu.assume_multiple %223, 8 : i32
    %225 = arith.index_cast %224 : i32 to index
    %c0_78 = arith.constant 0 : index
    %226 = vector.load %arg18[%225, %c0_78] : memref<64x128xf32, #tpu.memory_space<vmem>>, vector<8x128xf32>
    %c0_79 = arith.constant 0 : index
    %c0_80 = arith.constant 0 : index
    %227 = vector.load %arg3[%c0_79, %c0_80] : memref<32x128xf32, #tpu.memory_space<vmem>>, vector<32x128xf32>
    %cst_81 = arith.constant dense<0.000000e+00> : vector<8x128xf32>
    %228 = tpu.matmul %176, %227, %cst_81 {dimension_numbers = #tpu.dot_dimension_numbers<[1], [0], [0], [1], [0, 0, 1, 1], [], []>} : vector<8x32xf32>, vector<32x128xf32>, vector<8x128xf32> -> vector<8x128xf32>
    %229 = arith.addf %226, %228 : vector<8x128xf32>
    %230 = vector.extract_strided_slice %229 {offsets = [0, 0], sizes = [8, 96], strides = [1, 1]} : vector<8x128xf32> to vector<8x96xf32>
    %231 = arith.negf %230 : vector<8x96xf32>
    %232 = math.exp %231 : vector<8x96xf32>
    %cst_82 = arith.constant 1.000000e+00 : f32
    %233 = vector.broadcast %cst_82 : f32 to vector<8x96xf32>
    %234 = arith.addf %233, %232 : vector<8x96xf32>
    %235 = arith.divf %233, %234 : vector<8x96xf32>
    %236 = vector.extract_strided_slice %229 {offsets = [0, 96], sizes = [8, 32], strides = [1, 1]} : vector<8x128xf32> to vector<8x32xf32>
    %237 = math.tanh %236 : vector<8x32xf32>
    %238 = vector.extract_strided_slice %235 {offsets = [0, 0], sizes = [8, 32], strides = [1, 1]} : vector<8x96xf32> to vector<8x32xf32>
    %239 = vector.extract_strided_slice %235 {offsets = [0, 32], sizes = [8, 32], strides = [1, 1]} : vector<8x96xf32> to vector<8x32xf32>
    %240 = vector.extract_strided_slice %235 {offsets = [0, 64], sizes = [8, 32], strides = [1, 1]} : vector<8x96xf32> to vector<8x32xf32>
    %241 = arith.mulf %239, %174 : vector<8x32xf32>
    %242 = arith.mulf %238, %237 : vector<8x32xf32>
    %243 = arith.addf %241, %242 : vector<8x32xf32>
    %244 = math.tanh %243 : vector<8x32xf32>
    %245 = arith.mulf %240, %244 : vector<8x32xf32>
    %246 = tpu.concatenate %245, %198 in 1 : vector<8x32xf32>, vector<8x8xf32> -> vector<8x40xf32>
    %c0_83 = arith.constant 0 : index
    %c0_84 = arith.constant 0 : index
    %247 = vector.load %arg5[%c0_83, %c0_84] : memref<40x32xf32, #tpu.memory_space<vmem>>, vector<40x32xf32>
    %cst_85 = arith.constant dense<0.000000e+00> : vector<8x32xf32>
    %248 = tpu.matmul %246, %247, %cst_85 {dimension_numbers = #tpu.dot_dimension_numbers<[1], [0], [0], [1], [0, 0, 1, 1], [], []>} : vector<8x40xf32>, vector<40x32xf32>, vector<8x32xf32> -> vector<8x32xf32>
    %c0_86 = arith.constant 0 : index
    %c0_87 = arith.constant 0 : index
    %249 = vector.load %arg6[%c0_86, %c0_87] : memref<1x32xf32, #tpu.memory_space<vmem>>, vector<1x32xf32>
    %250 = vector.broadcast %249 : vector<1x32xf32> to vector<8x32xf32>
    %251 = arith.addf %248, %250 : vector<8x32xf32>
    %252 = vector.extract_strided_slice %251 {offsets = [0, 0], sizes = [8, 24], strides = [1, 1]} : vector<8x32xf32> to vector<8x24xf32>
    %253 = arith.negf %252 : vector<8x24xf32>
    %254 = math.exp %253 : vector<8x24xf32>
    %cst_88 = arith.constant 1.000000e+00 : f32
    %255 = vector.broadcast %cst_88 : f32 to vector<8x24xf32>
    %256 = arith.addf %255, %254 : vector<8x24xf32>
    %257 = arith.divf %255, %256 : vector<8x24xf32>
    %258 = vector.extract_strided_slice %251 {offsets = [0, 24], sizes = [8, 8], strides = [1, 1]} : vector<8x32xf32> to vector<8x8xf32>
    %259 = math.tanh %258 : vector<8x8xf32>
    %260 = vector.extract_strided_slice %257 {offsets = [0, 0], sizes = [8, 8], strides = [1, 1]} : vector<8x24xf32> to vector<8x8xf32>
    %261 = vector.extract_strided_slice %257 {offsets = [0, 8], sizes = [8, 8], strides = [1, 1]} : vector<8x24xf32> to vector<8x8xf32>
    %262 = vector.extract_strided_slice %257 {offsets = [0, 16], sizes = [8, 8], strides = [1, 1]} : vector<8x24xf32> to vector<8x8xf32>
    %263 = arith.mulf %261, %196 : vector<8x8xf32>
    %264 = arith.mulf %260, %259 : vector<8x8xf32>
    %265 = arith.addf %263, %264 : vector<8x8xf32>
    %266 = math.tanh %265 : vector<8x8xf32>
    %267 = arith.mulf %262, %266 : vector<8x8xf32>
    %268 = tpu.concatenate %267, %220 in 1 : vector<8x8xf32>, vector<8x32xf32> -> vector<8x40xf32>
    %c0_89 = arith.constant 0 : index
    %c0_90 = arith.constant 0 : index
    %269 = vector.load %arg7[%c0_89, %c0_90] : memref<40x128xf32, #tpu.memory_space<vmem>>, vector<40x128xf32>
    %cst_91 = arith.constant dense<0.000000e+00> : vector<8x128xf32>
    %270 = tpu.matmul %268, %269, %cst_91 {dimension_numbers = #tpu.dot_dimension_numbers<[1], [0], [0], [1], [0, 0, 1, 1], [], []>} : vector<8x40xf32>, vector<40x128xf32>, vector<8x128xf32> -> vector<8x128xf32>
    %c0_92 = arith.constant 0 : index
    %c0_93 = arith.constant 0 : index
    %271 = vector.load %arg8[%c0_92, %c0_93] : memref<1x128xf32, #tpu.memory_space<vmem>>, vector<1x128xf32>
    %272 = vector.broadcast %271 : vector<1x128xf32> to vector<8x128xf32>
    %273 = arith.addf %270, %272 : vector<8x128xf32>
    %274 = vector.extract_strided_slice %273 {offsets = [0, 0], sizes = [8, 96], strides = [1, 1]} : vector<8x128xf32> to vector<8x96xf32>
    %275 = arith.negf %274 : vector<8x96xf32>
    %276 = math.exp %275 : vector<8x96xf32>
    %cst_94 = arith.constant 1.000000e+00 : f32
    %277 = vector.broadcast %cst_94 : f32 to vector<8x96xf32>
    %278 = arith.addf %277, %276 : vector<8x96xf32>
    %279 = arith.divf %277, %278 : vector<8x96xf32>
    %280 = vector.extract_strided_slice %273 {offsets = [0, 96], sizes = [8, 32], strides = [1, 1]} : vector<8x128xf32> to vector<8x32xf32>
    %281 = math.tanh %280 : vector<8x32xf32>
    %282 = vector.extract_strided_slice %279 {offsets = [0, 0], sizes = [8, 32], strides = [1, 1]} : vector<8x96xf32> to vector<8x32xf32>
    %283 = vector.extract_strided_slice %279 {offsets = [0, 32], sizes = [8, 32], strides = [1, 1]} : vector<8x96xf32> to vector<8x32xf32>
    %284 = vector.extract_strided_slice %279 {offsets = [0, 64], sizes = [8, 32], strides = [1, 1]} : vector<8x96xf32> to vector<8x32xf32>
    %285 = arith.mulf %283, %218 : vector<8x32xf32>
    %286 = arith.mulf %282, %281 : vector<8x32xf32>
    %287 = arith.addf %285, %286 : vector<8x32xf32>
    %288 = math.tanh %287 : vector<8x32xf32>
    %289 = arith.mulf %284, %288 : vector<8x32xf32>
    %290 = arith.index_cast %224 : i32 to index
    %c0_95 = arith.constant 0 : index
    %291 = vector.load %arg19[%290, %c0_95] : memref<64x32xf32, #tpu.memory_space<vmem>>, vector<8x32xf32>
    tpu.vector_store %arg19[%290, %c0_95], %289 {strides = array<i32>} : memref<64x32xf32, #tpu.memory_space<vmem>>, vector<8x32xf32>,
    %c4_i32 = arith.constant 4 : i32
    %c8_i32_96 = arith.constant 8 : i32
    %292 = arith.muli %c4_i32, %c8_i32_96 : i32
    %293 = tpu.assume_multiple %292, 8 : i32
    %294 = arith.index_cast %293 : i32 to index
    %c0_97 = arith.constant 0 : index
    %295 = vector.load %arg18[%294, %c0_97] : memref<64x128xf32, #tpu.memory_space<vmem>>, vector<8x128xf32>
    %c0_98 = arith.constant 0 : index
    %c0_99 = arith.constant 0 : index
    %296 = vector.load %arg3[%c0_98, %c0_99] : memref<32x128xf32, #tpu.memory_space<vmem>>, vector<32x128xf32>
    %cst_100 = arith.constant dense<0.000000e+00> : vector<8x128xf32>
    %297 = tpu.matmul %245, %296, %cst_100 {dimension_numbers = #tpu.dot_dimension_numbers<[1], [0], [0], [1], [0, 0, 1, 1], [], []>} : vector<8x32xf32>, vector<32x128xf32>, vector<8x128xf32> -> vector<8x128xf32>
    %298 = arith.addf %295, %297 : vector<8x128xf32>
    %299 = vector.extract_strided_slice %298 {offsets = [0, 0], sizes = [8, 96], strides = [1, 1]} : vector<8x128xf32> to vector<8x96xf32>
    %300 = arith.negf %299 : vector<8x96xf32>
    %301 = math.exp %300 : vector<8x96xf32>
    %cst_101 = arith.constant 1.000000e+00 : f32
    %302 = vector.broadcast %cst_101 : f32 to vector<8x96xf32>
    %303 = arith.addf %302, %301 : vector<8x96xf32>
    %304 = arith.divf %302, %303 : vector<8x96xf32>
    %305 = vector.extract_strided_slice %298 {offsets = [0, 96], sizes = [8, 32], strides = [1, 1]} : vector<8x128xf32> to vector<8x32xf32>
    %306 = math.tanh %305 : vector<8x32xf32>
    %307 = vector.extract_strided_slice %304 {offsets = [0, 0], sizes = [8, 32], strides = [1, 1]} : vector<8x96xf32> to vector<8x32xf32>
    %308 = vector.extract_strided_slice %304 {offsets = [0, 32], sizes = [8, 32], strides = [1, 1]} : vector<8x96xf32> to vector<8x32xf32>
    %309 = vector.extract_strided_slice %304 {offsets = [0, 64], sizes = [8, 32], strides = [1, 1]} : vector<8x96xf32> to vector<8x32xf32>
    %310 = arith.mulf %308, %243 : vector<8x32xf32>
    %311 = arith.mulf %307, %306 : vector<8x32xf32>
    %312 = arith.addf %310, %311 : vector<8x32xf32>
    %313 = math.tanh %312 : vector<8x32xf32>
    %314 = arith.mulf %309, %313 : vector<8x32xf32>
    %315 = tpu.concatenate %314, %267 in 1 : vector<8x32xf32>, vector<8x8xf32> -> vector<8x40xf32>
    %c0_102 = arith.constant 0 : index
    %c0_103 = arith.constant 0 : index
    %316 = vector.load %arg5[%c0_102, %c0_103] : memref<40x32xf32, #tpu.memory_space<vmem>>, vector<40x32xf32>
    %cst_104 = arith.constant dense<0.000000e+00> : vector<8x32xf32>
    %317 = tpu.matmul %315, %316, %cst_104 {dimension_numbers = #tpu.dot_dimension_numbers<[1], [0], [0], [1], [0, 0, 1, 1], [], []>} : vector<8x40xf32>, vector<40x32xf32>, vector<8x32xf32> -> vector<8x32xf32>
    %c0_105 = arith.constant 0 : index
    %c0_106 = arith.constant 0 : index
    %318 = vector.load %arg6[%c0_105, %c0_106] : memref<1x32xf32, #tpu.memory_space<vmem>>, vector<1x32xf32>
    %319 = vector.broadcast %318 : vector<1x32xf32> to vector<8x32xf32>
    %320 = arith.addf %317, %319 : vector<8x32xf32>
    %321 = vector.extract_strided_slice %320 {offsets = [0, 0], sizes = [8, 24], strides = [1, 1]} : vector<8x32xf32> to vector<8x24xf32>
    %322 = arith.negf %321 : vector<8x24xf32>
    %323 = math.exp %322 : vector<8x24xf32>
    %cst_107 = arith.constant 1.000000e+00 : f32
    %324 = vector.broadcast %cst_107 : f32 to vector<8x24xf32>
    %325 = arith.addf %324, %323 : vector<8x24xf32>
    %326 = arith.divf %324, %325 : vector<8x24xf32>
    %327 = vector.extract_strided_slice %320 {offsets = [0, 24], sizes = [8, 8], strides = [1, 1]} : vector<8x32xf32> to vector<8x8xf32>
    %328 = math.tanh %327 : vector<8x8xf32>
    %329 = vector.extract_strided_slice %326 {offsets = [0, 0], sizes = [8, 8], strides = [1, 1]} : vector<8x24xf32> to vector<8x8xf32>
    %330 = vector.extract_strided_slice %326 {offsets = [0, 8], sizes = [8, 8], strides = [1, 1]} : vector<8x24xf32> to vector<8x8xf32>
    %331 = vector.extract_strided_slice %326 {offsets = [0, 16], sizes = [8, 8], strides = [1, 1]} : vector<8x24xf32> to vector<8x8xf32>
    %332 = arith.mulf %330, %265 : vector<8x8xf32>
    %333 = arith.mulf %329, %328 : vector<8x8xf32>
    %334 = arith.addf %332, %333 : vector<8x8xf32>
    %335 = math.tanh %334 : vector<8x8xf32>
    %336 = arith.mulf %331, %335 : vector<8x8xf32>
    %337 = tpu.concatenate %336, %289 in 1 : vector<8x8xf32>, vector<8x32xf32> -> vector<8x40xf32>
    %c0_108 = arith.constant 0 : index
    %c0_109 = arith.constant 0 : index
    %338 = vector.load %arg7[%c0_108, %c0_109] : memref<40x128xf32, #tpu.memory_space<vmem>>, vector<40x128xf32>
    %cst_110 = arith.constant dense<0.000000e+00> : vector<8x128xf32>
    %339 = tpu.matmul %337, %338, %cst_110 {dimension_numbers = #tpu.dot_dimension_numbers<[1], [0], [0], [1], [0, 0, 1, 1], [], []>} : vector<8x40xf32>, vector<40x128xf32>, vector<8x128xf32> -> vector<8x128xf32>
    %c0_111 = arith.constant 0 : index
    %c0_112 = arith.constant 0 : index
    %340 = vector.load %arg8[%c0_111, %c0_112] : memref<1x128xf32, #tpu.memory_space<vmem>>, vector<1x128xf32>
    %341 = vector.broadcast %340 : vector<1x128xf32> to vector<8x128xf32>
    %342 = arith.addf %339, %341 : vector<8x128xf32>
    %343 = vector.extract_strided_slice %342 {offsets = [0, 0], sizes = [8, 96], strides = [1, 1]} : vector<8x128xf32> to vector<8x96xf32>
    %344 = arith.negf %343 : vector<8x96xf32>
    %345 = math.exp %344 : vector<8x96xf32>
    %cst_113 = arith.constant 1.000000e+00 : f32
    %346 = vector.broadcast %cst_113 : f32 to vector<8x96xf32>
    %347 = arith.addf %346, %345 : vector<8x96xf32>
    %348 = arith.divf %346, %347 : vector<8x96xf32>
    %349 = vector.extract_strided_slice %342 {offsets = [0, 96], sizes = [8, 32], strides = [1, 1]} : vector<8x128xf32> to vector<8x32xf32>
    %350 = math.tanh %349 : vector<8x32xf32>
    %351 = vector.extract_strided_slice %348 {offsets = [0, 0], sizes = [8, 32], strides = [1, 1]} : vector<8x96xf32> to vector<8x32xf32>
    %352 = vector.extract_strided_slice %348 {offsets = [0, 32], sizes = [8, 32], strides = [1, 1]} : vector<8x96xf32> to vector<8x32xf32>
    %353 = vector.extract_strided_slice %348 {offsets = [0, 64], sizes = [8, 32], strides = [1, 1]} : vector<8x96xf32> to vector<8x32xf32>
    %354 = arith.mulf %352, %287 : vector<8x32xf32>
    %355 = arith.mulf %351, %350 : vector<8x32xf32>
    %356 = arith.addf %354, %355 : vector<8x32xf32>
    %357 = math.tanh %356 : vector<8x32xf32>
    %358 = arith.mulf %353, %357 : vector<8x32xf32>
    %359 = arith.index_cast %293 : i32 to index
    %c0_114 = arith.constant 0 : index
    %360 = vector.load %arg19[%359, %c0_114] : memref<64x32xf32, #tpu.memory_space<vmem>>, vector<8x32xf32>
    tpu.vector_store %arg19[%359, %c0_114], %358 {strides = array<i32>} : memref<64x32xf32, #tpu.memory_space<vmem>>, vector<8x32xf32>,
    %c5_i32 = arith.constant 5 : i32
    %c8_i32_115 = arith.constant 8 : i32
    %361 = arith.muli %c5_i32, %c8_i32_115 : i32
    %362 = tpu.assume_multiple %361, 8 : i32
    %363 = arith.index_cast %362 : i32 to index
    %c0_116 = arith.constant 0 : index
    %364 = vector.load %arg18[%363, %c0_116] : memref<64x128xf32, #tpu.memory_space<vmem>>, vector<8x128xf32>
    %c0_117 = arith.constant 0 : index
    %c0_118 = arith.constant 0 : index
    %365 = vector.load %arg3[%c0_117, %c0_118] : memref<32x128xf32, #tpu.memory_space<vmem>>, vector<32x128xf32>
    %cst_119 = arith.constant dense<0.000000e+00> : vector<8x128xf32>
    %366 = tpu.matmul %314, %365, %cst_119 {dimension_numbers = #tpu.dot_dimension_numbers<[1], [0], [0], [1], [0, 0, 1, 1], [], []>} : vector<8x32xf32>, vector<32x128xf32>, vector<8x128xf32> -> vector<8x128xf32>
    %367 = arith.addf %364, %366 : vector<8x128xf32>
    %368 = vector.extract_strided_slice %367 {offsets = [0, 0], sizes = [8, 96], strides = [1, 1]} : vector<8x128xf32> to vector<8x96xf32>
    %369 = arith.negf %368 : vector<8x96xf32>
    %370 = math.exp %369 : vector<8x96xf32>
    %cst_120 = arith.constant 1.000000e+00 : f32
    %371 = vector.broadcast %cst_120 : f32 to vector<8x96xf32>
    %372 = arith.addf %371, %370 : vector<8x96xf32>
    %373 = arith.divf %371, %372 : vector<8x96xf32>
    %374 = vector.extract_strided_slice %367 {offsets = [0, 96], sizes = [8, 32], strides = [1, 1]} : vector<8x128xf32> to vector<8x32xf32>
    %375 = math.tanh %374 : vector<8x32xf32>
    %376 = vector.extract_strided_slice %373 {offsets = [0, 0], sizes = [8, 32], strides = [1, 1]} : vector<8x96xf32> to vector<8x32xf32>
    %377 = vector.extract_strided_slice %373 {offsets = [0, 32], sizes = [8, 32], strides = [1, 1]} : vector<8x96xf32> to vector<8x32xf32>
    %378 = vector.extract_strided_slice %373 {offsets = [0, 64], sizes = [8, 32], strides = [1, 1]} : vector<8x96xf32> to vector<8x32xf32>
    %379 = arith.mulf %377, %312 : vector<8x32xf32>
    %380 = arith.mulf %376, %375 : vector<8x32xf32>
    %381 = arith.addf %379, %380 : vector<8x32xf32>
    %382 = math.tanh %381 : vector<8x32xf32>
    %383 = arith.mulf %378, %382 : vector<8x32xf32>
    %384 = tpu.concatenate %383, %336 in 1 : vector<8x32xf32>, vector<8x8xf32> -> vector<8x40xf32>
    %c0_121 = arith.constant 0 : index
    %c0_122 = arith.constant 0 : index
    %385 = vector.load %arg5[%c0_121, %c0_122] : memref<40x32xf32, #tpu.memory_space<vmem>>, vector<40x32xf32>
    %cst_123 = arith.constant dense<0.000000e+00> : vector<8x32xf32>
    %386 = tpu.matmul %384, %385, %cst_123 {dimension_numbers = #tpu.dot_dimension_numbers<[1], [0], [0], [1], [0, 0, 1, 1], [], []>} : vector<8x40xf32>, vector<40x32xf32>, vector<8x32xf32> -> vector<8x32xf32>
    %c0_124 = arith.constant 0 : index
    %c0_125 = arith.constant 0 : index
    %387 = vector.load %arg6[%c0_124, %c0_125] : memref<1x32xf32, #tpu.memory_space<vmem>>, vector<1x32xf32>
    %388 = vector.broadcast %387 : vector<1x32xf32> to vector<8x32xf32>
    %389 = arith.addf %386, %388 : vector<8x32xf32>
    %390 = vector.extract_strided_slice %389 {offsets = [0, 0], sizes = [8, 24], strides = [1, 1]} : vector<8x32xf32> to vector<8x24xf32>
    %391 = arith.negf %390 : vector<8x24xf32>
    %392 = math.exp %391 : vector<8x24xf32>
    %cst_126 = arith.constant 1.000000e+00 : f32
    %393 = vector.broadcast %cst_126 : f32 to vector<8x24xf32>
    %394 = arith.addf %393, %392 : vector<8x24xf32>
    %395 = arith.divf %393, %394 : vector<8x24xf32>
    %396 = vector.extract_strided_slice %389 {offsets = [0, 24], sizes = [8, 8], strides = [1, 1]} : vector<8x32xf32> to vector<8x8xf32>
    %397 = math.tanh %396 : vector<8x8xf32>
    %398 = vector.extract_strided_slice %395 {offsets = [0, 0], sizes = [8, 8], strides = [1, 1]} : vector<8x24xf32> to vector<8x8xf32>
    %399 = vector.extract_strided_slice %395 {offsets = [0, 8], sizes = [8, 8], strides = [1, 1]} : vector<8x24xf32> to vector<8x8xf32>
    %400 = vector.extract_strided_slice %395 {offsets = [0, 16], sizes = [8, 8], strides = [1, 1]} : vector<8x24xf32> to vector<8x8xf32>
    %401 = arith.mulf %399, %334 : vector<8x8xf32>
    %402 = arith.mulf %398, %397 : vector<8x8xf32>
    %403 = arith.addf %401, %402 : vector<8x8xf32>
    %404 = math.tanh %403 : vector<8x8xf32>
    %405 = arith.mulf %400, %404 : vector<8x8xf32>
    %406 = tpu.concatenate %405, %358 in 1 : vector<8x8xf32>, vector<8x32xf32> -> vector<8x40xf32>
    %c0_127 = arith.constant 0 : index
    %c0_128 = arith.constant 0 : index
    %407 = vector.load %arg7[%c0_127, %c0_128] : memref<40x128xf32, #tpu.memory_space<vmem>>, vector<40x128xf32>
    %cst_129 = arith.constant dense<0.000000e+00> : vector<8x128xf32>
    %408 = tpu.matmul %406, %407, %cst_129 {dimension_numbers = #tpu.dot_dimension_numbers<[1], [0], [0], [1], [0, 0, 1, 1], [], []>} : vector<8x40xf32>, vector<40x128xf32>, vector<8x128xf32> -> vector<8x128xf32>
    %c0_130 = arith.constant 0 : index
    %c0_131 = arith.constant 0 : index
    %409 = vector.load %arg8[%c0_130, %c0_131] : memref<1x128xf32, #tpu.memory_space<vmem>>, vector<1x128xf32>
    %410 = vector.broadcast %409 : vector<1x128xf32> to vector<8x128xf32>
    %411 = arith.addf %408, %410 : vector<8x128xf32>
    %412 = vector.extract_strided_slice %411 {offsets = [0, 0], sizes = [8, 96], strides = [1, 1]} : vector<8x128xf32> to vector<8x96xf32>
    %413 = arith.negf %412 : vector<8x96xf32>
    %414 = math.exp %413 : vector<8x96xf32>
    %cst_132 = arith.constant 1.000000e+00 : f32
    %415 = vector.broadcast %cst_132 : f32 to vector<8x96xf32>
    %416 = arith.addf %415, %414 : vector<8x96xf32>
    %417 = arith.divf %415, %416 : vector<8x96xf32>
    %418 = vector.extract_strided_slice %411 {offsets = [0, 96], sizes = [8, 32], strides = [1, 1]} : vector<8x128xf32> to vector<8x32xf32>
    %419 = math.tanh %418 : vector<8x32xf32>
    %420 = vector.extract_strided_slice %417 {offsets = [0, 0], sizes = [8, 32], strides = [1, 1]} : vector<8x96xf32> to vector<8x32xf32>
    %421 = vector.extract_strided_slice %417 {offsets = [0, 32], sizes = [8, 32], strides = [1, 1]} : vector<8x96xf32> to vector<8x32xf32>
    %422 = vector.extract_strided_slice %417 {offsets = [0, 64], sizes = [8, 32], strides = [1, 1]} : vector<8x96xf32> to vector<8x32xf32>
    %423 = arith.mulf %421, %356 : vector<8x32xf32>
    %424 = arith.mulf %420, %419 : vector<8x32xf32>
    %425 = arith.addf %423, %424 : vector<8x32xf32>
    %426 = math.tanh %425 : vector<8x32xf32>
    %427 = arith.mulf %422, %426 : vector<8x32xf32>
    %428 = arith.index_cast %362 : i32 to index
    %c0_133 = arith.constant 0 : index
    %429 = vector.load %arg19[%428, %c0_133] : memref<64x32xf32, #tpu.memory_space<vmem>>, vector<8x32xf32>
    tpu.vector_store %arg19[%428, %c0_133], %427 {strides = array<i32>} : memref<64x32xf32, #tpu.memory_space<vmem>>, vector<8x32xf32>,
    %c6_i32 = arith.constant 6 : i32
    %c8_i32_134 = arith.constant 8 : i32
    %430 = arith.muli %c6_i32, %c8_i32_134 : i32
    %431 = tpu.assume_multiple %430, 8 : i32
    %432 = arith.index_cast %431 : i32 to index
    %c0_135 = arith.constant 0 : index
    %433 = vector.load %arg18[%432, %c0_135] : memref<64x128xf32, #tpu.memory_space<vmem>>, vector<8x128xf32>
    %c0_136 = arith.constant 0 : index
    %c0_137 = arith.constant 0 : index
    %434 = vector.load %arg3[%c0_136, %c0_137] : memref<32x128xf32, #tpu.memory_space<vmem>>, vector<32x128xf32>
    %cst_138 = arith.constant dense<0.000000e+00> : vector<8x128xf32>
    %435 = tpu.matmul %383, %434, %cst_138 {dimension_numbers = #tpu.dot_dimension_numbers<[1], [0], [0], [1], [0, 0, 1, 1], [], []>} : vector<8x32xf32>, vector<32x128xf32>, vector<8x128xf32> -> vector<8x128xf32>
    %436 = arith.addf %433, %435 : vector<8x128xf32>
    %437 = vector.extract_strided_slice %436 {offsets = [0, 0], sizes = [8, 96], strides = [1, 1]} : vector<8x128xf32> to vector<8x96xf32>
    %438 = arith.negf %437 : vector<8x96xf32>
    %439 = math.exp %438 : vector<8x96xf32>
    %cst_139 = arith.constant 1.000000e+00 : f32
    %440 = vector.broadcast %cst_139 : f32 to vector<8x96xf32>
    %441 = arith.addf %440, %439 : vector<8x96xf32>
    %442 = arith.divf %440, %441 : vector<8x96xf32>
    %443 = vector.extract_strided_slice %436 {offsets = [0, 96], sizes = [8, 32], strides = [1, 1]} : vector<8x128xf32> to vector<8x32xf32>
    %444 = math.tanh %443 : vector<8x32xf32>
    %445 = vector.extract_strided_slice %442 {offsets = [0, 0], sizes = [8, 32], strides = [1, 1]} : vector<8x96xf32> to vector<8x32xf32>
    %446 = vector.extract_strided_slice %442 {offsets = [0, 32], sizes = [8, 32], strides = [1, 1]} : vector<8x96xf32> to vector<8x32xf32>
    %447 = vector.extract_strided_slice %442 {offsets = [0, 64], sizes = [8, 32], strides = [1, 1]} : vector<8x96xf32> to vector<8x32xf32>
    %448 = arith.mulf %446, %381 : vector<8x32xf32>
    %449 = arith.mulf %445, %444 : vector<8x32xf32>
    %450 = arith.addf %448, %449 : vector<8x32xf32>
    %451 = math.tanh %450 : vector<8x32xf32>
    %452 = arith.mulf %447, %451 : vector<8x32xf32>
    %453 = tpu.concatenate %452, %405 in 1 : vector<8x32xf32>, vector<8x8xf32> -> vector<8x40xf32>
    %c0_140 = arith.constant 0 : index
    %c0_141 = arith.constant 0 : index
    %454 = vector.load %arg5[%c0_140, %c0_141] : memref<40x32xf32, #tpu.memory_space<vmem>>, vector<40x32xf32>
    %cst_142 = arith.constant dense<0.000000e+00> : vector<8x32xf32>
    %455 = tpu.matmul %453, %454, %cst_142 {dimension_numbers = #tpu.dot_dimension_numbers<[1], [0], [0], [1], [0, 0, 1, 1], [], []>} : vector<8x40xf32>, vector<40x32xf32>, vector<8x32xf32> -> vector<8x32xf32>
    %c0_143 = arith.constant 0 : index
    %c0_144 = arith.constant 0 : index
    %456 = vector.load %arg6[%c0_143, %c0_144] : memref<1x32xf32, #tpu.memory_space<vmem>>, vector<1x32xf32>
    %457 = vector.broadcast %456 : vector<1x32xf32> to vector<8x32xf32>
    %458 = arith.addf %455, %457 : vector<8x32xf32>
    %459 = vector.extract_strided_slice %458 {offsets = [0, 0], sizes = [8, 24], strides = [1, 1]} : vector<8x32xf32> to vector<8x24xf32>
    %460 = arith.negf %459 : vector<8x24xf32>
    %461 = math.exp %460 : vector<8x24xf32>
    %cst_145 = arith.constant 1.000000e+00 : f32
    %462 = vector.broadcast %cst_145 : f32 to vector<8x24xf32>
    %463 = arith.addf %462, %461 : vector<8x24xf32>
    %464 = arith.divf %462, %463 : vector<8x24xf32>
    %465 = vector.extract_strided_slice %458 {offsets = [0, 24], sizes = [8, 8], strides = [1, 1]} : vector<8x32xf32> to vector<8x8xf32>
    %466 = math.tanh %465 : vector<8x8xf32>
    %467 = vector.extract_strided_slice %464 {offsets = [0, 0], sizes = [8, 8], strides = [1, 1]} : vector<8x24xf32> to vector<8x8xf32>
    %468 = vector.extract_strided_slice %464 {offsets = [0, 8], sizes = [8, 8], strides = [1, 1]} : vector<8x24xf32> to vector<8x8xf32>
    %469 = vector.extract_strided_slice %464 {offsets = [0, 16], sizes = [8, 8], strides = [1, 1]} : vector<8x24xf32> to vector<8x8xf32>
    %470 = arith.mulf %468, %403 : vector<8x8xf32>
    %471 = arith.mulf %467, %466 : vector<8x8xf32>
    %472 = arith.addf %470, %471 : vector<8x8xf32>
    %473 = math.tanh %472 : vector<8x8xf32>
    %474 = arith.mulf %469, %473 : vector<8x8xf32>
    %475 = tpu.concatenate %474, %427 in 1 : vector<8x8xf32>, vector<8x32xf32> -> vector<8x40xf32>
    %c0_146 = arith.constant 0 : index
    %c0_147 = arith.constant 0 : index
    %476 = vector.load %arg7[%c0_146, %c0_147] : memref<40x128xf32, #tpu.memory_space<vmem>>, vector<40x128xf32>
    %cst_148 = arith.constant dense<0.000000e+00> : vector<8x128xf32>
    %477 = tpu.matmul %475, %476, %cst_148 {dimension_numbers = #tpu.dot_dimension_numbers<[1], [0], [0], [1], [0, 0, 1, 1], [], []>} : vector<8x40xf32>, vector<40x128xf32>, vector<8x128xf32> -> vector<8x128xf32>
    %c0_149 = arith.constant 0 : index
    %c0_150 = arith.constant 0 : index
    %478 = vector.load %arg8[%c0_149, %c0_150] : memref<1x128xf32, #tpu.memory_space<vmem>>, vector<1x128xf32>
    %479 = vector.broadcast %478 : vector<1x128xf32> to vector<8x128xf32>
    %480 = arith.addf %477, %479 : vector<8x128xf32>
    %481 = vector.extract_strided_slice %480 {offsets = [0, 0], sizes = [8, 96], strides = [1, 1]} : vector<8x128xf32> to vector<8x96xf32>
    %482 = arith.negf %481 : vector<8x96xf32>
    %483 = math.exp %482 : vector<8x96xf32>
    %cst_151 = arith.constant 1.000000e+00 : f32
    %484 = vector.broadcast %cst_151 : f32 to vector<8x96xf32>
    %485 = arith.addf %484, %483 : vector<8x96xf32>
    %486 = arith.divf %484, %485 : vector<8x96xf32>
    %487 = vector.extract_strided_slice %480 {offsets = [0, 96], sizes = [8, 32], strides = [1, 1]} : vector<8x128xf32> to vector<8x32xf32>
    %488 = math.tanh %487 : vector<8x32xf32>
    %489 = vector.extract_strided_slice %486 {offsets = [0, 0], sizes = [8, 32], strides = [1, 1]} : vector<8x96xf32> to vector<8x32xf32>
    %490 = vector.extract_strided_slice %486 {offsets = [0, 32], sizes = [8, 32], strides = [1, 1]} : vector<8x96xf32> to vector<8x32xf32>
    %491 = vector.extract_strided_slice %486 {offsets = [0, 64], sizes = [8, 32], strides = [1, 1]} : vector<8x96xf32> to vector<8x32xf32>
    %492 = arith.mulf %490, %425 : vector<8x32xf32>
    %493 = arith.mulf %489, %488 : vector<8x32xf32>
    %494 = arith.addf %492, %493 : vector<8x32xf32>
    %495 = math.tanh %494 : vector<8x32xf32>
    %496 = arith.mulf %491, %495 : vector<8x32xf32>
    %497 = arith.index_cast %431 : i32 to index
    %c0_152 = arith.constant 0 : index
    %498 = vector.load %arg19[%497, %c0_152] : memref<64x32xf32, #tpu.memory_space<vmem>>, vector<8x32xf32>
    tpu.vector_store %arg19[%497, %c0_152], %496 {strides = array<i32>} : memref<64x32xf32, #tpu.memory_space<vmem>>, vector<8x32xf32>,
    %c7_i32 = arith.constant 7 : i32
    %c8_i32_153 = arith.constant 8 : i32
    %499 = arith.muli %c7_i32, %c8_i32_153 : i32
    %500 = tpu.assume_multiple %499, 8 : i32
    %501 = arith.index_cast %500 : i32 to index
    %c0_154 = arith.constant 0 : index
    %502 = vector.load %arg18[%501, %c0_154] : memref<64x128xf32, #tpu.memory_space<vmem>>, vector<8x128xf32>
    %c0_155 = arith.constant 0 : index
    %c0_156 = arith.constant 0 : index
    %503 = vector.load %arg3[%c0_155, %c0_156] : memref<32x128xf32, #tpu.memory_space<vmem>>, vector<32x128xf32>
    %cst_157 = arith.constant dense<0.000000e+00> : vector<8x128xf32>
    %504 = tpu.matmul %452, %503, %cst_157 {dimension_numbers = #tpu.dot_dimension_numbers<[1], [0], [0], [1], [0, 0, 1, 1], [], []>} : vector<8x32xf32>, vector<32x128xf32>, vector<8x128xf32> -> vector<8x128xf32>
    %505 = arith.addf %502, %504 : vector<8x128xf32>
    %506 = vector.extract_strided_slice %505 {offsets = [0, 0], sizes = [8, 96], strides = [1, 1]} : vector<8x128xf32> to vector<8x96xf32>
    %507 = arith.negf %506 : vector<8x96xf32>
    %508 = math.exp %507 : vector<8x96xf32>
    %cst_158 = arith.constant 1.000000e+00 : f32
    %509 = vector.broadcast %cst_158 : f32 to vector<8x96xf32>
    %510 = arith.addf %509, %508 : vector<8x96xf32>
    %511 = arith.divf %509, %510 : vector<8x96xf32>
    %512 = vector.extract_strided_slice %505 {offsets = [0, 96], sizes = [8, 32], strides = [1, 1]} : vector<8x128xf32> to vector<8x32xf32>
    %513 = math.tanh %512 : vector<8x32xf32>
    %514 = vector.extract_strided_slice %511 {offsets = [0, 0], sizes = [8, 32], strides = [1, 1]} : vector<8x96xf32> to vector<8x32xf32>
    %515 = vector.extract_strided_slice %511 {offsets = [0, 32], sizes = [8, 32], strides = [1, 1]} : vector<8x96xf32> to vector<8x32xf32>
    %516 = vector.extract_strided_slice %511 {offsets = [0, 64], sizes = [8, 32], strides = [1, 1]} : vector<8x96xf32> to vector<8x32xf32>
    %517 = arith.mulf %515, %450 : vector<8x32xf32>
    %518 = arith.mulf %514, %513 : vector<8x32xf32>
    %519 = arith.addf %517, %518 : vector<8x32xf32>
    %520 = math.tanh %519 : vector<8x32xf32>
    %521 = arith.mulf %516, %520 : vector<8x32xf32>
    %522 = tpu.concatenate %521, %474 in 1 : vector<8x32xf32>, vector<8x8xf32> -> vector<8x40xf32>
    %c0_159 = arith.constant 0 : index
    %c0_160 = arith.constant 0 : index
    %523 = vector.load %arg5[%c0_159, %c0_160] : memref<40x32xf32, #tpu.memory_space<vmem>>, vector<40x32xf32>
    %cst_161 = arith.constant dense<0.000000e+00> : vector<8x32xf32>
    %524 = tpu.matmul %522, %523, %cst_161 {dimension_numbers = #tpu.dot_dimension_numbers<[1], [0], [0], [1], [0, 0, 1, 1], [], []>} : vector<8x40xf32>, vector<40x32xf32>, vector<8x32xf32> -> vector<8x32xf32>
    %c0_162 = arith.constant 0 : index
    %c0_163 = arith.constant 0 : index
    %525 = vector.load %arg6[%c0_162, %c0_163] : memref<1x32xf32, #tpu.memory_space<vmem>>, vector<1x32xf32>
    %526 = vector.broadcast %525 : vector<1x32xf32> to vector<8x32xf32>
    %527 = arith.addf %524, %526 : vector<8x32xf32>
    %528 = vector.extract_strided_slice %527 {offsets = [0, 0], sizes = [8, 24], strides = [1, 1]} : vector<8x32xf32> to vector<8x24xf32>
    %529 = arith.negf %528 : vector<8x24xf32>
    %530 = math.exp %529 : vector<8x24xf32>
    %cst_164 = arith.constant 1.000000e+00 : f32
    %531 = vector.broadcast %cst_164 : f32 to vector<8x24xf32>
    %532 = arith.addf %531, %530 : vector<8x24xf32>
    %533 = arith.divf %531, %532 : vector<8x24xf32>
    %534 = vector.extract_strided_slice %527 {offsets = [0, 24], sizes = [8, 8], strides = [1, 1]} : vector<8x32xf32> to vector<8x8xf32>
    %535 = math.tanh %534 : vector<8x8xf32>
    %536 = vector.extract_strided_slice %533 {offsets = [0, 0], sizes = [8, 8], strides = [1, 1]} : vector<8x24xf32> to vector<8x8xf32>
    %537 = vector.extract_strided_slice %533 {offsets = [0, 8], sizes = [8, 8], strides = [1, 1]} : vector<8x24xf32> to vector<8x8xf32>
    %538 = vector.extract_strided_slice %533 {offsets = [0, 16], sizes = [8, 8], strides = [1, 1]} : vector<8x24xf32> to vector<8x8xf32>
    %539 = arith.mulf %537, %472 : vector<8x8xf32>
    %540 = arith.mulf %536, %535 : vector<8x8xf32>
    %541 = arith.addf %539, %540 : vector<8x8xf32>
    %542 = math.tanh %541 : vector<8x8xf32>
    %543 = arith.mulf %538, %542 : vector<8x8xf32>
    %544 = tpu.concatenate %543, %496 in 1 : vector<8x8xf32>, vector<8x32xf32> -> vector<8x40xf32>
    %c0_165 = arith.constant 0 : index
    %c0_166 = arith.constant 0 : index
    %545 = vector.load %arg7[%c0_165, %c0_166] : memref<40x128xf32, #tpu.memory_space<vmem>>, vector<40x128xf32>
    %cst_167 = arith.constant dense<0.000000e+00> : vector<8x128xf32>
    %546 = tpu.matmul %544, %545, %cst_167 {dimension_numbers = #tpu.dot_dimension_numbers<[1], [0], [0], [1], [0, 0, 1, 1], [], []>} : vector<8x40xf32>, vector<40x128xf32>, vector<8x128xf32> -> vector<8x128xf32>
    %c0_168 = arith.constant 0 : index
    %c0_169 = arith.constant 0 : index
    %547 = vector.load %arg8[%c0_168, %c0_169] : memref<1x128xf32, #tpu.memory_space<vmem>>, vector<1x128xf32>
    %548 = vector.broadcast %547 : vector<1x128xf32> to vector<8x128xf32>
    %549 = arith.addf %546, %548 : vector<8x128xf32>
    %550 = vector.extract_strided_slice %549 {offsets = [0, 0], sizes = [8, 96], strides = [1, 1]} : vector<8x128xf32> to vector<8x96xf32>
    %551 = arith.negf %550 : vector<8x96xf32>
    %552 = math.exp %551 : vector<8x96xf32>
    %cst_170 = arith.constant 1.000000e+00 : f32
    %553 = vector.broadcast %cst_170 : f32 to vector<8x96xf32>
    %554 = arith.addf %553, %552 : vector<8x96xf32>
    %555 = arith.divf %553, %554 : vector<8x96xf32>
    %556 = vector.extract_strided_slice %549 {offsets = [0, 96], sizes = [8, 32], strides = [1, 1]} : vector<8x128xf32> to vector<8x32xf32>
    %557 = math.tanh %556 : vector<8x32xf32>
    %558 = vector.extract_strided_slice %555 {offsets = [0, 0], sizes = [8, 32], strides = [1, 1]} : vector<8x96xf32> to vector<8x32xf32>
    %559 = vector.extract_strided_slice %555 {offsets = [0, 32], sizes = [8, 32], strides = [1, 1]} : vector<8x96xf32> to vector<8x32xf32>
    %560 = vector.extract_strided_slice %555 {offsets = [0, 64], sizes = [8, 32], strides = [1, 1]} : vector<8x96xf32> to vector<8x32xf32>
    %561 = arith.mulf %559, %494 : vector<8x32xf32>
    %562 = arith.mulf %558, %557 : vector<8x32xf32>
    %563 = arith.addf %561, %562 : vector<8x32xf32>
    %564 = math.tanh %563 : vector<8x32xf32>
    %565 = arith.mulf %560, %564 : vector<8x32xf32>
    %566 = arith.index_cast %500 : i32 to index
    %c0_171 = arith.constant 0 : index
    %567 = vector.load %arg19[%566, %c0_171] : memref<64x32xf32, #tpu.memory_space<vmem>>, vector<8x32xf32>
    tpu.vector_store %arg19[%566, %c0_171], %565 {strides = array<i32>} : memref<64x32xf32, #tpu.memory_space<vmem>>, vector<8x32xf32>,
    %c8_i32_172 = arith.constant 8 : i32
    %c0_173 = arith.constant 0 : index
    %c0_174 = arith.constant 0 : index
    %568 = vector.load %arg12[%c0_173, %c0_174] : memref<8x32xf32, #tpu.memory_space<vmem>>, vector<8x32xf32>
    tpu.vector_store %arg12[%c0_173, %c0_174], %521 {strides = array<i32>} : memref<8x32xf32, #tpu.memory_space<vmem>>, vector<8x32xf32>,
    %c0_175 = arith.constant 0 : index
    %c0_176 = arith.constant 0 : index
    %569 = vector.load %arg13[%c0_175, %c0_176] : memref<8x32xf32, #tpu.memory_space<vmem>>, vector<8x32xf32>
    tpu.vector_store %arg13[%c0_175, %c0_176], %519 {strides = array<i32>} : memref<8x32xf32, #tpu.memory_space<vmem>>, vector<8x32xf32>,
    %c0_177 = arith.constant 0 : index
    %c0_178 = arith.constant 0 : index
    %570 = vector.load %arg14[%c0_177, %c0_178] : memref<8x8xf32, #tpu.memory_space<vmem>>, vector<8x8xf32>
    tpu.vector_store %arg14[%c0_177, %c0_178], %543 {strides = array<i32>} : memref<8x8xf32, #tpu.memory_space<vmem>>, vector<8x8xf32>,
    %c0_179 = arith.constant 0 : index
    %c0_180 = arith.constant 0 : index
    %571 = vector.load %arg15[%c0_179, %c0_180] : memref<8x8xf32, #tpu.memory_space<vmem>>, vector<8x8xf32>
    tpu.vector_store %arg15[%c0_179, %c0_180], %541 {strides = array<i32>} : memref<8x8xf32, #tpu.memory_space<vmem>>, vector<8x8xf32>,
    %c0_181 = arith.constant 0 : index
    %c0_182 = arith.constant 0 : index
    %572 = vector.load %arg16[%c0_181, %c0_182] : memref<8x32xf32, #tpu.memory_space<vmem>>, vector<8x32xf32>
    tpu.vector_store %arg16[%c0_181, %c0_182], %565 {strides = array<i32>} : memref<8x32xf32, #tpu.memory_space<vmem>>, vector<8x32xf32>,
    %c0_183 = arith.constant 0 : index
    %c0_184 = arith.constant 0 : index
    %573 = vector.load %arg17[%c0_183, %c0_184] : memref<8x32xf32, #tpu.memory_space<vmem>>, vector<8x32xf32>
    tpu.vector_store %arg17[%c0_183, %c0_184], %563 {strides = array<i32>} : memref<8x32xf32, #tpu.memory_space<vmem>>, vector<8x32xf32>,
    %c0_185 = arith.constant 0 : index
    %c0_186 = arith.constant 0 : index
    %574 = vector.load %arg19[%c0_185, %c0_186] : memref<64x32xf32, #tpu.memory_space<vmem>>, vector<64x32xf32>
    %c0_187 = arith.constant 0 : index
    %c0_188 = arith.constant 0 : index
    %575 = vector.load %arg9[%c0_187, %c0_188] : memref<32x128xf32, #tpu.memory_space<vmem>>, vector<32x128xf32>
    %cst_189 = arith.constant dense<0.000000e+00> : vector<64x128xf32>
    %576 = tpu.matmul %574, %575, %cst_189 {dimension_numbers = #tpu.dot_dimension_numbers<[1], [0], [0], [1], [0, 0, 1, 1], [], []>} : vector<64x32xf32>, vector<32x128xf32>, vector<64x128xf32> -> vector<64x128xf32>
    %c0_190 = arith.constant 0 : index
    %c0_191 = arith.constant 0 : index
    %577 = vector.load %arg10[%c0_190, %c0_191] : memref<1x128xf32, #tpu.memory_space<vmem>>, vector<1x128xf32>
    %578 = vector.broadcast %577 : vector<1x128xf32> to vector<64x128xf32>
    %579 = arith.addf %576, %578 : vector<64x128xf32>
    %c0_192 = arith.constant 0 : index
    %c0_193 = arith.constant 0 : index
    %580 = vector.load %arg11[%c0_192, %c0_193] : memref<64x128xf32, #tpu.memory_space<vmem>>, vector<64x128xf32>
    tpu.vector_store %arg11[%c0_192, %c0_193], %579 {strides = array<i32>} : memref<64x128xf32, #tpu.memory_space<vmem>>, vector<64x128xf32>,
    return
  }
  func.func @transform_0(%arg0: i32) -> (i32, i32) {
    %c0_i32 = arith.constant 0 : i32
    %c0_i32_0 = arith.constant 0 : i32
    return %arg0, %c0_i32 : i32, i32
  }
  func.func @transform_1(%arg0: i32) -> (i32, i32) {
    %c0_i32 = arith.constant 0 : i32
    %c0_i32_0 = arith.constant 0 : i32
    %c0_i32_1 = arith.constant 0 : i32
    return %c0_i32, %c0_i32_0 : i32, i32
  }
  func.func @transform_2(%arg0: i32) -> (i32, i32) {
    %c0_i32 = arith.constant 0 : i32
    %c0_i32_0 = arith.constant 0 : i32
    %c0_i32_1 = arith.constant 0 : i32
    return %c0_i32, %c0_i32_0 : i32, i32
  }
  func.func @transform_3(%arg0: i32) -> (i32, i32) {
    %c0_i32 = arith.constant 0 : i32
    %c0_i32_0 = arith.constant 0 : i32
    %c0_i32_1 = arith.constant 0 : i32
    return %c0_i32, %c0_i32_0 : i32, i32
  }
  func.func @transform_4(%arg0: i32) -> (i32, i32) {
    %c0_i32 = arith.constant 0 : i32
    %c0_i32_0 = arith.constant 0 : i32
    %c0_i32_1 = arith.constant 0 : i32
    return %c0_i32, %c0_i32_0 : i32, i32
  }
  func.func @transform_5(%arg0: i32) -> (i32, i32) {
    %c0_i32 = arith.constant 0 : i32
    %c0_i32_0 = arith.constant 0 : i32
    %c0_i32_1 = arith.constant 0 : i32
    return %c0_i32, %c0_i32_0 : i32, i32
  }
  func.func @transform_6(%arg0: i32) -> (i32, i32) {
    %c0_i32 = arith.constant 0 : i32
    %c0_i32_0 = arith.constant 0 : i32
    %c0_i32_1 = arith.constant 0 : i32
    return %c0_i32, %c0_i32_0 : i32, i32
  }
  func.func @transform_7(%arg0: i32) -> (i32, i32) {
    %c0_i32 = arith.constant 0 : i32
    %c0_i32_0 = arith.constant 0 : i32
    %c0_i32_1 = arith.constant 0 : i32
    return %c0_i32, %c0_i32_0 : i32, i32
  }
  func.func @transform_8(%arg0: i32) -> (i32, i32) {
    %c0_i32 = arith.constant 0 : i32
    %c0_i32_0 = arith.constant 0 : i32
    %c0_i32_1 = arith.constant 0 : i32
    return %c0_i32, %c0_i32_0 : i32, i32
  }
  func.func @transform_9(%arg0: i32) -> (i32, i32) {
    %c0_i32 = arith.constant 0 : i32
    %c0_i32_0 = arith.constant 0 : i32
    %c0_i32_1 = arith.constant 0 : i32
    return %c0_i32, %c0_i32_0 : i32, i32
  }
  func.func @transform_10(%arg0: i32) -> (i32, i32) {
    %c0_i32 = arith.constant 0 : i32
    %c0_i32_0 = arith.constant 0 : i32
    return %arg0, %c0_i32 : i32, i32
  }
}

</mosaic_0001>

<llo_original>
// kernel: tpu_custom_call.1
$region0: #{tpu_custom_call.1}
  #allocation0 [shape = 'u32[]', space=smem, size = 0x4, offset = 0x4, fixed_abs, tag = 'smem constant byte address 0x4 - core index']
  #allocation1 [shape = 'u32[144,128]{1,0:T(1,128)}', space=vmem, size = 0x12000, scoped, tag = 'internal scratch']
  #allocation2 [shape = 'f32[8,32]{1,0:T(8,128)}', space=vmem, size = 0x1000, scoped, tag = 'scratch operand']
  #allocation3 [shape = 'f32[8,32]{1,0:T(8,128)}', space=vmem, size = 0x1000, scoped, tag = 'scratch operand']
  #allocation4 [shape = 'f32[8,8]{1,0:T(8,128)}', space=vmem, size = 0x1000, scoped, tag = 'scratch operand']
  #allocation5 [shape = 'f32[8,8]{1,0:T(8,128)}', space=vmem, size = 0x1000, scoped, tag = 'scratch operand']
  #allocation6 [shape = 'f32[8,32]{1,0:T(8,128)}', space=vmem, size = 0x1000, scoped, tag = 'scratch operand']
  #allocation7 [shape = 'f32[8,32]{1,0:T(8,128)}', space=vmem, size = 0x1000, scoped, tag = 'scratch operand']
  #allocation8 [shape = 'f32[64,128]{1,0:T(8,128)}', space=vmem, size = 0x8000, scoped, tag = 'scratch operand']
  #allocation9 [shape = 'f32[64,32]{1,0:T(8,128)}', space=vmem, size = 0x8000, scoped, tag = 'scratch operand']
  %s0 = inlined_call_operand.vmem [shape: f32[64,16], index: 0, kind: input, shape index: {}]
  %s1 = inlined_call_operand.vmem [shape: f32[16,128], index: 1, kind: input, shape index: {}]
  %s2 = inlined_call_operand.vmem [shape: f32[32,128], index: 2, kind: input, shape index: {}]
  %s3 = inlined_call_operand.vmem [shape: f32[1,128], index: 3, kind: input, shape index: {}]
  %s4 = inlined_call_operand.vmem [shape: f32[40,32], index: 4, kind: input, shape index: {}]
  %s5 = inlined_call_operand.vmem [shape: f32[1,32], index: 5, kind: input, shape index: {}]
  %s6 = inlined_call_operand.vmem [shape: f32[40,128], index: 6, kind: input, shape index: {}]
  %s7 = inlined_call_operand.vmem [shape: f32[1,128], index: 7, kind: input, shape index: {}]
  %s8 = inlined_call_operand.vmem [shape: f32[32,128], index: 8, kind: input, shape index: {}]
  %s9 = inlined_call_operand.vmem [shape: f32[1,128], index: 9, kind: input, shape index: {}]
  %s10 = inlined_call_operand.hbm [shape: f32[64,128], index: 10, kind: output, shape index: {}]
  %s11 = sld [smem:[#allocation0]]
  $region54: #{tpu_custom_call.1} parent=0
    _
  %s13 = ssub.s32 1, %s11
  %s14 = scalar_select 0, %s13, %s11
  $region1: #{tpu_custom_call.1} parent=0
    #allocation10 [shape = 'u8[32768]{0}', space=vmem, size = 0x8000, scoped, tag = 'output window, operand 0, single buffered']
    #allocation11 [shape = 's32[1]{0}', space=sflag, size = 0x4, scoped, tag = 'scoped memory for tpu_custom_call.1']
    %15 = vsyncpa [#allocation11], 0
    // Predicated region
    $region2: #{tpu_custom_call.1} parent=1 // pred_check
      _
    $region3: #{tpu_custom_call.1} parent=1 // pred_check_branch
      %17 = sbr.rel (0) target = $region5
    $region4: #{tpu_custom_call.1} parent=1 // pred_region
      _
    $region5: #{tpu_custom_call.1} parent=1 // pred_fallthru
      _
    // Predicated region
    $region6: #{tpu_custom_call.1} parent=1 // pred_check
      _
    $region7: #{tpu_custom_call.1} parent=1 // pred_check_branch
      %19 = sbr.rel (0) target = $region9
    $region8: #{tpu_custom_call.1} parent=1 // pred_region
      _
    $region9: #{tpu_custom_call.1} parent=1 // pred_fallthru
      _
    // Predicated region
    $region10: #{tpu_custom_call.1} parent=1 // pred_check
      _
    $region11: #{tpu_custom_call.1} parent=1 // pred_check_branch
      %21 = sbr.rel (0) target = $region13
    $region12: #{tpu_custom_call.1} parent=1 // pred_region
      _
    $region13: #{tpu_custom_call.1} parent=1 // pred_fallthru
      _
    // Predicated region
    $region14: #{tpu_custom_call.1} parent=1 // pred_check
      _
    $region15: #{tpu_custom_call.1} parent=1 // pred_check_branch
      %23 = sbr.rel (0) target = $region17
    $region16: #{tpu_custom_call.1} parent=1 // pred_region
      _
    $region17: #{tpu_custom_call.1} parent=1 // pred_fallthru
      _
    // Predicated region
    $region18: #{tpu_custom_call.1} parent=1 // pred_check
      _
    $region19: #{tpu_custom_call.1} parent=1 // pred_check_branch
      %25 = sbr.rel (0) target = $region21
    $region20: #{tpu_custom_call.1} parent=1 // pred_region
      _
    $region21: #{tpu_custom_call.1} parent=1 // pred_fallthru
      _
    // Predicated region
    $region22: #{tpu_custom_call.1} parent=1 // pred_check
      _
    $region23: #{tpu_custom_call.1} parent=1 // pred_check_branch
      %27 = sbr.rel (0) target = $region25
    $region24: #{tpu_custom_call.1} parent=1 // pred_region
      _
    $region25: #{tpu_custom_call.1} parent=1 // pred_fallthru
      _
    // Predicated region
    $region26: #{tpu_custom_call.1} parent=1 // pred_check
      _
    $region27: #{tpu_custom_call.1} parent=1 // pred_check_branch
      %29 = sbr.rel (0) target = $region29
    $region28: #{tpu_custom_call.1} parent=1 // pred_region
      _
    $region29: #{tpu_custom_call.1} parent=1 // pred_fallthru
      _
    // Predicated region
    $region30: #{tpu_custom_call.1} parent=1 // pred_check
      _
    $region31: #{tpu_custom_call.1} parent=1 // pred_check_branch
      %31 = sbr.rel (0) target = $region33
    $region32: #{tpu_custom_call.1} parent=1 // pred_region
      _
    $region33: #{tpu_custom_call.1} parent=1 // pred_fallthru
      _
    // Predicated region
    $region34: #{tpu_custom_call.1} parent=1 // pred_check
      _
    $region35: #{tpu_custom_call.1} parent=1 // pred_check_branch
      %33 = sbr.rel (0) target = $region37
    $region36: #{tpu_custom_call.1} parent=1 // pred_region
      _
    $region37: #{tpu_custom_call.1} parent=1 // pred_fallthru
      _
    // Predicated region
    $region38: #{tpu_custom_call.1} parent=1 // pred_check
      _
    $region39: #{tpu_custom_call.1} parent=1 // pred_check_branch
      %35 = sbr.rel (0) target = $region41
    $region40: #{tpu_custom_call.1} parent=1 // pred_region
      _
    $region41: #{tpu_custom_call.1} parent=1 // pred_fallthru
      _
    %p36 = scmp.eq.s32.totalorder 0, 0
    // Predicated region
    $region42: #{tpu_custom_call.1} parent=1 // pred_check
      %p37 = pneg %p36
    $region43: #{tpu_custom_call.1} parent=1 // pred_check_branch
      %39 = sbr.rel (%p37) target = $region45
    $region44: #{tpu_custom_call.1} parent=1 // pred_region
      %vm40 = vcmask 261120
      %41 = vst.msk [vmem:[#allocation2] sm:$0xff] %vm40, 0.0
      %42 = vst.msk [vmem:[#allocation3] sm:$0xff] %vm40, 0.0
      %vm43 = vcmask 64512
      %44 = vst.msk [vmem:[#allocation4] sm:$0xff] %vm43, 0.0
      %45 = vst.msk [vmem:[#allocation5] sm:$0xff] %vm43, 0.0
      %46 = vst.msk [vmem:[#allocation6] sm:$0xff] %vm40, 0.0
      %47 = vst.msk [vmem:[#allocation7] sm:$0xff] %vm40, 0.0
    $region45: #{tpu_custom_call.1} parent=1 // pred_fallthru
      _
    %v48 = vld [vmem:[%s0] sm:$0xff]
    %v49 = vld [vmem:[%s0 + $0x8] sm:$0xff]
    %v50 = vld [vmem:[%s0 + $0x10] sm:$0xff]
    %v51 = vld [vmem:[%s0 + $0x18] sm:$0xff]
    %v52 = vld [vmem:[%s0 + $0x20] sm:$0xff]
    %v53 = vld [vmem:[%s0 + $0x28] sm:$0xff]
    %v54 = vld [vmem:[%s0 + $0x30] sm:$0xff]
    %v55 = vld [vmem:[%s0 + $0x38] sm:$0xff]
    %v56 = vld [vmem:[%s1] sm:$0xff]
    %v57 = vld [vmem:[%s1 + $0x8] sm:$0xff]
    %v58 = vld [vmem:[%s3] sm:$0x1]
    %v60 = vlaneseq
    %v61 = vshrl.u32 %v60, 7
    %v62 = vsub.s32 0, %v61
    %v63 = vrot.slane %v58, %v62
    %vm65 = vcmask 130048
    %v67 = vsel %vm65, %v48, 0
    %v70 = vsel %vm65, %v49, 0
    %v73 = vsel %vm65, %v50, 0
    %v76 = vsel %vm65, %v51, 0
    %v79 = vsel %vm65, %v52, 0
    %v82 = vsel %vm65, %v53, 0
    %v85 = vsel %vm65, %v54, 0
    %v88 = vsel %vm65, %v55, 0
    %90 = vmatprep.subr.mxu0 0.0
    %91 = vmatpush1.msra.mxu0 %v56
    %92 = vmatprep.subr.mxu0 0.0
    %93 = vmatpush1.msra.mxu0 %v57
    %94 = vmatprep.subr.mxu0 0.0
    %95 = vmatpush1.msra.mxu0 0.0
    %96 = vmatprep.subr.mxu0 0.0
    %97 = vmatpush1.msra.mxu0 0.0
    %98 = vmatprep.subr.mxu0 0.0
    %99 = vmatpush1.msra.mxu0 0.0
    %100 = vmatprep.subr.mxu0 0.0
    %101 = vmatpush1.msra.mxu0 0.0
    %102 = vmatprep.subr.mxu0 0.0
    %103 = vmatpush1.msra.mxu0 0.0
    %104 = vmatprep.subr.mxu0 0.0
    %105 = vmatpush1.msra.mxu0 0.0
    %106 = vmatprep.subr.mxu0 0.0
    %107 = vmatpush1.msra.mxu0 0.0
    %108 = vmatprep.subr.mxu0 0.0
    %109 = vmatpush1.msra.mxu0 0.0
    %110 = vmatprep.subr.mxu0 0.0
    %111 = vmatpush1.msra.mxu0 0.0
    %112 = vmatprep.subr.mxu0 0.0
    %113 = vmatpush1.msra.mxu0 0.0
    %114 = vmatprep.subr.mxu0 0.0
    %115 = vmatpush1.msra.mxu0 0.0
    %116 = vmatprep.subr.mxu0 0.0
    %117 = vmatpush1.msra.mxu0 0.0
    %118 = vmatprep.subr.mxu0 0.0
    %119 = vmatpush1.msra.mxu0 0.0
    %120 = vmatprep.subr.mxu0 0.0
    %121 = vmatpush1.msra.mxu0 0.0
    %122 = vmatprep.subr.mxu0 0.0
    %123 = vmatpush1.msra.mxu0 0.0
    %124 = vmatprep.subr.mxu0 0.0
    %125 = vmatpush1.msra.mxu0 0.0
    %126 = vmatprep.subr.mxu0 0.0
    %127 = vmatpush1.msra.mxu0 0.0
    %128 = vmatprep.subr.mxu0 0.0
    %129 = vmatpush1.msra.mxu0 0.0
    %130 = vmatprep.subr.mxu0 0.0
    %131 = vmatpush1.msra.mxu0 0.0
    %132 = vmatprep.subr.mxu0 0.0
    %133 = vmatpush1.msra.mxu0 0.0
    %134 = vmatprep.subr.mxu0 0.0
    %135 = vmatpush1.msra.mxu0 0.0
    %136 = vmatprep.subr.mxu0 0.0
    %137 = vmatpush1.msra.mxu0 0.0
    %138 = vmatprep.subr.mxu0 0.0
    %139 = vmatpush1.msra.mxu0 0.0
    %140 = vmatprep.subr.mxu0 0.0
    %141 = vmatpush1.msra.mxu0 0.0
    %142 = vmatprep.subr.mxu0 0.0
    %143 = vmatpush1.msra.mxu0 0.0
    %144 = vmatprep.subr.mxu0 0.0
    %145 = vmatpush1.msra.mxu0 0.0
    %146 = vmatprep.subr.mxu0 0.0
    %147 = vmatpush1.msra.mxu0 0.0
    %148 = vmatprep.subr.mxu0 0.0
    %149 = vmatpush1.msra.mxu0 0.0
    %150 = vmatprep.subr.mxu0 0.0
    %151 = vmatpush1.msra.mxu0 0.0
    %152 = vmatprep.subr.mxu0 0.0
    %153 = vmatpush1.msra.mxu0 0.0
    %154 = vmatprep.mubr.f32.mxu0 0.0
    %155 = vmatmul.mubr.f32.gmra.mrb[0].mxu0 %v67
    %v156 = vpop.f32.mrb[0].mxu0
    %v157 = vadd.f32 %v63, %v156
    %v158 = vpop.f32.mrb[0].mxu0
    %159 = vmatprep.mubr.f32.mxu0 0.0
    %160 = vmatmul.mubr.f32.gmra.mrb[0].mxu0 %v70
    %v161 = vpop.f32.mrb[0].mxu0
    %v162 = vadd.f32 %v63, %v161
    %v163 = vpop.f32.mrb[0].mxu0
    %164 = vmatprep.mubr.f32.mxu0 0.0
    %165 = vmatmul.mubr.f32.gmra.mrb[0].mxu0 %v73
    %v166 = vpop.f32.mrb[0].mxu0
    %v167 = vadd.f32 %v63, %v166
    %v168 = vpop.f32.mrb[0].mxu0
    %169 = vmatprep.mubr.f32.mxu0 0.0
    %170 = vmatmul.mubr.f32.gmra.mrb[0].mxu0 %v76
    %v171 = vpop.f32.mrb[0].mxu0
    %v172 = vadd.f32 %v63, %v171
    %v173 = vpop.f32.mrb[0].mxu0
    %174 = vmatprep.mubr.f32.mxu0 0.0
    %175 = vmatmul.mubr.f32.gmra.mrb[0].mxu0 %v79
    %v176 = vpop.f32.mrb[0].mxu0
    %v177 = vadd.f32 %v63, %v176
    %v178 = vpop.f32.mrb[0].mxu0
    %179 = vmatprep.mubr.f32.mxu0 0.0
    %180 = vmatmul.mubr.f32.gmra.mrb[0].mxu0 %v82
    %v181 = vpop.f32.mrb[0].mxu0
    %v182 = vadd.f32 %v63, %v181
    %v183 = vpop.f32.mrb[0].mxu0
    %184 = vmatprep.mubr.f32.mxu0 0.0
    %185 = vmatmul.mubr.f32.gmra.mrb[0].mxu0 %v85
    %v186 = vpop.f32.mrb[0].mxu0
    %v187 = vadd.f32 %v63, %v186
    %v188 = vpop.f32.mrb[0].mxu0
    %189 = vmatprep.mubr.f32.mxu0 0.0
    %190 = vmatmul.mubr.f32.gmra.mrb[0].mxu0 %v88
    %v191 = vpop.f32.mrb[0].mxu0
    %v192 = vadd.f32 %v63, %v191
    %v193 = vpop.f32.mrb[0].mxu0
    %194 = vdwg.mxu0
    %195 = vst [vmem:[#allocation8] sm:$0xff] %v157
    %196 = vst [vmem:[#allocation8 + $0x8] sm:$0xff] %v162
    %197 = vst [vmem:[#allocation8 + $0x10] sm:$0xff] %v167
    %198 = vst [vmem:[#allocation8 + $0x18] sm:$0xff] %v172
    %199 = vst [vmem:[#allocation8 + $0x20] sm:$0xff] %v177
    %200 = vst [vmem:[#allocation8 + $0x28] sm:$0xff] %v182
    %201 = vst [vmem:[#allocation8 + $0x30] sm:$0xff] %v187
    %202 = vst [vmem:[#allocation8 + $0x38] sm:$0xff] %v192
    %v203 = vld [vmem:[#allocation2] sm:$0xff]
    %v204 = vld [vmem:[#allocation3] sm:$0xff]
    %v205 = vld [vmem:[#allocation4] sm:$0xff]
    %v206 = vld [vmem:[#allocation5] sm:$0xff]
    %v207 = vld [vmem:[#allocation6] sm:$0xff]
    %v208 = vld [vmem:[#allocation7] sm:$0xff]
    %v209 = vld [vmem:[#allocation8] sm:$0xff]
    %v210 = vld [vmem:[%s2] sm:$0xff]
    %v211 = vld [vmem:[%s2 + $0x8] sm:$0xff]
    %v212 = vld [vmem:[%s2 + $0x10] sm:$0xff]
    %v213 = vld [vmem:[%s2 + $0x18] sm:$0xff]
    %vm214 = vcmask 261120
    %v216 = vsel %vm214, %v203, 0
    %218 = vmatprep.subr.mxu0 0.0
    %219 = vmatpush1.msra.mxu0 %v210
    %220 = vmatprep.subr.mxu0 0.0
    %221 = vmatpush1.msra.mxu0 %v211
    %222 = vmatprep.subr.mxu0 0.0
    %223 = vmatpush1.msra.mxu0 %v212
    %224 = vmatprep.subr.mxu0 0.0
    %225 = vmatpush1.msra.mxu0 %v213
    %226 = vmatprep.subr.mxu0 0.0
    %227 = vmatpush1.msra.mxu0 0.0
    %228 = vmatprep.subr.mxu0 0.0
    %229 = vmatpush1.msra.mxu0 0.0
    %230 = vmatprep.subr.mxu0 0.0
    %231 = vmatpush1.msra.mxu0 0.0
    %232 = vmatprep.subr.mxu0 0.0
    %233 = vmatpush1.msra.mxu0 0.0
    %234 = vmatprep.subr.mxu0 0.0
    %235 = vmatpush1.msra.mxu0 0.0
    %236 = vmatprep.subr.mxu0 0.0
    %237 = vmatpush1.msra.mxu0 0.0
    %238 = vmatprep.subr.mxu0 0.0
    %239 = vmatpush1.msra.mxu0 0.0
    %240 = vmatprep.subr.mxu0 0.0
    %241 = vmatpush1.msra.mxu0 0.0
    %242 = vmatprep.subr.mxu0 0.0
    %243 = vmatpush1.msra.mxu0 0.0
    %244 = vmatprep.subr.mxu0 0.0
    %245 = vmatpush1.msra.mxu0 0.0
    %246 = vmatprep.subr.mxu0 0.0
    %247 = vmatpush1.msra.mxu0 0.0
    %248 = vmatprep.subr.mxu0 0.0
    %249 = vmatpush1.msra.mxu0 0.0
    %250 = vmatprep.subr.mxu0 0.0
    %251 = vmatpush1.msra.mxu0 0.0
    %252 = vmatprep.subr.mxu0 0.0
    %253 = vmatpush1.msra.mxu0 0.0
    %254 = vmatprep.subr.mxu0 0.0
    %255 = vmatpush1.msra.mxu0 0.0
    %256 = vmatprep.subr.mxu0 0.0
    %257 = vmatpush1.msra.mxu0 0.0
    %258 = vmatprep.subr.mxu0 0.0
    %259 = vmatpush1.msra.mxu0 0.0
    %260 = vmatprep.subr.mxu0 0.0
    %261 = vmatpush1.msra.mxu0 0.0
    %262 = vmatprep.subr.mxu0 0.0
    %263 = vmatpush1.msra.mxu0 0.0
    %264 = vmatprep.subr.mxu0 0.0
    %265 = vmatpush1.msra.mxu0 0.0
    %266 = vmatprep.subr.mxu0 0.0
    %267 = vmatpush1.msra.mxu0 0.0
    %268 = vmatprep.subr.mxu0 0.0
    %269 = vmatpush1.msra.mxu0 0.0
    %270 = vmatprep.subr.mxu0 0.0
    %271 = vmatpush1.msra.mxu0 0.0
    %272 = vmatprep.subr.mxu0 0.0
    %273 = vmatpush1.msra.mxu0 0.0
    %274 = vmatprep.subr.mxu0 0.0
    %275 = vmatpush1.msra.mxu0 0.0
    %276 = vmatprep.subr.mxu0 0.0
    %277 = vmatpush1.msra.mxu0 0.0
    %278 = vmatprep.subr.mxu0 0.0
    %279 = vmatpush1.msra.mxu0 0.0
    %280 = vmatprep.subr.mxu0 0.0
    %281 = vmatpush1.msra.mxu0 0.0
    %282 = vmatprep.mubr.f32.mxu0 0.0
    %283 = vmatmul.mubr.f32.gmra.mrb[0].mxu0 %v216
    %v284 = vpop.f32.mrb[0].mxu0
    %v285 = vadd.f32 0.0, %v284
    %v286 = vpop.f32.mrb[0].mxu0
    %287 = vdwg.mxu0
    %v288 = vadd.f32 %v209, %v285
    %v289 = vxor.u32 %v288, 2147483648
    %v290 = vmul.f32 %v289, 1.442695
    %v291 = vpow.pop %v290
    %v292 = vadd.f32 %v291, 1.0
    %v293 = vrcp.pop %v292
    %v294 = vmul.f32 1.0, %v293
    %v295 = vtanh.pop %v288
    %297 = vrot.lane.b32.xlu0 %v204, 32
    %v298 = vpop.permute.xlu0 %297
    %v300 = vmul.f32 %v294, %v298
    %302 = vrot.lane.b32.xlu0 %v295, 32
    %v303 = vpop.permute.xlu0 %302
    %v305 = vmul.f32 %v294, %v303
    %307 = vrot.lane.b32.xlu0 %v305, 32
    %v308 = vpop.permute.xlu0 %307
    %v310 = vadd.f32 %v300, %v308
    %v311 = vtanh.pop %v310
    %313 = vrot.lane.b32.xlu0 %v311, 32
    %v314 = vpop.permute.xlu0 %313
    %v316 = vmul.f32 %v294, %v314
    %318 = vrot.lane.b32.xlu0 %v316, 64
    %v319 = vpop.permute.xlu0 %318
    %322 = vrot.lane.b32.xlu0 %v205, 32
    %v323 = vpop.permute.xlu0 %322
    %v325 = vsel %vm214, %v319, %v323
    %v326 = vld [vmem:[%s4] sm:$0xff]
    %v327 = vld [vmem:[%s4 + $0x8] sm:$0xff]
    %v328 = vld [vmem:[%s4 + $0x10] sm:$0xff]
    %v329 = vld [vmem:[%s4 + $0x18] sm:$0xff]
    %v330 = vld [vmem:[%s4 + $0x20] sm:$0xff]
    %v331 = vld [vmem:[%s5] sm:$0x1]
    %v333 = vlaneseq
    %v334 = vshrl.u32 %v333, 7
    %v335 = vsub.s32 0, %v334
    %v336 = vrot.slane %v331, %v335
    %vm338 = vcmask 326656
    %v340 = vsel %vm338, %v325, 0
    %342 = vmatprep.subr.mxu0 0.0
    %343 = vmatpush1.msra.mxu0 %v326
    %344 = vmatprep.subr.mxu0 0.0
    %345 = vmatpush1.msra.mxu0 %v327
    %346 = vmatprep.subr.mxu0 0.0
    %347 = vmatpush1.msra.mxu0 %v328
    %348 = vmatprep.subr.mxu0 0.0
    %349 = vmatpush1.msra.mxu0 %v329
    %350 = vmatprep.subr.mxu0 0.0
    %351 = vmatpush1.msra.mxu0 %v330
    %352 = vmatprep.subr.mxu0 0.0
    %353 = vmatpush1.msra.mxu0 0.0
    %354 = vmatprep.subr.mxu0 0.0
    %355 = vmatpush1.msra.mxu0 0.0
    %356 = vmatprep.subr.mxu0 0.0
    %357 = vmatpush1.msra.mxu0 0.0
    %358 = vmatprep.subr.mxu0 0.0
    %359 = vmatpush1.msra.mxu0 0.0
    %360 = vmatprep.subr.mxu0 0.0
    %361 = vmatpush1.msra.mxu0 0.0
    %362 = vmatprep.subr.mxu0 0.0
    %363 = vmatpush1.msra.mxu0 0.0
    %364 = vmatprep.subr.mxu0 0.0
    %365 = vmatpush1.msra.mxu0 0.0
    %366 = vmatprep.subr.mxu0 0.0
    %367 = vmatpush1.msra.mxu0 0.0
    %368 = vmatprep.subr.mxu0 0.0
    %369 = vmatpush1.msra.mxu0 0.0
    %370 = vmatprep.subr.mxu0 0.0
    %371 = vmatpush1.msra.mxu0 0.0
    %372 = vmatprep.subr.mxu0 0.0
    %373 = vmatpush1.msra.mxu0 0.0
    %374 = vmatprep.subr.mxu0 0.0
    %375 = vmatpush1.msra.mxu0 0.0
    %376 = vmatprep.subr.mxu0 0.0
    %377 = vmatpush1.msra.mxu0 0.0
    %378 = vmatprep.subr.mxu0 0.0
    %379 = vmatpush1.msra.mxu0 0.0
    %380 = vmatprep.subr.mxu0 0.0
    %381 = vmatpush1.msra.mxu0 0.0
    %382 = vmatprep.subr.mxu0 0.0
    %383 = vmatpush1.msra.mxu0 0.0
    %384 = vmatprep.subr.mxu0 0.0
    %385 = vmatpush1.msra.mxu0 0.0
    %386 = vmatprep.subr.mxu0 0.0
    %387 = vmatpush1.msra.mxu0 0.0
    %388 = vmatprep.subr.mxu0 0.0
    %389 = vmatpush1.msra.mxu0 0.0
    %390 = vmatprep.subr.mxu0 0.0
    %391 = vmatpush1.msra.mxu0 0.0
    %392 = vmatprep.subr.mxu0 0.0
    %393 = vmatpush1.msra.mxu0 0.0
    %394 = vmatprep.subr.mxu0 0.0
    %395 = vmatpush1.msra.mxu0 0.0
    %396 = vmatprep.subr.mxu0 0.0
    %397 = vmatpush1.msra.mxu0 0.0
    %398 = vmatprep.subr.mxu0 0.0
    %399 = vmatpush1.msra.mxu0 0.0
    %400 = vmatprep.subr.mxu0 0.0
    %401 = vmatpush1.msra.mxu0 0.0
    %402 = vmatprep.subr.mxu0 0.0
    %403 = vmatpush1.msra.mxu0 0.0
    %404 = vmatprep.subr.mxu0 0.0
    %405 = vmatpush1.msra.mxu0 0.0
    %406 = vmatprep.mubr.f32.mxu0 0.0
    %407 = vmatmul.mubr.f32.gmra.mrb[0].mxu0 %v340
    %v408 = vpop.f32.mrb[0].mxu0
    %v409 = vadd.f32 %v336, %v408
    %v410 = vpop.f32.mrb[0].mxu0
    %411 = vdwg.mxu0
    %v412 = vxor.u32 %v409, 2147483648
    %v413 = vmul.f32 %v412, 1.442695
    %v414 = vpow.pop %v413
    %v415 = vadd.f32 %v414, 1.0
    %v416 = vrcp.pop %v415
    %v417 = vmul.f32 1.0, %v416
    %v418 = vtanh.pop %v409
    %420 = vrot.lane.b32.xlu0 %v206, 8
    %v421 = vpop.permute.xlu0 %420
    %v423 = vmul.f32 %v417, %v421
    %425 = vrot.lane.b32.xlu0 %v418, 104
    %v426 = vpop.permute.xlu0 %425
    %v428 = vmul.f32 %v417, %v426
    %430 = vrot.lane.b32.xlu0 %v428, 8
    %v431 = vpop.permute.xlu0 %430
    %v433 = vadd.f32 %v423, %v431
    %v434 = vtanh.pop %v433
    %436 = vrot.lane.b32.xlu0 %v434, 8
    %v437 = vpop.permute.xlu0 %436
    %v439 = vmul.f32 %v417, %v437
    %441 = vrot.lane.b32.xlu0 %v439, 112
    %v442 = vpop.permute.xlu0 %441
    %445 = vrot.lane.b32.xlu0 %v207, 8
    %v446 = vpop.permute.xlu0 %445
    %vm448 = vcmask 64512
    %v449 = vsel %vm448, %v442, %v446
    %v450 = vld [vmem:[%s6] sm:$0xff]
    %v451 = vld [vmem:[%s6 + $0x8] sm:$0xff]
    %v452 = vld [vmem:[%s6 + $0x10] sm:$0xff]
    %v453 = vld [vmem:[%s6 + $0x18] sm:$0xff]
    %v454 = vld [vmem:[%s6 + $0x20] sm:$0xff]
    %v455 = vld [vmem:[%s7] sm:$0x1]
    %v457 = vlaneseq
    %v458 = vshrl.u32 %v457, 7
    %v459 = vsub.s32 0, %v458
    %v460 = vrot.slane %v455, %v459
    %v463 = vsel %vm338, %v449, 0
    %465 = vmatprep.subr.mxu0 0.0
    %466 = vmatpush1.msra.mxu0 %v450
    %467 = vmatprep.subr.mxu0 0.0
    %468 = vmatpush1.msra.mxu0 %v451
    %469 = vmatprep.subr.mxu0 0.0
    %470 = vmatpush1.msra.mxu0 %v452
    %471 = vmatprep.subr.mxu0 0.0
    %472 = vmatpush1.msra.mxu0 %v453
    %473 = vmatprep.subr.mxu0 0.0
    %474 = vmatpush1.msra.mxu0 %v454
    %475 = vmatprep.subr.mxu0 0.0
    %476 = vmatpush1.msra.mxu0 0.0
    %477 = vmatprep.subr.mxu0 0.0
    %478 = vmatpush1.msra.mxu0 0.0
    %479 = vmatprep.subr.mxu0 0.0
    %480 = vmatpush1.msra.mxu0 0.0
    %481 = vmatprep.subr.mxu0 0.0
    %482 = vmatpush1.msra.mxu0 0.0
    %483 = vmatprep.subr.mxu0 0.0
    %484 = vmatpush1.msra.mxu0 0.0
    %485 = vmatprep.subr.mxu0 0.0
    %486 = vmatpush1.msra.mxu0 0.0
    %487 = vmatprep.subr.mxu0 0.0
    %488 = vmatpush1.msra.mxu0 0.0
    %489 = vmatprep.subr.mxu0 0.0
    %490 = vmatpush1.msra.mxu0 0.0
    %491 = vmatprep.subr.mxu0 0.0
    %492 = vmatpush1.msra.mxu0 0.0
    %493 = vmatprep.subr.mxu0 0.0
    %494 = vmatpush1.msra.mxu0 0.0
    %495 = vmatprep.subr.mxu0 0.0
    %496 = vmatpush1.msra.mxu0 0.0
    %497 = vmatprep.subr.mxu0 0.0
    %498 = vmatpush1.msra.mxu0 0.0
    %499 = vmatprep.subr.mxu0 0.0
    %500 = vmatpush1.msra.mxu0 0.0
    %501 = vmatprep.subr.mxu0 0.0
    %502 = vmatpush1.msra.mxu0 0.0
    %503 = vmatprep.subr.mxu0 0.0
    %504 = vmatpush1.msra.mxu0 0.0
    %505 = vmatprep.subr.mxu0 0.0
    %506 = vmatpush1.msra.mxu0 0.0
    %507 = vmatprep.subr.mxu0 0.0
    %508 = vmatpush1.msra.mxu0 0.0
    %509 = vmatprep.subr.mxu0 0.0
    %510 = vmatpush1.msra.mxu0 0.0
    %511 = vmatprep.subr.mxu0 0.0
    %512 = vmatpush1.msra.mxu0 0.0
    %513 = vmatprep.subr.mxu0 0.0
    %514 = vmatpush1.msra.mxu0 0.0
    %515 = vmatprep.subr.mxu0 0.0
    %516 = vmatpush1.msra.mxu0 0.0
    %517 = vmatprep.subr.mxu0 0.0
    %518 = vmatpush1.msra.mxu0 0.0
    %519 = vmatprep.subr.mxu0 0.0
    %520 = vmatpush1.msra.mxu0 0.0
    %521 = vmatprep.subr.mxu0 0.0
    %522 = vmatpush1.msra.mxu0 0.0
    %523 = vmatprep.subr.mxu0 0.0
    %524 = vmatpush1.msra.mxu0 0.0
    %525 = vmatprep.subr.mxu0 0.0
    %526 = vmatpush1.msra.mxu0 0.0
    %527 = vmatprep.subr.mxu0 0.0
    %528 = vmatpush1.msra.mxu0 0.0
    %529 = vmatprep.mubr.f32.mxu0 0.0
    %530 = vmatmul.mubr.f32.gmra.mrb[0].mxu0 %v463
    %v531 = vpop.f32.mrb[0].mxu0
    %v532 = vadd.f32 %v460, %v531
    %v533 = vpop.f32.mrb[0].mxu0
    %534 = vdwg.mxu0
    %v535 = vxor.u32 %v532, 2147483648
    %v536 = vmul.f32 %v535, 1.442695
    %v537 = vpow.pop %v536
    %v538 = vadd.f32 %v537, 1.0
    %v539 = vrcp.pop %v538
    %v540 = vmul.f32 1.0, %v539
    %v541 = vtanh.pop %v532
    %543 = vrot.lane.b32.xlu0 %v208, 32
    %v544 = vpop.permute.xlu0 %543
    %v546 = vmul.f32 %v540, %v544
    %548 = vrot.lane.b32.xlu0 %v541, 32
    %v549 = vpop.permute.xlu0 %548
    %v551 = vmul.f32 %v540, %v549
    %553 = vrot.lane.b32.xlu0 %v551, 32
    %v554 = vpop.permute.xlu0 %553
    %v556 = vadd.f32 %v546, %v554
    %v557 = vtanh.pop %v556
    %559 = vrot.lane.b32.xlu0 %v557, 32
    %v560 = vpop.permute.xlu0 %559
    %v562 = vmul.f32 %v540, %v560
    %564 = vrot.lane.b32.xlu0 %v562, 64
    %v565 = vpop.permute.xlu0 %564
    %567 = vst.msk [vmem:[#allocation9] sm:$0xff] %vm214, %v565
    %s568 = scalar_lea.vmem [#allocation8], 8
    %v569 = vld [vmem:[%s568] sm:$0xff]
    %v570 = vld [vmem:[%s2] sm:$0xff]
    %v571 = vld [vmem:[%s2 + $0x8] sm:$0xff]
    %v572 = vld [vmem:[%s2 + $0x10] sm:$0xff]
    %v573 = vld [vmem:[%s2 + $0x18] sm:$0xff]
    %v574 = vsel %vm214, %v319, 0
    %576 = vmatprep.subr.mxu0 0.0
    %577 = vmatpush1.msra.mxu0 %v570
    %578 = vmatprep.subr.mxu0 0.0
    %579 = vmatpush1.msra.mxu0 %v571
    %580 = vmatprep.subr.mxu0 0.0
    %581 = vmatpush1.msra.mxu0 %v572
    %582 = vmatprep.subr.mxu0 0.0
    %583 = vmatpush1.msra.mxu0 %v573
    %584 = vmatprep.subr.mxu0 0.0
    %585 = vmatpush1.msra.mxu0 0.0
    %586 = vmatprep.subr.mxu0 0.0
    %587 = vmatpush1.msra.mxu0 0.0
    %588 = vmatprep.subr.mxu0 0.0
    %589 = vmatpush1.msra.mxu0 0.0
    %590 = vmatprep.subr.mxu0 0.0
    %591 = vmatpush1.msra.mxu0 0.0
    %592 = vmatprep.subr.mxu0 0.0
    %593 = vmatpush1.msra.mxu0 0.0
    %594 = vmatprep.subr.mxu0 0.0
    %595 = vmatpush1.msra.mxu0 0.0
    %596 = vmatprep.subr.mxu0 0.0
    %597 = vmatpush1.msra.mxu0 0.0
    %598 = vmatprep.subr.mxu0 0.0
    %599 = vmatpush1.msra.mxu0 0.0
    %600 = vmatprep.subr.mxu0 0.0
    %601 = vmatpush1.msra.mxu0 0.0
    %602 = vmatprep.subr.mxu0 0.0
    %603 = vmatpush1.msra.mxu0 0.0
    %604 = vmatprep.subr.mxu0 0.0
    %605 = vmatpush1.msra.mxu0 0.0
    %606 = vmatprep.subr.mxu0 0.0
    %607 = vmatpush1.msra.mxu0 0.0
    %608 = vmatprep.subr.mxu0 0.0
    %609 = vmatpush1.msra.mxu0 0.0
    %610 = vmatprep.subr.mxu0 0.0
    %611 = vmatpush1.msra.mxu0 0.0
    %612 = vmatprep.subr.mxu0 0.0
    %613 = vmatpush1.msra.mxu0 0.0
    %614 = vmatprep.subr.mxu0 0.0
    %615 = vmatpush1.msra.mxu0 0.0
    %616 = vmatprep.subr.mxu0 0.0
    %617 = vmatpush1.msra.mxu0 0.0
    %618 = vmatprep.subr.mxu0 0.0
    %619 = vmatpush1.msra.mxu0 0.0
    %620 = vmatprep.subr.mxu0 0.0
    %621 = vmatpush1.msra.mxu0 0.0
    %622 = vmatprep.subr.mxu0 0.0
    %623 = vmatpush1.msra.mxu0 0.0
    %624 = vmatprep.subr.mxu0 0.0
    %625 = vmatpush1.msra.mxu0 0.0
    %626 = vmatprep.subr.mxu0 0.0
    %627 = vmatpush1.msra.mxu0 0.0
    %628 = vmatprep.subr.mxu0 0.0
    %629 = vmatpush1.msra.mxu0 0.0
    %630 = vmatprep.subr.mxu0 0.0
    %631 = vmatpush1.msra.mxu0 0.0
    %632 = vmatprep.subr.mxu0 0.0
    %633 = vmatpush1.msra.mxu0 0.0
    %634 = vmatprep.subr.mxu0 0.0
    %635 = vmatpush1.msra.mxu0 0.0
    %636 = vmatprep.subr.mxu0 0.0
    %637 = vmatpush1.msra.mxu0 0.0
    %638 = vmatprep.subr.mxu0 0.0
    %639 = vmatpush1.msra.mxu0 0.0
    %640 = vmatprep.mubr.f32.mxu0 0.0
    %641 = vmatmul.mubr.f32.gmra.mrb[0].mxu0 %v574
    %v642 = vpop.f32.mrb[0].mxu0
    %v643 = vadd.f32 0.0, %v642
    %v644 = vpop.f32.mrb[0].mxu0
    %645 = vdwg.mxu0
    %v646 = vadd.f32 %v569, %v643
    %v647 = vxor.u32 %v646, 2147483648
    %v648 = vmul.f32 %v647, 1.442695
    %v649 = vpow.pop %v648
    %v650 = vadd.f32 %v649, 1.0
    %v651 = vrcp.pop %v650
    %v652 = vmul.f32 1.0, %v651
    %v653 = vtanh.pop %v646
    %v654 = vmul.f32 %v652, %v310
    %656 = vrot.lane.b32.xlu0 %v653, 32
    %v657 = vpop.permute.xlu0 %656
    %v659 = vmul.f32 %v652, %v657
    %661 = vrot.lane.b32.xlu0 %v659, 32
    %v662 = vpop.permute.xlu0 %661
    %v664 = vadd.f32 %v654, %v662
    %v665 = vtanh.pop %v664
    %667 = vrot.lane.b32.xlu0 %v665, 32
    %v668 = vpop.permute.xlu0 %667
    %v670 = vmul.f32 %v652, %v668
    %672 = vrot.lane.b32.xlu0 %v670, 64
    %v673 = vpop.permute.xlu0 %672
    %675 = vrot.lane.b32.xlu0 %v439, 16
    %v676 = vpop.permute.xlu0 %675
    %v678 = vsel %vm214, %v673, %v676
    %v679 = vld [vmem:[%s4] sm:$0xff]
    %v680 = vld [vmem:[%s4 + $0x8] sm:$0xff]
    %v681 = vld [vmem:[%s4 + $0x10] sm:$0xff]
    %v682 = vld [vmem:[%s4 + $0x18] sm:$0xff]
    %v683 = vld [vmem:[%s4 + $0x20] sm:$0xff]
    %v684 = vld [vmem:[%s5] sm:$0x1]
    %v686 = vlaneseq
    %v687 = vshrl.u32 %v686, 7
    %v688 = vsub.s32 0, %v687
    %v689 = vrot.slane %v684, %v688
    %v692 = vsel %vm338, %v678, 0
    %694 = vmatprep.subr.mxu0 0.0
    %695 = vmatpush1.msra.mxu0 %v679
    %696 = vmatprep.subr.mxu0 0.0
    %697 = vmatpush1.msra.mxu0 %v680
    %698 = vmatprep.subr.mxu0 0.0
    %699 = vmatpush1.msra.mxu0 %v681
    %700 = vmatprep.subr.mxu0 0.0
    %701 = vmatpush1.msra.mxu0 %v682
    %702 = vmatprep.subr.mxu0 0.0
    %703 = vmatpush1.msra.mxu0 %v683
    %704 = vmatprep.subr.mxu0 0.0
    %705 = vmatpush1.msra.mxu0 0.0
    %706 = vmatprep.subr.mxu0 0.0
    %707 = vmatpush1.msra.mxu0 0.0
    %708 = vmatprep.subr.mxu0 0.0
    %709 = vmatpush1.msra.mxu0 0.0
    %710 = vmatprep.subr.mxu0 0.0
    %711 = vmatpush1.msra.mxu0 0.0
    %712 = vmatprep.subr.mxu0 0.0
    %713 = vmatpush1.msra.mxu0 0.0
    %714 = vmatprep.subr.mxu0 0.0
    %715 = vmatpush1.msra.mxu0 0.0
    %716 = vmatprep.subr.mxu0 0.0
    %717 = vmatpush1.msra.mxu0 0.0
    %718 = vmatprep.subr.mxu0 0.0
    %719 = vmatpush1.msra.mxu0 0.0
    %720 = vmatprep.subr.mxu0 0.0
    %721 = vmatpush1.msra.mxu0 0.0
    %722 = vmatprep.subr.mxu0 0.0
    %723 = vmatpush1.msra.mxu0 0.0
    %724 = vmatprep.subr.mxu0 0.0
    %725 = vmatpush1.msra.mxu0 0.0
    %726 = vmatprep.subr.mxu0 0.0
    %727 = vmatpush1.msra.mxu0 0.0
    %728 = vmatprep.subr.mxu0 0.0
    %729 = vmatpush1.msra.mxu0 0.0
    %730 = vmatprep.subr.mxu0 0.0
    %731 = vmatpush1.msra.mxu0 0.0
    %732 = vmatprep.subr.mxu0 0.0
    %733 = vmatpush1.msra.mxu0 0.0
    %734 = vmatprep.subr.mxu0 0.0
    %735 = vmatpush1.msra.mxu0 0.0
    %736 = vmatprep.subr.mxu0 0.0
    %737 = vmatpush1.msra.mxu0 0.0
    %738 = vmatprep.subr.mxu0 0.0
    %739 = vmatpush1.msra.mxu0 0.0
    %740 = vmatprep.subr.mxu0 0.0
    %741 = vmatpush1.msra.mxu0 0.0
    %742 = vmatprep.subr.mxu0 0.0
    %743 = vmatpush1.msra.mxu0 0.0
    %744 = vmatprep.subr.mxu0 0.0
    %745 = vmatpush1.msra.mxu0 0.0
    %746 = vmatprep.subr.mxu0 0.0
    %747 = vmatpush1.msra.mxu0 0.0
    %748 = vmatprep.subr.mxu0 0.0
    %749 = vmatpush1.msra.mxu0 0.0
    %750 = vmatprep.subr.mxu0 0.0
    %751 = vmatpush1.msra.mxu0 0.0
    %752 = vmatprep.subr.mxu0 0.0
    %753 = vmatpush1.msra.mxu0 0.0
    %754 = vmatprep.subr.mxu0 0.0
    %755 = vmatpush1.msra.mxu0 0.0
    %756 = vmatprep.subr.mxu0 0.0
    %757 = vmatpush1.msra.mxu0 0.0
    %758 = vmatprep.mubr.f32.mxu0 0.0
    %759 = vmatmul.mubr.f32.gmra.mrb[0].mxu0 %v692
    %v760 = vpop.f32.mrb[0].mxu0
    %v761 = vadd.f32 %v689, %v760
    %v762 = vpop.f32.mrb[0].mxu0
    %763 = vdwg.mxu0
    %v764 = vxor.u32 %v761, 2147483648
    %v765 = vmul.f32 %v764, 1.442695
    %v766 = vpow.pop %v765
    %v767 = vadd.f32 %v766, 1.0
    %v768 = vrcp.pop %v767
    %v769 = vmul.f32 1.0, %v768
    %v770 = vtanh.pop %v761
    %v771 = vmul.f32 %v769, %v433
    %773 = vrot.lane.b32.xlu0 %v770, 104
    %v774 = vpop.permute.xlu0 %773
    %v776 = vmul.f32 %v769, %v774
    %778 = vrot.lane.b32.xlu0 %v776, 8
    %v779 = vpop.permute.xlu0 %778
    %v781 = vadd.f32 %v771, %v779
    %v782 = vtanh.pop %v781
    %784 = vrot.lane.b32.xlu0 %v782, 8
    %v785 = vpop.permute.xlu0 %784
    %v787 = vmul.f32 %v769, %v785
    %789 = vrot.lane.b32.xlu0 %v787, 112
    %v790 = vpop.permute.xlu0 %789
    %792 = vrot.lane.b32.xlu0 %v562, 72
    %v793 = vpop.permute.xlu0 %792
    %v795 = vsel %vm448, %v790, %v793
    %v796 = vld [vmem:[%s6] sm:$0xff]
    %v797 = vld [vmem:[%s6 + $0x8] sm:$0xff]
    %v798 = vld [vmem:[%s6 + $0x10] sm:$0xff]
    %v799 = vld [vmem:[%s6 + $0x18] sm:$0xff]
    %v800 = vld [vmem:[%s6 + $0x20] sm:$0xff]
    %v801 = vld [vmem:[%s7] sm:$0x1]
    %v803 = vlaneseq
    %v804 = vshrl.u32 %v803, 7
    %v805 = vsub.s32 0, %v804
    %v806 = vrot.slane %v801, %v805
    %v809 = vsel %vm338, %v795, 0
    %811 = vmatprep.subr.mxu0 0.0
    %812 = vmatpush1.msra.mxu0 %v796
    %813 = vmatprep.subr.mxu0 0.0
    %814 = vmatpush1.msra.mxu0 %v797
    %815 = vmatprep.subr.mxu0 0.0
    %816 = vmatpush1.msra.mxu0 %v798
    %817 = vmatprep.subr.mxu0 0.0
    %818 = vmatpush1.msra.mxu0 %v799
    %819 = vmatprep.subr.mxu0 0.0
    %820 = vmatpush1.msra.mxu0 %v800
    %821 = vmatprep.subr.mxu0 0.0
    %822 = vmatpush1.msra.mxu0 0.0
    %823 = vmatprep.subr.mxu0 0.0
    %824 = vmatpush1.msra.mxu0 0.0
    %825 = vmatprep.subr.mxu0 0.0
    %826 = vmatpush1.msra.mxu0 0.0
    %827 = vmatprep.subr.mxu0 0.0
    %828 = vmatpush1.msra.mxu0 0.0
    %829 = vmatprep.subr.mxu0 0.0
    %830 = vmatpush1.msra.mxu0 0.0
    %831 = vmatprep.subr.mxu0 0.0
    %832 = vmatpush1.msra.mxu0 0.0
    %833 = vmatprep.subr.mxu0 0.0
    %834 = vmatpush1.msra.mxu0 0.0
    %835 = vmatprep.subr.mxu0 0.0
    %836 = vmatpush1.msra.mxu0 0.0
    %837 = vmatprep.subr.mxu0 0.0
    %838 = vmatpush1.msra.mxu0 0.0
    %839 = vmatprep.subr.mxu0 0.0
    %840 = vmatpush1.msra.mxu0 0.0
    %841 = vmatprep.subr.mxu0 0.0
    %842 = vmatpush1.msra.mxu0 0.0
    %843 = vmatprep.subr.mxu0 0.0
    %844 = vmatpush1.msra.mxu0 0.0
    %845 = vmatprep.subr.mxu0 0.0
    %846 = vmatpush1.msra.mxu0 0.0
    %847 = vmatprep.subr.mxu0 0.0
    %848 = vmatpush1.msra.mxu0 0.0
    %849 = vmatprep.subr.mxu0 0.0
    %850 = vmatpush1.msra.mxu0 0.0
    %851 = vmatprep.subr.mxu0 0.0
    %852 = vmatpush1.msra.mxu0 0.0
    %853 = vmatprep.subr.mxu0 0.0
    %854 = vmatpush1.msra.mxu0 0.0
    %855 = vmatprep.subr.mxu0 0.0
    %856 = vmatpush1.msra.mxu0 0.0
    %857 = vmatprep.subr.mxu0 0.0
    %858 = vmatpush1.msra.mxu0 0.0
    %859 = vmatprep.subr.mxu0 0.0
    %860 = vmatpush1.msra.mxu0 0.0
    %861 = vmatprep.subr.mxu0 0.0
    %862 = vmatpush1.msra.mxu0 0.0
    %863 = vmatprep.subr.mxu0 0.0
    %864 = vmatpush1.msra.mxu0 0.0
    %865 = vmatprep.subr.mxu0 0.0
    %866 = vmatpush1.msra.mxu0 0.0
    %867 = vmatprep.subr.mxu0 0.0
    %868 = vmatpush1.msra.mxu0 0.0
    %869 = vmatprep.subr.mxu0 0.0
    %870 = vmatpush1.msra.mxu0 0.0
    %871 = vmatprep.subr.mxu0 0.0
    %872 = vmatpush1.msra.mxu0 0.0
    %873 = vmatprep.subr.mxu0 0.0
    %874 = vmatpush1.msra.mxu0 0.0
    %875 = vmatprep.mubr.f32.mxu0 0.0
    %876 = vmatmul.mubr.f32.gmra.mrb[0].mxu0 %v809
    %v877 = vpop.f32.mrb[0].mxu0
    %v878 = vadd.f32 %v806, %v877
    %v879 = vpop.f32.mrb[0].mxu0
    %880 = vdwg.mxu0
    %v881 = vxor.u32 %v878, 2147483648
    %v882 = vmul.f32 %v881, 1.442695
    %v883 = vpow.pop %v882
    %v884 = vadd.f32 %v883, 1.0
    %v885 = vrcp.pop %v884
    %v886 = vmul.f32 1.0, %v885
    %v887 = vtanh.pop %v878
    %v888 = vmul.f32 %v886, %v556
    %890 = vrot.lane.b32.xlu0 %v887, 32
    %v891 = vpop.permute.xlu0 %890
    %v893 = vmul.f32 %v886, %v891
    %895 = vrot.lane.b32.xlu0 %v893, 32
    %v896 = vpop.permute.xlu0 %895
    %v898 = vadd.f32 %v888, %v896
    %v899 = vtanh.pop %v898
    %901 = vrot.lane.b32.xlu0 %v899, 32
    %v902 = vpop.permute.xlu0 %901
    %v904 = vmul.f32 %v886, %v902
    %906 = vrot.lane.b32.xlu0 %v904, 64
    %v907 = vpop.permute.xlu0 %906
    %s909 = scalar_lea.vmem [#allocation9], 8
    %910 = vst.msk [vmem:[%s909] sm:$0xff] %vm214, %v907
    %s911 = scalar_lea.vmem [#allocation8], 16
    %v912 = vld [vmem:[%s911] sm:$0xff]
    %v913 = vld [vmem:[%s2] sm:$0xff]
    %v914 = vld [vmem:[%s2 + $0x8] sm:$0xff]
    %v915 = vld [vmem:[%s2 + $0x10] sm:$0xff]
    %v916 = vld [vmem:[%s2 + $0x18] sm:$0xff]
    %v917 = vsel %vm214, %v673, 0
    %919 = vmatprep.subr.mxu0 0.0
    %920 = vmatpush1.msra.mxu0 %v913
    %921 = vmatprep.subr.mxu0 0.0
    %922 = vmatpush1.msra.mxu0 %v914
    %923 = vmatprep.subr.mxu0 0.0
    %924 = vmatpush1.msra.mxu0 %v915
    %925 = vmatprep.subr.mxu0 0.0
    %926 = vmatpush1.msra.mxu0 %v916
    %927 = vmatprep.subr.mxu0 0.0
    %928 = vmatpush1.msra.mxu0 0.0
    %929 = vmatprep.subr.mxu0 0.0
    %930 = vmatpush1.msra.mxu0 0.0
    %931 = vmatprep.subr.mxu0 0.0
    %932 = vmatpush1.msra.mxu0 0.0
    %933 = vmatprep.subr.mxu0 0.0
    %934 = vmatpush1.msra.mxu0 0.0
    %935 = vmatprep.subr.mxu0 0.0
    %936 = vmatpush1.msra.mxu0 0.0
    %937 = vmatprep.subr.mxu0 0.0
    %938 = vmatpush1.msra.mxu0 0.0
    %939 = vmatprep.subr.mxu0 0.0
    %940 = vmatpush1.msra.mxu0 0.0
    %941 = vmatprep.subr.mxu0 0.0
    %942 = vmatpush1.msra.mxu0 0.0
    %943 = vmatprep.subr.mxu0 0.0
    %944 = vmatpush1.msra.mxu0 0.0
    %945 = vmatprep.subr.mxu0 0.0
    %946 = vmatpush1.msra.mxu0 0.0
    %947 = vmatprep.subr.mxu0 0.0
    %948 = vmatpush1.msra.mxu0 0.0
    %949 = vmatprep.subr.mxu0 0.0
    %950 = vmatpush1.msra.mxu0 0.0
    %951 = vmatprep.subr.mxu0 0.0
    %952 = vmatpush1.msra.mxu0 0.0
    %953 = vmatprep.subr.mxu0 0.0
    %954 = vmatpush1.msra.mxu0 0.0
    %955 = vmatprep.subr.mxu0 0.0
    %956 = vmatpush1.msra.mxu0 0.0
    %957 = vmatprep.subr.mxu0 0.0
    %958 = vmatpush1.msra.mxu0 0.0
    %959 = vmatprep.subr.mxu0 0.0
    %960 = vmatpush1.msra.mxu0 0.0
    %961 = vmatprep.subr.mxu0 0.0
    %962 = vmatpush1.msra.mxu0 0.0
    %963 = vmatprep.subr.mxu0 0.0
    %964 = vmatpush1.msra.mxu0 0.0
    %965 = vmatprep.subr.mxu0 0.0
    %966 = vmatpush1.msra.mxu0 0.0
    %967 = vmatprep.subr.mxu0 0.0
    %968 = vmatpush1.msra.mxu0 0.0
    %969 = vmatprep.subr.mxu0 0.0
    %970 = vmatpush1.msra.mxu0 0.0
    %971 = vmatprep.subr.mxu0 0.0
    %972 = vmatpush1.msra.mxu0 0.0
    %973 = vmatprep.subr.mxu0 0.0
    %974 = vmatpush1.msra.mxu0 0.0
    %975 = vmatprep.subr.mxu0 0.0
    %976 = vmatpush1.msra.mxu0 0.0
    %977 = vmatprep.subr.mxu0 0.0
    %978 = vmatpush1.msra.mxu0 0.0
    %979 = vmatprep.subr.mxu0 0.0
    %980 = vmatpush1.msra.mxu0 0.0
    %981 = vmatprep.subr.mxu0 0.0
    %982 = vmatpush1.msra.mxu0 0.0
    %983 = vmatprep.mubr.f32.mxu0 0.0
    %984 = vmatmul.mubr.f32.gmra.mrb[0].mxu0 %v917
    %v985 = vpop.f32.mrb[0].mxu0
    %v986 = vadd.f32 0.0, %v985
    %v987 = vpop.f32.mrb[0].mxu0
    %988 = vdwg.mxu0
    %v989 = vadd.f32 %v912, %v986
    %v990 = vxor.u32 %v989, 2147483648
    %v991 = vmul.f32 %v990, 1.442695
    %v992 = vpow.pop %v991
    %v993 = vadd.f32 %v992, 1.0
    %v994 = vrcp.pop %v993
    %v995 = vmul.f32 1.0, %v994
    %v996 = vtanh.pop %v989
    %v997 = vmul.f32 %v995, %v664
    %999 = vrot.lane.b32.xlu0 %v996, 32
    %v1000 = vpop.permute.xlu0 %999
    %v1002 = vmul.f32 %v995, %v1000
    %1004 = vrot.lane.b32.xlu0 %v1002, 32
    %v1005 = vpop.permute.xlu0 %1004
    %v1007 = vadd.f32 %v997, %v1005
    %v1008 = vtanh.pop %v1007
    %1010 = vrot.lane.b32.xlu0 %v1008, 32
    %v1011 = vpop.permute.xlu0 %1010
    %v1013 = vmul.f32 %v995, %v1011
    %1015 = vrot.lane.b32.xlu0 %v1013, 64
    %v1016 = vpop.permute.xlu0 %1015
    %1018 = vrot.lane.b32.xlu0 %v787, 16
    %v1019 = vpop.permute.xlu0 %1018
    %v1021 = vsel %vm214, %v1016, %v1019
    %v1022 = vld [vmem:[%s4] sm:$0xff]
    %v1023 = vld [vmem:[%s4 + $0x8] sm:$0xff]
    %v1024 = vld [vmem:[%s4 + $0x10] sm:$0xff]
    %v1025 = vld [vmem:[%s4 + $0x18] sm:$0xff]
    %v1026 = vld [vmem:[%s4 + $0x20] sm:$0xff]
    %v1027 = vld [vmem:[%s5] sm:$0x1]
    %v1029 = vlaneseq
    %v1030 = vshrl.u32 %v1029, 7
    %v1031 = vsub.s32 0, %v1030
    %v1032 = vrot.slane %v1027, %v1031
    %v1035 = vsel %vm338, %v1021, 0
    %1037 = vmatprep.subr.mxu0 0.0
    %1038 = vmatpush1.msra.mxu0 %v1022
    %1039 = vmatprep.subr.mxu0 0.0
    %1040 = vmatpush1.msra.mxu0 %v1023
    %1041 = vmatprep.subr.mxu0 0.0
    %1042 = vmatpush1.msra.mxu0 %v1024
    %1043 = vmatprep.subr.mxu0 0.0
    %1044 = vmatpush1.msra.mxu0 %v1025
    %1045 = vmatprep.subr.mxu0 0.0
    %1046 = vmatpush1.msra.mxu0 %v1026
    %1047 = vmatprep.subr.mxu0 0.0
    %1048 = vmatpush1.msra.mxu0 0.0
    %1049 = vmatprep.subr.mxu0 0.0
    %1050 = vmatpush1.msra.mxu0 0.0
    %1051 = vmatprep.subr.mxu0 0.0
    %1052 = vmatpush1.msra.mxu0 0.0
    %1053 = vmatprep.subr.mxu0 0.0
    %1054 = vmatpush1.msra.mxu0 0.0
    %1055 = vmatprep.subr.mxu0 0.0
    %1056 = vmatpush1.msra.mxu0 0.0
    %1057 = vmatprep.subr.mxu0 0.0
    %1058 = vmatpush1.msra.mxu0 0.0
    %1059 = vmatprep.subr.mxu0 0.0
    %1060 = vmatpush1.msra.mxu0 0.0
    %1061 = vmatprep.subr.mxu0 0.0
    %1062 = vmatpush1.msra.mxu0 0.0
    %1063 = vmatprep.subr.mxu0 0.0
    %1064 = vmatpush1.msra.mxu0 0.0
    %1065 = vmatprep.subr.mxu0 0.0
    %1066 = vmatpush1.msra.mxu0 0.0
    %1067 = vmatprep.subr.mxu0 0.0
    %1068 = vmatpush1.msra.mxu0 0.0
    %1069 = vmatprep.subr.mxu0 0.0
    %1070 = vmatpush1.msra.mxu0 0.0
    %1071 = vmatprep.subr.mxu0 0.0
    %1072 = vmatpush1.msra.mxu0 0.0
    %1073 = vmatprep.subr.mxu0 0.0
    %1074 = vmatpush1.msra.mxu0 0.0
    %1075 = vmatprep.subr.mxu0 0.0
    %1076 = vmatpush1.msra.mxu0 0.0
    %1077 = vmatprep.subr.mxu0 0.0
    %1078 = vmatpush1.msra.mxu0 0.0
    %1079 = vmatprep.subr.mxu0 0.0
    %1080 = vmatpush1.msra.mxu0 0.0
    %1081 = vmatprep.subr.mxu0 0.0
    %1082 = vmatpush1.msra.mxu0 0.0
    %1083 = vmatprep.subr.mxu0 0.0
    %1084 = vmatpush1.msra.mxu0 0.0
    %1085 = vmatprep.subr.mxu0 0.0
    %1086 = vmatpush1.msra.mxu0 0.0
    %1087 = vmatprep.subr.mxu0 0.0
    %1088 = vmatpush1.msra.mxu0 0.0
    %1089 = vmatprep.subr.mxu0 0.0
    %1090 = vmatpush1.msra.mxu0 0.0
    %1091 = vmatprep.subr.mxu0 0.0
    %1092 = vmatpush1.msra.mxu0 0.0
    %1093 = vmatprep.subr.mxu0 0.0
    %1094 = vmatpush1.msra.mxu0 0.0
    %1095 = vmatprep.subr.mxu0 0.0
    %1096 = vmatpush1.msra.mxu0 0.0
    %1097 = vmatprep.subr.mxu0 0.0
    %1098 = vmatpush1.msra.mxu0 0.0
    %1099 = vmatprep.subr.mxu0 0.0
    %1100 = vmatpush1.msra.mxu0 0.0
    %1101 = vmatprep.mubr.f32.mxu0 0.0
    %1102 = vmatmul.mubr.f32.gmra.mrb[0].mxu0 %v1035
    %v1103 = vpop.f32.mrb[0].mxu0
    %v1104 = vadd.f32 %v1032, %v1103
    %v1105 = vpop.f32.mrb[0].mxu0
    %1106 = vdwg.mxu0
    %v1107 = vxor.u32 %v1104, 2147483648
    %v1108 = vmul.f32 %v1107, 1.442695
    %v1109 = vpow.pop %v1108
    %v1110 = vadd.f32 %v1109, 1.0
    %v1111 = vrcp.pop %v1110
    %v1112 = vmul.f32 1.0, %v1111
    %v1113 = vtanh.pop %v1104
    %v1114 = vmul.f32 %v1112, %v781
    %1116 = vrot.lane.b32.xlu0 %v1113, 104
    %v1117 = vpop.permute.xlu0 %1116
    %v1119 = vmul.f32 %v1112, %v1117
    %1121 = vrot.lane.b32.xlu0 %v1119, 8
    %v1122 = vpop.permute.xlu0 %1121
    %v1124 = vadd.f32 %v1114, %v1122
    %v1125 = vtanh.pop %v1124
    %1127 = vrot.lane.b32.xlu0 %v1125, 8
    %v1128 = vpop.permute.xlu0 %1127
    %v1130 = vmul.f32 %v1112, %v1128
    %1132 = vrot.lane.b32.xlu0 %v1130, 112
    %v1133 = vpop.permute.xlu0 %1132
    %1135 = vrot.lane.b32.xlu0 %v904, 72
    %v1136 = vpop.permute.xlu0 %1135
    %v1138 = vsel %vm448, %v1133, %v1136
    %v1139 = vld [vmem:[%s6] sm:$0xff]
    %v1140 = vld [vmem:[%s6 + $0x8] sm:$0xff]
    %v1141 = vld [vmem:[%s6 + $0x10] sm:$0xff]
    %v1142 = vld [vmem:[%s6 + $0x18] sm:$0xff]
    %v1143 = vld [vmem:[%s6 + $0x20] sm:$0xff]
    %v1144 = vld [vmem:[%s7] sm:$0x1]
    %v1146 = vlaneseq
    %v1147 = vshrl.u32 %v1146, 7
    %v1148 = vsub.s32 0, %v1147
    %v1149 = vrot.slane %v1144, %v1148
    %v1152 = vsel %vm338, %v1138, 0
    %1154 = vmatprep.subr.mxu0 0.0
    %1155 = vmatpush1.msra.mxu0 %v1139
    %1156 = vmatprep.subr.mxu0 0.0
    %1157 = vmatpush1.msra.mxu0 %v1140
    %1158 = vmatprep.subr.mxu0 0.0
    %1159 = vmatpush1.msra.mxu0 %v1141
    %1160 = vmatprep.subr.mxu0 0.0
    %1161 = vmatpush1.msra.mxu0 %v1142
    %1162 = vmatprep.subr.mxu0 0.0
    %1163 = vmatpush1.msra.mxu0 %v1143
    %1164 = vmatprep.subr.mxu0 0.0
    %1165 = vmatpush1.msra.mxu0 0.0
    %1166 = vmatprep.subr.mxu0 0.0
    %1167 = vmatpush1.msra.mxu0 0.0
    %1168 = vmatprep.subr.mxu0 0.0
    %1169 = vmatpush1.msra.mxu0 0.0
    %1170 = vmatprep.subr.mxu0 0.0
    %1171 = vmatpush1.msra.mxu0 0.0
    %1172 = vmatprep.subr.mxu0 0.0
    %1173 = vmatpush1.msra.mxu0 0.0
    %1174 = vmatprep.subr.mxu0 0.0
    %1175 = vmatpush1.msra.mxu0 0.0
    %1176 = vmatprep.subr.mxu0 0.0
    %1177 = vmatpush1.msra.mxu0 0.0
    %1178 = vmatprep.subr.mxu0 0.0
    %1179 = vmatpush1.msra.mxu0 0.0
    %1180 = vmatprep.subr.mxu0 0.0
    %1181 = vmatpush1.msra.mxu0 0.0
    %1182 = vmatprep.subr.mxu0 0.0
    %1183 = vmatpush1.msra.mxu0 0.0
    %1184 = vmatprep.subr.mxu0 0.0
    %1185 = vmatpush1.msra.mxu0 0.0
    %1186 = vmatprep.subr.mxu0 0.0
    %1187 = vmatpush1.msra.mxu0 0.0
    %1188 = vmatprep.subr.mxu0 0.0
    %1189 = vmatpush1.msra.mxu0 0.0
    %1190 = vmatprep.subr.mxu0 0.0
    %1191 = vmatpush1.msra.mxu0 0.0
    %1192 = vmatprep.subr.mxu0 0.0
    %1193 = vmatpush1.msra.mxu0 0.0
    %1194 = vmatprep.subr.mxu0 0.0
    %1195 = vmatpush1.msra.mxu0 0.0
    %1196 = vmatprep.subr.mxu0 0.0
    %1197 = vmatpush1.msra.mxu0 0.0
    %1198 = vmatprep.subr.mxu0 0.0
    %1199 = vmatpush1.msra.mxu0 0.0
    %1200 = vmatprep.subr.mxu0 0.0
    %1201 = vmatpush1.msra.mxu0 0.0
    %1202 = vmatprep.subr.mxu0 0.0
    %1203 = vmatpush1.msra.mxu0 0.0
    %1204 = vmatprep.subr.mxu0 0.0
    %1205 = vmatpush1.msra.mxu0 0.0
    %1206 = vmatprep.subr.mxu0 0.0
    %1207 = vmatpush1.msra.mxu0 0.0
    %1208 = vmatprep.subr.mxu0 0.0
    %1209 = vmatpush1.msra.mxu0 0.0
    %1210 = vmatprep.subr.mxu0 0.0
    %1211 = vmatpush1.msra.mxu0 0.0
    %1212 = vmatprep.subr.mxu0 0.0
    %1213 = vmatpush1.msra.mxu0 0.0
    %1214 = vmatprep.subr.mxu0 0.0
    %1215 = vmatpush1.msra.mxu0 0.0
    %1216 = vmatprep.subr.mxu0 0.0
    %1217 = vmatpush1.msra.mxu0 0.0
    %1218 = vmatprep.mubr.f32.mxu0 0.0
    %1219 = vmatmul.mubr.f32.gmra.mrb[0].mxu0 %v1152
    %v1220 = vpop.f32.mrb[0].mxu0
    %v1221 = vadd.f32 %v1149, %v1220
    %v1222 = vpop.f32.mrb[0].mxu0
    %1223 = vdwg.mxu0
    %v1224 = vxor.u32 %v1221, 2147483648
    %v1225 = vmul.f32 %v1224, 1.442695
    %v1226 = vpow.pop %v1225
    %v1227 = vadd.f32 %v1226, 1.0
    %v1228 = vrcp.pop %v1227
    %v1229 = vmul.f32 1.0, %v1228
    %v1230 = vtanh.pop %v1221
    %v1231 = vmul.f32 %v1229, %v898
    %1233 = vrot.lane.b32.xlu0 %v1230, 32
    %v1234 = vpop.permute.xlu0 %1233
    %v1236 = vmul.f32 %v1229, %v1234
    %1238 = vrot.lane.b32.xlu0 %v1236, 32
    %v1239 = vpop.permute.xlu0 %1238
    %v1241 = vadd.f32 %v1231, %v1239
    %v1242 = vtanh.pop %v1241
    %1244 = vrot.lane.b32.xlu0 %v1242, 32
    %v1245 = vpop.permute.xlu0 %1244
    %v1247 = vmul.f32 %v1229, %v1245
    %1249 = vrot.lane.b32.xlu0 %v1247, 64
    %v1250 = vpop.permute.xlu0 %1249
    %s1252 = scalar_lea.vmem [#allocation9], 16
    %1253 = vst.msk [vmem:[%s1252] sm:$0xff] %vm214, %v1250
    %s1254 = scalar_lea.vmem [#allocation8], 24
    %v1255 = vld [vmem:[%s1254] sm:$0xff]
    %v1256 = vld [vmem:[%s2] sm:$0xff]
    %v1257 = vld [vmem:[%s2 + $0x8] sm:$0xff]
    %v1258 = vld [vmem:[%s2 + $0x10] sm:$0xff]
    %v1259 = vld [vmem:[%s2 + $0x18] sm:$0xff]
    %v1260 = vsel %vm214, %v1016, 0
    %1262 = vmatprep.subr.mxu0 0.0
    %1263 = vmatpush1.msra.mxu0 %v1256
    %1264 = vmatprep.subr.mxu0 0.0
    %1265 = vmatpush1.msra.mxu0 %v1257
    %1266 = vmatprep.subr.mxu0 0.0
    %1267 = vmatpush1.msra.mxu0 %v1258
    %1268 = vmatprep.subr.mxu0 0.0
    %1269 = vmatpush1.msra.mxu0 %v1259
    %1270 = vmatprep.subr.mxu0 0.0
    %1271 = vmatpush1.msra.mxu0 0.0
    %1272 = vmatprep.subr.mxu0 0.0
    %1273 = vmatpush1.msra.mxu0 0.0
    %1274 = vmatprep.subr.mxu0 0.0
    %1275 = vmatpush1.msra.mxu0 0.0
    %1276 = vmatprep.subr.mxu0 0.0
    %1277 = vmatpush1.msra.mxu0 0.0
    %1278 = vmatprep.subr.mxu0 0.0
    %1279 = vmatpush1.msra.mxu0 0.0
    %1280 = vmatprep.subr.mxu0 0.0
    %1281 = vmatpush1.msra.mxu0 0.0
    %1282 = vmatprep.subr.mxu0 0.0
    %1283 = vmatpush1.msra.mxu0 0.0
    %1284 = vmatprep.subr.mxu0 0.0
    %1285 = vmatpush1.msra.mxu0 0.0
    %1286 = vmatprep.subr.mxu0 0.0
    %1287 = vmatpush1.msra.mxu0 0.0
    %1288 = vmatprep.subr.mxu0 0.0
    %1289 = vmatpush1.msra.mxu0 0.0
    %1290 = vmatprep.subr.mxu0 0.0
    %1291 = vmatpush1.msra.mxu0 0.0
    %1292 = vmatprep.subr.mxu0 0.0
    %1293 = vmatpush1.msra.mxu0 0.0
    %1294 = vmatprep.subr.mxu0 0.0
    %1295 = vmatpush1.msra.mxu0 0.0
    %1296 = vmatprep.subr.mxu0 0.0
    %1297 = vmatpush1.msra.mxu0 0.0
    %1298 = vmatprep.subr.mxu0 0.0
    %1299 = vmatpush1.msra.mxu0 0.0
    %1300 = vmatprep.subr.mxu0 0.0
    %1301 = vmatpush1.msra.mxu0 0.0
    %1302 = vmatprep.subr.mxu0 0.0
    %1303 = vmatpush1.msra.mxu0 0.0
    %1304 = vmatprep.subr.mxu0 0.0
    %1305 = vmatpush1.msra.mxu0 0.0
    %1306 = vmatprep.subr.mxu0 0.0
    %1307 = vmatpush1.msra.mxu0 0.0
    %1308 = vmatprep.subr.mxu0 0.0
    %1309 = vmatpush1.msra.mxu0 0.0
    %1310 = vmatprep.subr.mxu0 0.0
    %1311 = vmatpush1.msra.mxu0 0.0
    %1312 = vmatprep.subr.mxu0 0.0
    %1313 = vmatpush1.msra.mxu0 0.0
    %1314 = vmatprep.subr.mxu0 0.0
    %1315 = vmatpush1.msra.mxu0 0.0
    %1316 = vmatprep.subr.mxu0 0.0
    %1317 = vmatpush1.msra.mxu0 0.0
    %1318 = vmatprep.subr.mxu0 0.0
    %1319 = vmatpush1.msra.mxu0 0.0
    %1320 = vmatprep.subr.mxu0 0.0
    %1321 = vmatpush1.msra.mxu0 0.0
    %1322 = vmatprep.subr.mxu0 0.0
    %1323 = vmatpush1.msra.mxu0 0.0
    %1324 = vmatprep.subr.mxu0 0.0
    %1325 = vmatpush1.msra.mxu0 0.0
    %1326 = vmatprep.mubr.f32.mxu0 0.0
    %1327 = vmatmul.mubr.f32.gmra.mrb[0].mxu0 %v1260
    %v1328 = vpop.f32.mrb[0].mxu0
    %v1329 = vadd.f32 0.0, %v1328
    %v1330 = vpop.f32.mrb[0].mxu0
    %1331 = vdwg.mxu0
    %v1332 = vadd.f32 %v1255, %v1329
    %v1333 = vxor.u32 %v1332, 2147483648
    %v1334 = vmul.f32 %v1333, 1.442695
    %v1335 = vpow.pop %v1334
    %v1336 = vadd.f32 %v1335, 1.0
    %v1337 = vrcp.pop %v1336
    %v1338 = vmul.f32 1.0, %v1337
    %v1339 = vtanh.pop %v1332
    %v1340 = vmul.f32 %v1338, %v1007
    %1342 = vrot.lane.b32.xlu0 %v1339, 32
    %v1343 = vpop.permute.xlu0 %1342
    %v1345 = vmul.f32 %v1338, %v1343
    %1347 = vrot.lane.b32.xlu0 %v1345, 32
    %v1348 = vpop.permute.xlu0 %1347
    %v1350 = vadd.f32 %v1340, %v1348
    %v1351 = vtanh.pop %v1350
    %1353 = vrot.lane.b32.xlu0 %v1351, 32
    %v1354 = vpop.permute.xlu0 %1353
    %v1356 = vmul.f32 %v1338, %v1354
    %1358 = vrot.lane.b32.xlu0 %v1356, 64
    %v1359 = vpop.permute.xlu0 %1358
    %1361 = vrot.lane.b32.xlu0 %v1130, 16
    %v1362 = vpop.permute.xlu0 %1361
    %v1364 = vsel %vm214, %v1359, %v1362
    %v1365 = vld [vmem:[%s4] sm:$0xff]
    %v1366 = vld [vmem:[%s4 + $0x8] sm:$0xff]
    %v1367 = vld [vmem:[%s4 + $0x10] sm:$0xff]
    %v1368 = vld [vmem:[%s4 + $0x18] sm:$0xff]
    %v1369 = vld [vmem:[%s4 + $0x20] sm:$0xff]
    %v1370 = vld [vmem:[%s5] sm:$0x1]
    %v1372 = vlaneseq
    %v1373 = vshrl.u32 %v1372, 7
    %v1374 = vsub.s32 0, %v1373
    %v1375 = vrot.slane %v1370, %v1374
    %v1378 = vsel %vm338, %v1364, 0
    %1380 = vmatprep.subr.mxu0 0.0
    %1381 = vmatpush1.msra.mxu0 %v1365
    %1382 = vmatprep.subr.mxu0 0.0
    %1383 = vmatpush1.msra.mxu0 %v1366
    %1384 = vmatprep.subr.mxu0 0.0
    %1385 = vmatpush1.msra.mxu0 %v1367
    %1386 = vmatprep.subr.mxu0 0.0
    %1387 = vmatpush1.msra.mxu0 %v1368
    %1388 = vmatprep.subr.mxu0 0.0
    %1389 = vmatpush1.msra.mxu0 %v1369
    %1390 = vmatprep.subr.mxu0 0.0
    %1391 = vmatpush1.msra.mxu0 0.0
    %1392 = vmatprep.subr.mxu0 0.0
    %1393 = vmatpush1.msra.mxu0 0.0
    %1394 = vmatprep.subr.mxu0 0.0
    %1395 = vmatpush1.msra.mxu0 0.0
    %1396 = vmatprep.subr.mxu0 0.0
    %1397 = vmatpush1.msra.mxu0 0.0
    %1398 = vmatprep.subr.mxu0 0.0
    %1399 = vmatpush1.msra.mxu0 0.0
    %1400 = vmatprep.subr.mxu0 0.0
    %1401 = vmatpush1.msra.mxu0 0.0
    %1402 = vmatprep.subr.mxu0 0.0
    %1403 = vmatpush1.msra.mxu0 0.0
    %1404 = vmatprep.subr.mxu0 0.0
    %1405 = vmatpush1.msra.mxu0 0.0
    %1406 = vmatprep.subr.mxu0 0.0
    %1407 = vmatpush1.msra.mxu0 0.0
    %1408 = vmatprep.subr.mxu0 0.0
    %1409 = vmatpush1.msra.mxu0 0.0
    %1410 = vmatprep.subr.mxu0 0.0
    %1411 = vmatpush1.msra.mxu0 0.0
    %1412 = vmatprep.subr.mxu0 0.0
    %1413 = vmatpush1.msra.mxu0 0.0
    %1414 = vmatprep.subr.mxu0 0.0
    %1415 = vmatpush1.msra.mxu0 0.0
    %1416 = vmatprep.subr.mxu0 0.0
    %1417 = vmatpush1.msra.mxu0 0.0
    %1418 = vmatprep.subr.mxu0 0.0
    %1419 = vmatpush1.msra.mxu0 0.0
    %1420 = vmatprep.subr.mxu0 0.0
    %1421 = vmatpush1.msra.mxu0 0.0
    %1422 = vmatprep.subr.mxu0 0.0
    %1423 = vmatpush1.msra.mxu0 0.0
    %1424 = vmatprep.subr.mxu0 0.0
    %1425 = vmatpush1.msra.mxu0 0.0
    %1426 = vmatprep.subr.mxu0 0.0
    %1427 = vmatpush1.msra.mxu0 0.0
    %1428 = vmatprep.subr.mxu0 0.0
    %1429 = vmatpush1.msra.mxu0 0.0
    %1430 = vmatprep.subr.mxu0 0.0
    %1431 = vmatpush1.msra.mxu0 0.0
    %1432 = vmatprep.subr.mxu0 0.0
    %1433 = vmatpush1.msra.mxu0 0.0
    %1434 = vmatprep.subr.mxu0 0.0
    %1435 = vmatpush1.msra.mxu0 0.0
    %1436 = vmatprep.subr.mxu0 0.0
    %1437 = vmatpush1.msra.mxu0 0.0
    %1438 = vmatprep.subr.mxu0 0.0
    %1439 = vmatpush1.msra.mxu0 0.0
    %1440 = vmatprep.subr.mxu0 0.0
    %1441 = vmatpush1.msra.mxu0 0.0
    %1442 = vmatprep.subr.mxu0 0.0
    %1443 = vmatpush1.msra.mxu0 0.0
    %1444 = vmatprep.mubr.f32.mxu0 0.0
    %1445 = vmatmul.mubr.f32.gmra.mrb[0].mxu0 %v1378
    %v1446 = vpop.f32.mrb[0].mxu0
    %v1447 = vadd.f32 %v1375, %v1446
    %v1448 = vpop.f32.mrb[0].mxu0
    %1449 = vdwg.mxu0
    %v1450 = vxor.u32 %v1447, 2147483648
    %v1451 = vmul.f32 %v1450, 1.442695
    %v1452 = vpow.pop %v1451
    %v1453 = vadd.f32 %v1452, 1.0
    %v1454 = vrcp.pop %v1453
    %v1455 = vmul.f32 1.0, %v1454
    %v1456 = vtanh.pop %v1447
    %v1457 = vmul.f32 %v1455, %v1124
    %1459 = vrot.lane.b32.xlu0 %v1456, 104
    %v1460 = vpop.permute.xlu0 %1459
    %v1462 = vmul.f32 %v1455, %v1460
    %1464 = vrot.lane.b32.xlu0 %v1462, 8
    %v1465 = vpop.permute.xlu0 %1464
    %v1467 = vadd.f32 %v1457, %v1465
    %v1468 = vtanh.pop %v1467
    %1470 = vrot.lane.b32.xlu0 %v1468, 8
    %v1471 = vpop.permute.xlu0 %1470
    %v1473 = vmul.f32 %v1455, %v1471
    %1475 = vrot.lane.b32.xlu0 %v1473, 112
    %v1476 = vpop.permute.xlu0 %1475
    %1478 = vrot.lane.b32.xlu0 %v1247, 72
    %v1479 = vpop.permute.xlu0 %1478
    %v1481 = vsel %vm448, %v1476, %v1479
    %v1482 = vld [vmem:[%s6] sm:$0xff]
    %v1483 = vld [vmem:[%s6 + $0x8] sm:$0xff]
    %v1484 = vld [vmem:[%s6 + $0x10] sm:$0xff]
    %v1485 = vld [vmem:[%s6 + $0x18] sm:$0xff]
    %v1486 = vld [vmem:[%s6 + $0x20] sm:$0xff]
    %v1487 = vld [vmem:[%s7] sm:$0x1]
    %v1489 = vlaneseq
    %v1490 = vshrl.u32 %v1489, 7
    %v1491 = vsub.s32 0, %v1490
    %v1492 = vrot.slane %v1487, %v1491
    %v1495 = vsel %vm338, %v1481, 0
    %1497 = vmatprep.subr.mxu0 0.0
    %1498 = vmatpush1.msra.mxu0 %v1482
    %1499 = vmatprep.subr.mxu0 0.0
    %1500 = vmatpush1.msra.mxu0 %v1483
    %1501 = vmatprep.subr.mxu0 0.0
    %1502 = vmatpush1.msra.mxu0 %v1484
    %1503 = vmatprep.subr.mxu0 0.0
    %1504 = vmatpush1.msra.mxu0 %v1485
    %1505 = vmatprep.subr.mxu0 0.0
    %1506 = vmatpush1.msra.mxu0 %v1486
    %1507 = vmatprep.subr.mxu0 0.0
    %1508 = vmatpush1.msra.mxu0 0.0
    %1509 = vmatprep.subr.mxu0 0.0
    %1510 = vmatpush1.msra.mxu0 0.0
    %1511 = vmatprep.subr.mxu0 0.0
    %1512 = vmatpush1.msra.mxu0 0.0
    %1513 = vmatprep.subr.mxu0 0.0
    %1514 = vmatpush1.msra.mxu0 0.0
    %1515 = vmatprep.subr.mxu0 0.0
    %1516 = vmatpush1.msra.mxu0 0.0
    %1517 = vmatprep.subr.mxu0 0.0
    %1518 = vmatpush1.msra.mxu0 0.0
    %1519 = vmatprep.subr.mxu0 0.0
    %1520 = vmatpush1.msra.mxu0 0.0
    %1521 = vmatprep.subr.mxu0 0.0
    %1522 = vmatpush1.msra.mxu0 0.0
    %1523 = vmatprep.subr.mxu0 0.0
    %1524 = vmatpush1.msra.mxu0 0.0
    %1525 = vmatprep.subr.mxu0 0.0
    %1526 = vmatpush1.msra.mxu0 0.0
    %1527 = vmatprep.subr.mxu0 0.0
    %1528 = vmatpush1.msra.mxu0 0.0
    %1529 = vmatprep.subr.mxu0 0.0
    %1530 = vmatpush1.msra.mxu0 0.0
    %1531 = vmatprep.subr.mxu0 0.0
    %1532 = vmatpush1.msra.mxu0 0.0
    %1533 = vmatprep.subr.mxu0 0.0
    %1534 = vmatpush1.msra.mxu0 0.0
    %1535 = vmatprep.subr.mxu0 0.0
    %1536 = vmatpush1.msra.mxu0 0.0
    %1537 = vmatprep.subr.mxu0 0.0
    %1538 = vmatpush1.msra.mxu0 0.0
    %1539 = vmatprep.subr.mxu0 0.0
    %1540 = vmatpush1.msra.mxu0 0.0
    %1541 = vmatprep.subr.mxu0 0.0
    %1542 = vmatpush1.msra.mxu0 0.0
    %1543 = vmatprep.subr.mxu0 0.0
    %1544 = vmatpush1.msra.mxu0 0.0
    %1545 = vmatprep.subr.mxu0 0.0
    %1546 = vmatpush1.msra.mxu0 0.0
    %1547 = vmatprep.subr.mxu0 0.0
    %1548 = vmatpush1.msra.mxu0 0.0
    %1549 = vmatprep.subr.mxu0 0.0
    %1550 = vmatpush1.msra.mxu0 0.0
    %1551 = vmatprep.subr.mxu0 0.0
    %1552 = vmatpush1.msra.mxu0 0.0
    %1553 = vmatprep.subr.mxu0 0.0
    %1554 = vmatpush1.msra.mxu0 0.0
    %1555 = vmatprep.subr.mxu0 0.0
    %1556 = vmatpush1.msra.mxu0 0.0
    %1557 = vmatprep.subr.mxu0 0.0
    %1558 = vmatpush1.msra.mxu0 0.0
    %1559 = vmatprep.subr.mxu0 0.0
    %1560 = vmatpush1.msra.mxu0 0.0
    %1561 = vmatprep.mubr.f32.mxu0 0.0
    %1562 = vmatmul.mubr.f32.gmra.mrb[0].mxu0 %v1495
    %v1563 = vpop.f32.mrb[0].mxu0
    %v1564 = vadd.f32 %v1492, %v1563
    %v1565 = vpop.f32.mrb[0].mxu0
    %1566 = vdwg.mxu0
    %v1567 = vxor.u32 %v1564, 2147483648
    %v1568 = vmul.f32 %v1567, 1.442695
    %v1569 = vpow.pop %v1568
    %v1570 = vadd.f32 %v1569, 1.0
    %v1571 = vrcp.pop %v1570
    %v1572 = vmul.f32 1.0, %v1571
    %v1573 = vtanh.pop %v1564
    %v1574 = vmul.f32 %v1572, %v1241
    %1576 = vrot.lane.b32.xlu0 %v1573, 32
    %v1577 = vpop.permute.xlu0 %1576
    %v1579 = vmul.f32 %v1572, %v1577
    %1581 = vrot.lane.b32.xlu0 %v1579, 32
    %v1582 = vpop.permute.xlu0 %1581
    %v1584 = vadd.f32 %v1574, %v1582
    %v1585 = vtanh.pop %v1584
    %1587 = vrot.lane.b32.xlu0 %v1585, 32
    %v1588 = vpop.permute.xlu0 %1587
    %v1590 = vmul.f32 %v1572, %v1588
    %1592 = vrot.lane.b32.xlu0 %v1590, 64
    %v1593 = vpop.permute.xlu0 %1592
    %s1595 = scalar_lea.vmem [#allocation9], 24
    %1596 = vst.msk [vmem:[%s1595] sm:$0xff] %vm214, %v1593
    %s1597 = scalar_lea.vmem [#allocation8], 32
    %v1598 = vld [vmem:[%s1597] sm:$0xff]
    %v1599 = vld [vmem:[%s2] sm:$0xff]
    %v1600 = vld [vmem:[%s2 + $0x8] sm:$0xff]
    %v1601 = vld [vmem:[%s2 + $0x10] sm:$0xff]
    %v1602 = vld [vmem:[%s2 + $0x18] sm:$0xff]
    %v1603 = vsel %vm214, %v1359, 0
    %1605 = vmatprep.subr.mxu0 0.0
    %1606 = vmatpush1.msra.mxu0 %v1599
    %1607 = vmatprep.subr.mxu0 0.0
    %1608 = vmatpush1.msra.mxu0 %v1600
    %1609 = vmatprep.subr.mxu0 0.0
    %1610 = vmatpush1.msra.mxu0 %v1601
    %1611 = vmatprep.subr.mxu0 0.0
    %1612 = vmatpush1.msra.mxu0 %v1602
    %1613 = vmatprep.subr.mxu0 0.0
    %1614 = vmatpush1.msra.mxu0 0.0
    %1615 = vmatprep.subr.mxu0 0.0
    %1616 = vmatpush1.msra.mxu0 0.0
    %1617 = vmatprep.subr.mxu0 0.0
    %1618 = vmatpush1.msra.mxu0 0.0
    %1619 = vmatprep.subr.mxu0 0.0
    %1620 = vmatpush1.msra.mxu0 0.0
    %1621 = vmatprep.subr.mxu0 0.0
    %1622 = vmatpush1.msra.mxu0 0.0
    %1623 = vmatprep.subr.mxu0 0.0
    %1624 = vmatpush1.msra.mxu0 0.0
    %1625 = vmatprep.subr.mxu0 0.0
    %1626 = vmatpush1.msra.mxu0 0.0
    %1627 = vmatprep.subr.mxu0 0.0
    %1628 = vmatpush1.msra.mxu0 0.0
    %1629 = vmatprep.subr.mxu0 0.0
    %1630 = vmatpush1.msra.mxu0 0.0
    %1631 = vmatprep.subr.mxu0 0.0
    %1632 = vmatpush1.msra.mxu0 0.0
    %1633 = vmatprep.subr.mxu0 0.0
    %1634 = vmatpush1.msra.mxu0 0.0
    %1635 = vmatprep.subr.mxu0 0.0
    %1636 = vmatpush1.msra.mxu0 0.0
    %1637 = vmatprep.subr.mxu0 0.0
    %1638 = vmatpush1.msra.mxu0 0.0
    %1639 = vmatprep.subr.mxu0 0.0
    %1640 = vmatpush1.msra.mxu0 0.0
    %1641 = vmatprep.subr.mxu0 0.0
    %1642 = vmatpush1.msra.mxu0 0.0
    %1643 = vmatprep.subr.mxu0 0.0
    %1644 = vmatpush1.msra.mxu0 0.0
    %1645 = vmatprep.subr.mxu0 0.0
    %1646 = vmatpush1.msra.mxu0 0.0
    %1647 = vmatprep.subr.mxu0 0.0
    %1648 = vmatpush1.msra.mxu0 0.0
    %1649 = vmatprep.subr.mxu0 0.0
    %1650 = vmatpush1.msra.mxu0 0.0
    %1651 = vmatprep.subr.mxu0 0.0
    %1652 = vmatpush1.msra.mxu0 0.0
    %1653 = vmatprep.subr.mxu0 0.0
    %1654 = vmatpush1.msra.mxu0 0.0
    %1655 = vmatprep.subr.mxu0 0.0
    %1656 = vmatpush1.msra.mxu0 0.0
    %1657 = vmatprep.subr.mxu0 0.0
    %1658 = vmatpush1.msra.mxu0 0.0
    %1659 = vmatprep.subr.mxu0 0.0
    %1660 = vmatpush1.msra.mxu0 0.0
    %1661 = vmatprep.subr.mxu0 0.0
    %1662 = vmatpush1.msra.mxu0 0.0
    %1663 = vmatprep.subr.mxu0 0.0
    %1664 = vmatpush1.msra.mxu0 0.0
    %1665 = vmatprep.subr.mxu0 0.0
    %1666 = vmatpush1.msra.mxu0 0.0
    %1667 = vmatprep.subr.mxu0 0.0
    %1668 = vmatpush1.msra.mxu0 0.0
    %1669 = vmatprep.mubr.f32.mxu0 0.0
    %1670 = vmatmul.mubr.f32.gmra.mrb[0].mxu0 %v1603
    %v1671 = vpop.f32.mrb[0].mxu0
    %v1672 = vadd.f32 0.0, %v1671
    %v1673 = vpop.f32.mrb[0].mxu0
    %1674 = vdwg.mxu0
    %v1675 = vadd.f32 %v1598, %v1672
    %v1676 = vxor.u32 %v1675, 2147483648
    %v1677 = vmul.f32 %v1676, 1.442695
    %v1678 = vpow.pop %v1677
    %v1679 = vadd.f32 %v1678, 1.0
    %v1680 = vrcp.pop %v1679
    %v1681 = vmul.f32 1.0, %v1680
    %v1682 = vtanh.pop %v1675
    %v1683 = vmul.f32 %v1681, %v1350
    %1685 = vrot.lane.b32.xlu0 %v1682, 32
    %v1686 = vpop.permute.xlu0 %1685
    %v1688 = vmul.f32 %v1681, %v1686
    %1690 = vrot.lane.b32.xlu0 %v1688, 32
    %v1691 = vpop.permute.xlu0 %1690
    %v1693 = vadd.f32 %v1683, %v1691
    %v1694 = vtanh.pop %v1693
    %1696 = vrot.lane.b32.xlu0 %v1694, 32
    %v1697 = vpop.permute.xlu0 %1696
    %v1699 = vmul.f32 %v1681, %v1697
    %1701 = vrot.lane.b32.xlu0 %v1699, 64
    %v1702 = vpop.permute.xlu0 %1701
    %1704 = vrot.lane.b32.xlu0 %v1473, 16
    %v1705 = vpop.permute.xlu0 %1704
    %v1707 = vsel %vm214, %v1702, %v1705
    %v1708 = vld [vmem:[%s4] sm:$0xff]
    %v1709 = vld [vmem:[%s4 + $0x8] sm:$0xff]
    %v1710 = vld [vmem:[%s4 + $0x10] sm:$0xff]
    %v1711 = vld [vmem:[%s4 + $0x18] sm:$0xff]
    %v1712 = vld [vmem:[%s4 + $0x20] sm:$0xff]
    %v1713 = vld [vmem:[%s5] sm:$0x1]
    %v1715 = vlaneseq
    %v1716 = vshrl.u32 %v1715, 7
    %v1717 = vsub.s32 0, %v1716
    %v1718 = vrot.slane %v1713, %v1717
    %v1721 = vsel %vm338, %v1707, 0
    %1723 = vmatprep.subr.mxu0 0.0
    %1724 = vmatpush1.msra.mxu0 %v1708
    %1725 = vmatprep.subr.mxu0 0.0
    %1726 = vmatpush1.msra.mxu0 %v1709
    %1727 = vmatprep.subr.mxu0 0.0
    %1728 = vmatpush1.msra.mxu0 %v1710
    %1729 = vmatprep.subr.mxu0 0.0
    %1730 = vmatpush1.msra.mxu0 %v1711
    %1731 = vmatprep.subr.mxu0 0.0
    %1732 = vmatpush1.msra.mxu0 %v1712
    %1733 = vmatprep.subr.mxu0 0.0
    %1734 = vmatpush1.msra.mxu0 0.0
    %1735 = vmatprep.subr.mxu0 0.0
    %1736 = vmatpush1.msra.mxu0 0.0
    %1737 = vmatprep.subr.mxu0 0.0
    %1738 = vmatpush1.msra.mxu0 0.0
    %1739 = vmatprep.subr.mxu0 0.0
    %1740 = vmatpush1.msra.mxu0 0.0
    %1741 = vmatprep.subr.mxu0 0.0
    %1742 = vmatpush1.msra.mxu0 0.0
    %1743 = vmatprep.subr.mxu0 0.0
    %1744 = vmatpush1.msra.mxu0 0.0
    %1745 = vmatprep.subr.mxu0 0.0
    %1746 = vmatpush1.msra.mxu0 0.0
    %1747 = vmatprep.subr.mxu0 0.0
    %1748 = vmatpush1.msra.mxu0 0.0
    %1749 = vmatprep.subr.mxu0 0.0
    %1750 = vmatpush1.msra.mxu0 0.0
    %1751 = vmatprep.subr.mxu0 0.0
    %1752 = vmatpush1.msra.mxu0 0.0
    %1753 = vmatprep.subr.mxu0 0.0
    %1754 = vmatpush1.msra.mxu0 0.0
    %1755 = vmatprep.subr.mxu0 0.0
    %1756 = vmatpush1.msra.mxu0 0.0
    %1757 = vmatprep.subr.mxu0 0.0
    %1758 = vmatpush1.msra.mxu0 0.0
    %1759 = vmatprep.subr.mxu0 0.0
    %1760 = vmatpush1.msra.mxu0 0.0
    %1761 = vmatprep.subr.mxu0 0.0
    %1762 = vmatpush1.msra.mxu0 0.0
    %1763 = vmatprep.subr.mxu0 0.0
    %1764 = vmatpush1.msra.mxu0 0.0
    %1765 = vmatprep.subr.mxu0 0.0
    %1766 = vmatpush1.msra.mxu0 0.0
    %1767 = vmatprep.subr.mxu0 0.0
    %1768 = vmatpush1.msra.mxu0 0.0
    %1769 = vmatprep.subr.mxu0 0.0
    %1770 = vmatpush1.msra.mxu0 0.0
    %1771 = vmatprep.subr.mxu0 0.0
    %1772 = vmatpush1.msra.mxu0 0.0
    %1773 = vmatprep.subr.mxu0 0.0
    %1774 = vmatpush1.msra.mxu0 0.0
    %1775 = vmatprep.subr.mxu0 0.0
    %1776 = vmatpush1.msra.mxu0 0.0
    %1777 = vmatprep.subr.mxu0 0.0
    %1778 = vmatpush1.msra.mxu0 0.0
    %1779 = vmatprep.subr.mxu0 0.0
    %1780 = vmatpush1.msra.mxu0 0.0
    %1781 = vmatprep.subr.mxu0 0.0
    %1782 = vmatpush1.msra.mxu0 0.0
    %1783 = vmatprep.subr.mxu0 0.0
    %1784 = vmatpush1.msra.mxu0 0.0
    %1785 = vmatprep.subr.mxu0 0.0
    %1786 = vmatpush1.msra.mxu0 0.0
    %1787 = vmatprep.mubr.f32.mxu0 0.0
    %1788 = vmatmul.mubr.f32.gmra.mrb[0].mxu0 %v1721
    %v1789 = vpop.f32.mrb[0].mxu0
    %v1790 = vadd.f32 %v1718, %v1789
    %v1791 = vpop.f32.mrb[0].mxu0
    %1792 = vdwg.mxu0
    %v1793 = vxor.u32 %v1790, 2147483648
    %v1794 = vmul.f32 %v1793, 1.442695
    %v1795 = vpow.pop %v1794
    %v1796 = vadd.f32 %v1795, 1.0
    %v1797 = vrcp.pop %v1796
    %v1798 = vmul.f32 1.0, %v1797
    %v1799 = vtanh.pop %v1790
    %v1800 = vmul.f32 %v1798, %v1467
    %1802 = vrot.lane.b32.xlu0 %v1799, 104
    %v1803 = vpop.permute.xlu0 %1802
    %v1805 = vmul.f32 %v1798, %v1803
    %1807 = vrot.lane.b32.xlu0 %v1805, 8
    %v1808 = vpop.permute.xlu0 %1807
    %v1810 = vadd.f32 %v1800, %v1808
    %v1811 = vtanh.pop %v1810
    %1813 = vrot.lane.b32.xlu0 %v1811, 8
    %v1814 = vpop.permute.xlu0 %1813
    %v1816 = vmul.f32 %v1798, %v1814
    %1818 = vrot.lane.b32.xlu0 %v1816, 112
    %v1819 = vpop.permute.xlu0 %1818
    %1821 = vrot.lane.b32.xlu0 %v1590, 72
    %v1822 = vpop.permute.xlu0 %1821
    %v1824 = vsel %vm448, %v1819, %v1822
    %v1825 = vld [vmem:[%s6] sm:$0xff]
    %v1826 = vld [vmem:[%s6 + $0x8] sm:$0xff]
    %v1827 = vld [vmem:[%s6 + $0x10] sm:$0xff]
    %v1828 = vld [vmem:[%s6 + $0x18] sm:$0xff]
    %v1829 = vld [vmem:[%s6 + $0x20] sm:$0xff]
    %v1830 = vld [vmem:[%s7] sm:$0x1]
    %v1832 = vlaneseq
    %v1833 = vshrl.u32 %v1832, 7
    %v1834 = vsub.s32 0, %v1833
    %v1835 = vrot.slane %v1830, %v1834
    %v1838 = vsel %vm338, %v1824, 0
    %1840 = vmatprep.subr.mxu0 0.0
    %1841 = vmatpush1.msra.mxu0 %v1825
    %1842 = vmatprep.subr.mxu0 0.0
    %1843 = vmatpush1.msra.mxu0 %v1826
    %1844 = vmatprep.subr.mxu0 0.0
    %1845 = vmatpush1.msra.mxu0 %v1827
    %1846 = vmatprep.subr.mxu0 0.0
    %1847 = vmatpush1.msra.mxu0 %v1828
    %1848 = vmatprep.subr.mxu0 0.0
    %1849 = vmatpush1.msra.mxu0 %v1829
    %1850 = vmatprep.subr.mxu0 0.0
    %1851 = vmatpush1.msra.mxu0 0.0
    %1852 = vmatprep.subr.mxu0 0.0
    %1853 = vmatpush1.msra.mxu0 0.0
    %1854 = vmatprep.subr.mxu0 0.0
    %1855 = vmatpush1.msra.mxu0 0.0
    %1856 = vmatprep.subr.mxu0 0.0
    %1857 = vmatpush1.msra.mxu0 0.0
    %1858 = vmatprep.subr.mxu0 0.0
    %1859 = vmatpush1.msra.mxu0 0.0
    %1860 = vmatprep.subr.mxu0 0.0
    %1861 = vmatpush1.msra.mxu0 0.0
    %1862 = vmatprep.subr.mxu0 0.0
    %1863 = vmatpush1.msra.mxu0 0.0
    %1864 = vmatprep.subr.mxu0 0.0
    %1865 = vmatpush1.msra.mxu0 0.0
    %1866 = vmatprep.subr.mxu0 0.0
    %1867 = vmatpush1.msra.mxu0 0.0
    %1868 = vmatprep.subr.mxu0 0.0
    %1869 = vmatpush1.msra.mxu0 0.0
    %1870 = vmatprep.subr.mxu0 0.0
    %1871 = vmatpush1.msra.mxu0 0.0
    %1872 = vmatprep.subr.mxu0 0.0
    %1873 = vmatpush1.msra.mxu0 0.0
    %1874 = vmatprep.subr.mxu0 0.0
    %1875 = vmatpush1.msra.mxu0 0.0
    %1876 = vmatprep.subr.mxu0 0.0
    %1877 = vmatpush1.msra.mxu0 0.0
    %1878 = vmatprep.subr.mxu0 0.0
    %1879 = vmatpush1.msra.mxu0 0.0
    %1880 = vmatprep.subr.mxu0 0.0
    %1881 = vmatpush1.msra.mxu0 0.0
    %1882 = vmatprep.subr.mxu0 0.0
    %1883 = vmatpush1.msra.mxu0 0.0
    %1884 = vmatprep.subr.mxu0 0.0
    %1885 = vmatpush1.msra.mxu0 0.0
    %1886 = vmatprep.subr.mxu0 0.0
    %1887 = vmatpush1.msra.mxu0 0.0
    %1888 = vmatprep.subr.mxu0 0.0
    %1889 = vmatpush1.msra.mxu0 0.0
    %1890 = vmatprep.subr.mxu0 0.0
    %1891 = vmatpush1.msra.mxu0 0.0
    %1892 = vmatprep.subr.mxu0 0.0
    %1893 = vmatpush1.msra.mxu0 0.0
    %1894 = vmatprep.subr.mxu0 0.0
    %1895 = vmatpush1.msra.mxu0 0.0
    %1896 = vmatprep.subr.mxu0 0.0
    %1897 = vmatpush1.msra.mxu0 0.0
    %1898 = vmatprep.subr.mxu0 0.0
    %1899 = vmatpush1.msra.mxu0 0.0
    %1900 = vmatprep.subr.mxu0 0.0
    %1901 = vmatpush1.msra.mxu0 0.0
    %1902 = vmatprep.subr.mxu0 0.0
    %1903 = vmatpush1.msra.mxu0 0.0
    %1904 = vmatprep.mubr.f32.mxu0 0.0
    %1905 = vmatmul.mubr.f32.gmra.mrb[0].mxu0 %v1838
    %v1906 = vpop.f32.mrb[0].mxu0
    %v1907 = vadd.f32 %v1835, %v1906
    %v1908 = vpop.f32.mrb[0].mxu0
    %1909 = vdwg.mxu0
    %v1910 = vxor.u32 %v1907, 2147483648
    %v1911 = vmul.f32 %v1910, 1.442695
    %v1912 = vpow.pop %v1911
    %v1913 = vadd.f32 %v1912, 1.0
    %v1914 = vrcp.pop %v1913
    %v1915 = vmul.f32 1.0, %v1914
    %v1916 = vtanh.pop %v1907
    %v1917 = vmul.f32 %v1915, %v1584
    %1919 = vrot.lane.b32.xlu0 %v1916, 32
    %v1920 = vpop.permute.xlu0 %1919
    %v1922 = vmul.f32 %v1915, %v1920
    %1924 = vrot.lane.b32.xlu0 %v1922, 32
    %v1925 = vpop.permute.xlu0 %1924
    %v1927 = vadd.f32 %v1917, %v1925
    %v1928 = vtanh.pop %v1927
    %1930 = vrot.lane.b32.xlu0 %v1928, 32
    %v1931 = vpop.permute.xlu0 %1930
    %v1933 = vmul.f32 %v1915, %v1931
    %1935 = vrot.lane.b32.xlu0 %v1933, 64
    %v1936 = vpop.permute.xlu0 %1935
    %s1938 = scalar_lea.vmem [#allocation9], 32
    %1939 = vst.msk [vmem:[%s1938] sm:$0xff] %vm214, %v1936
    %s1940 = scalar_lea.vmem [#allocation8], 40
    %v1941 = vld [vmem:[%s1940] sm:$0xff]
    %v1942 = vld [vmem:[%s2] sm:$0xff]
    %v1943 = vld [vmem:[%s2 + $0x8] sm:$0xff]
    %v1944 = vld [vmem:[%s2 + $0x10] sm:$0xff]
    %v1945 = vld [vmem:[%s2 + $0x18] sm:$0xff]
    %v1946 = vsel %vm214, %v1702, 0
    %1948 = vmatprep.subr.mxu0 0.0
    %1949 = vmatpush1.msra.mxu0 %v1942
    %1950 = vmatprep.subr.mxu0 0.0
    %1951 = vmatpush1.msra.mxu0 %v1943
    %1952 = vmatprep.subr.mxu0 0.0
    %1953 = vmatpush1.msra.mxu0 %v1944
    %1954 = vmatprep.subr.mxu0 0.0
    %1955 = vmatpush1.msra.mxu0 %v1945
    %1956 = vmatprep.subr.mxu0 0.0
    %1957 = vmatpush1.msra.mxu0 0.0
    %1958 = vmatprep.subr.mxu0 0.0
    %1959 = vmatpush1.msra.mxu0 0.0
    %1960 = vmatprep.subr.mxu0 0.0
    %1961 = vmatpush1.msra.mxu0 0.0
    %1962 = vmatprep.subr.mxu0 0.0
    %1963 = vmatpush1.msra.mxu0 0.0
    %1964 = vmatprep.subr.mxu0 0.0
    %1965 = vmatpush1.msra.mxu0 0.0
    %1966 = vmatprep.subr.mxu0 0.0
    %1967 = vmatpush1.msra.mxu0 0.0
    %1968 = vmatprep.subr.mxu0 0.0
    %1969 = vmatpush1.msra.mxu0 0.0
    %1970 = vmatprep.subr.mxu0 0.0
    %1971 = vmatpush1.msra.mxu0 0.0
    %1972 = vmatprep.subr.mxu0 0.0
    %1973 = vmatpush1.msra.mxu0 0.0
    %1974 = vmatprep.subr.mxu0 0.0
    %1975 = vmatpush1.msra.mxu0 0.0
    %1976 = vmatprep.subr.mxu0 0.0
    %1977 = vmatpush1.msra.mxu0 0.0
    %1978 = vmatprep.subr.mxu0 0.0
    %1979 = vmatpush1.msra.mxu0 0.0
    %1980 = vmatprep.subr.mxu0 0.0
    %1981 = vmatpush1.msra.mxu0 0.0
    %1982 = vmatprep.subr.mxu0 0.0
    %1983 = vmatpush1.msra.mxu0 0.0
    %1984 = vmatprep.subr.mxu0 0.0
    %1985 = vmatpush1.msra.mxu0 0.0
    %1986 = vmatprep.subr.mxu0 0.0
    %1987 = vmatpush1.msra.mxu0 0.0
    %1988 = vmatprep.subr.mxu0 0.0
    %1989 = vmatpush1.msra.mxu0 0.0
    %1990 = vmatprep.subr.mxu0 0.0
    %1991 = vmatpush1.msra.mxu0 0.0
    %1992 = vmatprep.subr.mxu0 0.0
    %1993 = vmatpush1.msra.mxu0 0.0
    %1994 = vmatprep.subr.mxu0 0.0
    %1995 = vmatpush1.msra.mxu0 0.0
    %1996 = vmatprep.subr.mxu0 0.0
    %1997 = vmatpush1.msra.mxu0 0.0
    %1998 = vmatprep.subr.mxu0 0.0
    %1999 = vmatpush1.msra.mxu0 0.0
    %2000 = vmatprep.subr.mxu0 0.0
    %2001 = vmatpush1.msra.mxu0 0.0
    %2002 = vmatprep.subr.mxu0 0.0
    %2003 = vmatpush1.msra.mxu0 0.0
    %2004 = vmatprep.subr.mxu0 0.0
    %2005 = vmatpush1.msra.mxu0 0.0
    %2006 = vmatprep.subr.mxu0 0.0
    %2007 = vmatpush1.msra.mxu0 0.0
    %2008 = vmatprep.subr.mxu0 0.0
    %2009 = vmatpush1.msra.mxu0 0.0
    %2010 = vmatprep.subr.mxu0 0.0
    %2011 = vmatpush1.msra.mxu0 0.0
    %2012 = vmatprep.mubr.f32.mxu0 0.0
    %2013 = vmatmul.mubr.f32.gmra.mrb[0].mxu0 %v1946
    %v2014 = vpop.f32.mrb[0].mxu0
    %v2015 = vadd.f32 0.0, %v2014
    %v2016 = vpop.f32.mrb[0].mxu0
    %2017 = vdwg.mxu0
    %v2018 = vadd.f32 %v1941, %v2015
    %v2019 = vxor.u32 %v2018, 2147483648
    %v2020 = vmul.f32 %v2019, 1.442695
    %v2021 = vpow.pop %v2020
    %v2022 = vadd.f32 %v2021, 1.0
    %v2023 = vrcp.pop %v2022
    %v2024 = vmul.f32 1.0, %v2023
    %v2025 = vtanh.pop %v2018
    %v2026 = vmul.f32 %v2024, %v1693
    %2028 = vrot.lane.b32.xlu0 %v2025, 32
    %v2029 = vpop.permute.xlu0 %2028
    %v2031 = vmul.f32 %v2024, %v2029
    %2033 = vrot.lane.b32.xlu0 %v2031, 32
    %v2034 = vpop.permute.xlu0 %2033
    %v2036 = vadd.f32 %v2026, %v2034
    %v2037 = vtanh.pop %v2036
    %2039 = vrot.lane.b32.xlu0 %v2037, 32
    %v2040 = vpop.permute.xlu0 %2039
    %v2042 = vmul.f32 %v2024, %v2040
    %2044 = vrot.lane.b32.xlu0 %v2042, 64
    %v2045 = vpop.permute.xlu0 %2044
    %2047 = vrot.lane.b32.xlu0 %v1816, 16
    %v2048 = vpop.permute.xlu0 %2047
    %v2050 = vsel %vm214, %v2045, %v2048
    %v2051 = vld [vmem:[%s4] sm:$0xff]
    %v2052 = vld [vmem:[%s4 + $0x8] sm:$0xff]
    %v2053 = vld [vmem:[%s4 + $0x10] sm:$0xff]
    %v2054 = vld [vmem:[%s4 + $0x18] sm:$0xff]
    %v2055 = vld [vmem:[%s4 + $0x20] sm:$0xff]
    %v2056 = vld [vmem:[%s5] sm:$0x1]
    %v2058 = vlaneseq
    %v2059 = vshrl.u32 %v2058, 7
    %v2060 = vsub.s32 0, %v2059
    %v2061 = vrot.slane %v2056, %v2060
    %v2064 = vsel %vm338, %v2050, 0
    %2066 = vmatprep.subr.mxu0 0.0
    %2067 = vmatpush1.msra.mxu0 %v2051
    %2068 = vmatprep.subr.mxu0 0.0
    %2069 = vmatpush1.msra.mxu0 %v2052
    %2070 = vmatprep.subr.mxu0 0.0
    %2071 = vmatpush1.msra.mxu0 %v2053
    %2072 = vmatprep.subr.mxu0 0.0
    %2073 = vmatpush1.msra.mxu0 %v2054
    %2074 = vmatprep.subr.mxu0 0.0
    %2075 = vmatpush1.msra.mxu0 %v2055
    %2076 = vmatprep.subr.mxu0 0.0
    %2077 = vmatpush1.msra.mxu0 0.0
    %2078 = vmatprep.subr.mxu0 0.0
    %2079 = vmatpush1.msra.mxu0 0.0
    %2080 = vmatprep.subr.mxu0 0.0
    %2081 = vmatpush1.msra.mxu0 0.0
    %2082 = vmatprep.subr.mxu0 0.0
    %2083 = vmatpush1.msra.mxu0 0.0
    %2084 = vmatprep.subr.mxu0 0.0
    %2085 = vmatpush1.msra.mxu0 0.0
    %2086 = vmatprep.subr.mxu0 0.0
    %2087 = vmatpush1.msra.mxu0 0.0
    %2088 = vmatprep.subr.mxu0 0.0
    %2089 = vmatpush1.msra.mxu0 0.0
    %2090 = vmatprep.subr.mxu0 0.0
    %2091 = vmatpush1.msra.mxu0 0.0
    %2092 = vmatprep.subr.mxu0 0.0
    %2093 = vmatpush1.msra.mxu0 0.0
    %2094 = vmatprep.subr.mxu0 0.0
    %2095 = vmatpush1.msra.mxu0 0.0
    %2096 = vmatprep.subr.mxu0 0.0
    %2097 = vmatpush1.msra.mxu0 0.0
    %2098 = vmatprep.subr.mxu0 0.0
    %2099 = vmatpush1.msra.mxu0 0.0
    %2100 = vmatprep.subr.mxu0 0.0
    %2101 = vmatpush1.msra.mxu0 0.0
    %2102 = vmatprep.subr.mxu0 0.0
    %2103 = vmatpush1.msra.mxu0 0.0
    %2104 = vmatprep.subr.mxu0 0.0
    %2105 = vmatpush1.msra.mxu0 0.0
    %2106 = vmatprep.subr.mxu0 0.0
    %2107 = vmatpush1.msra.mxu0 0.0
    %2108 = vmatprep.subr.mxu0 0.0
    %2109 = vmatpush1.msra.mxu0 0.0
    %2110 = vmatprep.subr.mxu0 0.0
    %2111 = vmatpush1.msra.mxu0 0.0
    %2112 = vmatprep.subr.mxu0 0.0
    %2113 = vmatpush1.msra.mxu0 0.0
    %2114 = vmatprep.subr.mxu0 0.0
    %2115 = vmatpush1.msra.mxu0 0.0
    %2116 = vmatprep.subr.mxu0 0.0
    %2117 = vmatpush1.msra.mxu0 0.0
    %2118 = vmatprep.subr.mxu0 0.0
    %2119 = vmatpush1.msra.mxu0 0.0
    %2120 = vmatprep.subr.mxu0 0.0
    %2121 = vmatpush1.msra.mxu0 0.0
    %2122 = vmatprep.subr.mxu0 0.0
    %2123 = vmatpush1.msra.mxu0 0.0
    %2124 = vmatprep.subr.mxu0 0.0
    %2125 = vmatpush1.msra.mxu0 0.0
    %2126 = vmatprep.subr.mxu0 0.0
    %2127 = vmatpush1.msra.mxu0 0.0
    %2128 = vmatprep.subr.mxu0 0.0
    %2129 = vmatpush1.msra.mxu0 0.0
    %2130 = vmatprep.mubr.f32.mxu0 0.0
    %2131 = vmatmul.mubr.f32.gmra.mrb[0].mxu0 %v2064
    %v2132 = vpop.f32.mrb[0].mxu0
    %v2133 = vadd.f32 %v2061, %v2132
    %v2134 = vpop.f32.mrb[0].mxu0
    %2135 = vdwg.mxu0
    %v2136 = vxor.u32 %v2133, 2147483648
    %v2137 = vmul.f32 %v2136, 1.442695
    %v2138 = vpow.pop %v2137
    %v2139 = vadd.f32 %v2138, 1.0
    %v2140 = vrcp.pop %v2139
    %v2141 = vmul.f32 1.0, %v2140
    %v2142 = vtanh.pop %v2133
    %v2143 = vmul.f32 %v2141, %v1810
    %2145 = vrot.lane.b32.xlu0 %v2142, 104
    %v2146 = vpop.permute.xlu0 %2145
    %v2148 = vmul.f32 %v2141, %v2146
    %2150 = vrot.lane.b32.xlu0 %v2148, 8
    %v2151 = vpop.permute.xlu0 %2150
    %v2153 = vadd.f32 %v2143, %v2151
    %v2154 = vtanh.pop %v2153
    %2156 = vrot.lane.b32.xlu0 %v2154, 8
    %v2157 = vpop.permute.xlu0 %2156
    %v2159 = vmul.f32 %v2141, %v2157
    %2161 = vrot.lane.b32.xlu0 %v2159, 112
    %v2162 = vpop.permute.xlu0 %2161
    %2164 = vrot.lane.b32.xlu0 %v1933, 72
    %v2165 = vpop.permute.xlu0 %2164
    %v2167 = vsel %vm448, %v2162, %v2165
    %v2168 = vld [vmem:[%s6] sm:$0xff]
    %v2169 = vld [vmem:[%s6 + $0x8] sm:$0xff]
    %v2170 = vld [vmem:[%s6 + $0x10] sm:$0xff]
    %v2171 = vld [vmem:[%s6 + $0x18] sm:$0xff]
    %v2172 = vld [vmem:[%s6 + $0x20] sm:$0xff]
    %v2173 = vld [vmem:[%s7] sm:$0x1]
    %v2175 = vlaneseq
    %v2176 = vshrl.u32 %v2175, 7
    %v2177 = vsub.s32 0, %v2176
    %v2178 = vrot.slane %v2173, %v2177
    %v2181 = vsel %vm338, %v2167, 0
    %2183 = vmatprep.subr.mxu0 0.0
    %2184 = vmatpush1.msra.mxu0 %v2168
    %2185 = vmatprep.subr.mxu0 0.0
    %2186 = vmatpush1.msra.mxu0 %v2169
    %2187 = vmatprep.subr.mxu0 0.0
    %2188 = vmatpush1.msra.mxu0 %v2170
    %2189 = vmatprep.subr.mxu0 0.0
    %2190 = vmatpush1.msra.mxu0 %v2171
    %2191 = vmatprep.subr.mxu0 0.0
    %2192 = vmatpush1.msra.mxu0 %v2172
    %2193 = vmatprep.subr.mxu0 0.0
    %2194 = vmatpush1.msra.mxu0 0.0
    %2195 = vmatprep.subr.mxu0 0.0
    %2196 = vmatpush1.msra.mxu0 0.0
    %2197 = vmatprep.subr.mxu0 0.0
    %2198 = vmatpush1.msra.mxu0 0.0
    %2199 = vmatprep.subr.mxu0 0.0
    %2200 = vmatpush1.msra.mxu0 0.0
    %2201 = vmatprep.subr.mxu0 0.0
    %2202 = vmatpush1.msra.mxu0 0.0
    %2203 = vmatprep.subr.mxu0 0.0
    %2204 = vmatpush1.msra.mxu0 0.0
    %2205 = vmatprep.subr.mxu0 0.0
    %2206 = vmatpush1.msra.mxu0 0.0
    %2207 = vmatprep.subr.mxu0 0.0
    %2208 = vmatpush1.msra.mxu0 0.0
    %2209 = vmatprep.subr.mxu0 0.0
    %2210 = vmatpush1.msra.mxu0 0.0
    %2211 = vmatprep.subr.mxu0 0.0
    %2212 = vmatpush1.msra.mxu0 0.0
    %2213 = vmatprep.subr.mxu0 0.0
    %2214 = vmatpush1.msra.mxu0 0.0
    %2215 = vmatprep.subr.mxu0 0.0
    %2216 = vmatpush1.msra.mxu0 0.0
    %2217 = vmatprep.subr.mxu0 0.0
    %2218 = vmatpush1.msra.mxu0 0.0
    %2219 = vmatprep.subr.mxu0 0.0
    %2220 = vmatpush1.msra.mxu0 0.0
    %2221 = vmatprep.subr.mxu0 0.0
    %2222 = vmatpush1.msra.mxu0 0.0
    %2223 = vmatprep.subr.mxu0 0.0
    %2224 = vmatpush1.msra.mxu0 0.0
    %2225 = vmatprep.subr.mxu0 0.0
    %2226 = vmatpush1.msra.mxu0 0.0
    %2227 = vmatprep.subr.mxu0 0.0
    %2228 = vmatpush1.msra.mxu0 0.0
    %2229 = vmatprep.subr.mxu0 0.0
    %2230 = vmatpush1.msra.mxu0 0.0
    %2231 = vmatprep.subr.mxu0 0.0
    %2232 = vmatpush1.msra.mxu0 0.0
    %2233 = vmatprep.subr.mxu0 0.0
    %2234 = vmatpush1.msra.mxu0 0.0
    %2235 = vmatprep.subr.mxu0 0.0
    %2236 = vmatpush1.msra.mxu0 0.0
    %2237 = vmatprep.subr.mxu0 0.0
    %2238 = vmatpush1.msra.mxu0 0.0
    %2239 = vmatprep.subr.mxu0 0.0
    %2240 = vmatpush1.msra.mxu0 0.0
    %2241 = vmatprep.subr.mxu0 0.0
    %2242 = vmatpush1.msra.mxu0 0.0
    %2243 = vmatprep.subr.mxu0 0.0
    %2244 = vmatpush1.msra.mxu0 0.0
    %2245 = vmatprep.subr.mxu0 0.0
    %2246 = vmatpush1.msra.mxu0 0.0
    %2247 = vmatprep.mubr.f32.mxu0 0.0
    %2248 = vmatmul.mubr.f32.gmra.mrb[0].mxu0 %v2181
    %v2249 = vpop.f32.mrb[0].mxu0
    %v2250 = vadd.f32 %v2178, %v2249
    %v2251 = vpop.f32.mrb[0].mxu0
    %2252 = vdwg.mxu0
    %v2253 = vxor.u32 %v2250, 2147483648
    %v2254 = vmul.f32 %v2253, 1.442695
    %v2255 = vpow.pop %v2254
    %v2256 = vadd.f32 %v2255, 1.0
    %v2257 = vrcp.pop %v2256
    %v2258 = vmul.f32 1.0, %v2257
    %v2259 = vtanh.pop %v2250
    %v2260 = vmul.f32 %v2258, %v1927
    %2262 = vrot.lane.b32.xlu0 %v2259, 32
    %v2263 = vpop.permute.xlu0 %2262
    %v2265 = vmul.f32 %v2258, %v2263
    %2267 = vrot.lane.b32.xlu0 %v2265, 32
    %v2268 = vpop.permute.xlu0 %2267
    %v2270 = vadd.f32 %v2260, %v2268
    %v2271 = vtanh.pop %v2270
    %2273 = vrot.lane.b32.xlu0 %v2271, 32
    %v2274 = vpop.permute.xlu0 %2273
    %v2276 = vmul.f32 %v2258, %v2274
    %2278 = vrot.lane.b32.xlu0 %v2276, 64
    %v2279 = vpop.permute.xlu0 %2278
    %s2281 = scalar_lea.vmem [#allocation9], 40
    %2282 = vst.msk [vmem:[%s2281] sm:$0xff] %vm214, %v2279
    %s2283 = scalar_lea.vmem [#allocation8], 48
    %v2284 = vld [vmem:[%s2283] sm:$0xff]
    %v2285 = vld [vmem:[%s2] sm:$0xff]
    %v2286 = vld [vmem:[%s2 + $0x8] sm:$0xff]
    %v2287 = vld [vmem:[%s2 + $0x10] sm:$0xff]
    %v2288 = vld [vmem:[%s2 + $0x18] sm:$0xff]
    %v2289 = vsel %vm214, %v2045, 0
    %2291 = vmatprep.subr.mxu0 0.0
    %2292 = vmatpush1.msra.mxu0 %v2285
    %2293 = vmatprep.subr.mxu0 0.0
    %2294 = vmatpush1.msra.mxu0 %v2286
    %2295 = vmatprep.subr.mxu0 0.0
    %2296 = vmatpush1.msra.mxu0 %v2287
    %2297 = vmatprep.subr.mxu0 0.0
    %2298 = vmatpush1.msra.mxu0 %v2288
    %2299 = vmatprep.subr.mxu0 0.0
    %2300 = vmatpush1.msra.mxu0 0.0
    %2301 = vmatprep.subr.mxu0 0.0
    %2302 = vmatpush1.msra.mxu0 0.0
    %2303 = vmatprep.subr.mxu0 0.0
    %2304 = vmatpush1.msra.mxu0 0.0
    %2305 = vmatprep.subr.mxu0 0.0
    %2306 = vmatpush1.msra.mxu0 0.0
    %2307 = vmatprep.subr.mxu0 0.0
    %2308 = vmatpush1.msra.mxu0 0.0
    %2309 = vmatprep.subr.mxu0 0.0
    %2310 = vmatpush1.msra.mxu0 0.0
    %2311 = vmatprep.subr.mxu0 0.0
    %2312 = vmatpush1.msra.mxu0 0.0
    %2313 = vmatprep.subr.mxu0 0.0
    %2314 = vmatpush1.msra.mxu0 0.0
    %2315 = vmatprep.subr.mxu0 0.0
    %2316 = vmatpush1.msra.mxu0 0.0
    %2317 = vmatprep.subr.mxu0 0.0
    %2318 = vmatpush1.msra.mxu0 0.0
    %2319 = vmatprep.subr.mxu0 0.0
    %2320 = vmatpush1.msra.mxu0 0.0
    %2321 = vmatprep.subr.mxu0 0.0
    %2322 = vmatpush1.msra.mxu0 0.0
    %2323 = vmatprep.subr.mxu0 0.0
    %2324 = vmatpush1.msra.mxu0 0.0
    %2325 = vmatprep.subr.mxu0 0.0
    %2326 = vmatpush1.msra.mxu0 0.0
    %2327 = vmatprep.subr.mxu0 0.0
    %2328 = vmatpush1.msra.mxu0 0.0
    %2329 = vmatprep.subr.mxu0 0.0
    %2330 = vmatpush1.msra.mxu0 0.0
    %2331 = vmatprep.subr.mxu0 0.0
    %2332 = vmatpush1.msra.mxu0 0.0
    %2333 = vmatprep.subr.mxu0 0.0
    %2334 = vmatpush1.msra.mxu0 0.0
    %2335 = vmatprep.subr.mxu0 0.0
    %2336 = vmatpush1.msra.mxu0 0.0
    %2337 = vmatprep.subr.mxu0 0.0
    %2338 = vmatpush1.msra.mxu0 0.0
    %2339 = vmatprep.subr.mxu0 0.0
    %2340 = vmatpush1.msra.mxu0 0.0
    %2341 = vmatprep.subr.mxu0 0.0
    %2342 = vmatpush1.msra.mxu0 0.0
    %2343 = vmatprep.subr.mxu0 0.0
    %2344 = vmatpush1.msra.mxu0 0.0
    %2345 = vmatprep.subr.mxu0 0.0
    %2346 = vmatpush1.msra.mxu0 0.0
    %2347 = vmatprep.subr.mxu0 0.0
    %2348 = vmatpush1.msra.mxu0 0.0
    %2349 = vmatprep.subr.mxu0 0.0
    %2350 = vmatpush1.msra.mxu0 0.0
    %2351 = vmatprep.subr.mxu0 0.0
    %2352 = vmatpush1.msra.mxu0 0.0
    %2353 = vmatprep.subr.mxu0 0.0
    %2354 = vmatpush1.msra.mxu0 0.0
    %2355 = vmatprep.mubr.f32.mxu0 0.0
    %2356 = vmatmul.mubr.f32.gmra.mrb[0].mxu0 %v2289
    %v2357 = vpop.f32.mrb[0].mxu0
    %v2358 = vadd.f32 0.0, %v2357
    %v2359 = vpop.f32.mrb[0].mxu0
    %2360 = vdwg.mxu0
    %v2361 = vadd.f32 %v2284, %v2358
    %v2362 = vxor.u32 %v2361, 2147483648
    %v2363 = vmul.f32 %v2362, 1.442695
    %v2364 = vpow.pop %v2363
    %v2365 = vadd.f32 %v2364, 1.0
    %v2366 = vrcp.pop %v2365
    %v2367 = vmul.f32 1.0, %v2366
    %v2368 = vtanh.pop %v2361
    %v2369 = vmul.f32 %v2367, %v2036
    %2371 = vrot.lane.b32.xlu0 %v2368, 32
    %v2372 = vpop.permute.xlu0 %2371
    %v2374 = vmul.f32 %v2367, %v2372
    %2376 = vrot.lane.b32.xlu0 %v2374, 32
    %v2377 = vpop.permute.xlu0 %2376
    %v2379 = vadd.f32 %v2369, %v2377
    %v2380 = vtanh.pop %v2379
    %2382 = vrot.lane.b32.xlu0 %v2380, 32
    %v2383 = vpop.permute.xlu0 %2382
    %v2385 = vmul.f32 %v2367, %v2383
    %2387 = vrot.lane.b32.xlu0 %v2385, 64
    %v2388 = vpop.permute.xlu0 %2387
    %2390 = vrot.lane.b32.xlu0 %v2159, 16
    %v2391 = vpop.permute.xlu0 %2390
    %v2393 = vsel %vm214, %v2388, %v2391
    %v2394 = vld [vmem:[%s4] sm:$0xff]
    %v2395 = vld [vmem:[%s4 + $0x8] sm:$0xff]
    %v2396 = vld [vmem:[%s4 + $0x10] sm:$0xff]
    %v2397 = vld [vmem:[%s4 + $0x18] sm:$0xff]
    %v2398 = vld [vmem:[%s4 + $0x20] sm:$0xff]
    %v2399 = vld [vmem:[%s5] sm:$0x1]
    %v2401 = vlaneseq
    %v2402 = vshrl.u32 %v2401, 7
    %v2403 = vsub.s32 0, %v2402
    %v2404 = vrot.slane %v2399, %v2403
    %v2407 = vsel %vm338, %v2393, 0
    %2409 = vmatprep.subr.mxu0 0.0
    %2410 = vmatpush1.msra.mxu0 %v2394
    %2411 = vmatprep.subr.mxu0 0.0
    %2412 = vmatpush1.msra.mxu0 %v2395
    %2413 = vmatprep.subr.mxu0 0.0
    %2414 = vmatpush1.msra.mxu0 %v2396
    %2415 = vmatprep.subr.mxu0 0.0
    %2416 = vmatpush1.msra.mxu0 %v2397
    %2417 = vmatprep.subr.mxu0 0.0
    %2418 = vmatpush1.msra.mxu0 %v2398
    %2419 = vmatprep.subr.mxu0 0.0
    %2420 = vmatpush1.msra.mxu0 0.0
    %2421 = vmatprep.subr.mxu0 0.0
    %2422 = vmatpush1.msra.mxu0 0.0
    %2423 = vmatprep.subr.mxu0 0.0
    %2424 = vmatpush1.msra.mxu0 0.0
    %2425 = vmatprep.subr.mxu0 0.0
    %2426 = vmatpush1.msra.mxu0 0.0
    %2427 = vmatprep.subr.mxu0 0.0
    %2428 = vmatpush1.msra.mxu0 0.0
    %2429 = vmatprep.subr.mxu0 0.0
    %2430 = vmatpush1.msra.mxu0 0.0
    %2431 = vmatprep.subr.mxu0 0.0
    %2432 = vmatpush1.msra.mxu0 0.0
    %2433 = vmatprep.subr.mxu0 0.0
    %2434 = vmatpush1.msra.mxu0 0.0
    %2435 = vmatprep.subr.mxu0 0.0
    %2436 = vmatpush1.msra.mxu0 0.0
    %2437 = vmatprep.subr.mxu0 0.0
    %2438 = vmatpush1.msra.mxu0 0.0
    %2439 = vmatprep.subr.mxu0 0.0
    %2440 = vmatpush1.msra.mxu0 0.0
    %2441 = vmatprep.subr.mxu0 0.0
    %2442 = vmatpush1.msra.mxu0 0.0
    %2443 = vmatprep.subr.mxu0 0.0
    %2444 = vmatpush1.msra.mxu0 0.0
    %2445 = vmatprep.subr.mxu0 0.0
    %2446 = vmatpush1.msra.mxu0 0.0
    %2447 = vmatprep.subr.mxu0 0.0
    %2448 = vmatpush1.msra.mxu0 0.0
    %2449 = vmatprep.subr.mxu0 0.0
    %2450 = vmatpush1.msra.mxu0 0.0
    %2451 = vmatprep.subr.mxu0 0.0
    %2452 = vmatpush1.msra.mxu0 0.0
    %2453 = vmatprep.subr.mxu0 0.0
    %2454 = vmatpush1.msra.mxu0 0.0
    %2455 = vmatprep.subr.mxu0 0.0
    %2456 = vmatpush1.msra.mxu0 0.0
    %2457 = vmatprep.subr.mxu0 0.0
    %2458 = vmatpush1.msra.mxu0 0.0
    %2459 = vmatprep.subr.mxu0 0.0
    %2460 = vmatpush1.msra.mxu0 0.0
    %2461 = vmatprep.subr.mxu0 0.0
    %2462 = vmatpush1.msra.mxu0 0.0
    %2463 = vmatprep.subr.mxu0 0.0
    %2464 = vmatpush1.msra.mxu0 0.0
    %2465 = vmatprep.subr.mxu0 0.0
    %2466 = vmatpush1.msra.mxu0 0.0
    %2467 = vmatprep.subr.mxu0 0.0
    %2468 = vmatpush1.msra.mxu0 0.0
    %2469 = vmatprep.subr.mxu0 0.0
    %2470 = vmatpush1.msra.mxu0 0.0
    %2471 = vmatprep.subr.mxu0 0.0
    %2472 = vmatpush1.msra.mxu0 0.0
    %2473 = vmatprep.mubr.f32.mxu0 0.0
    %2474 = vmatmul.mubr.f32.gmra.mrb[0].mxu0 %v2407
    %v2475 = vpop.f32.mrb[0].mxu0
    %v2476 = vadd.f32 %v2404, %v2475
    %v2477 = vpop.f32.mrb[0].mxu0
    %2478 = vdwg.mxu0
    %v2479 = vxor.u32 %v2476, 2147483648
    %v2480 = vmul.f32 %v2479, 1.442695
    %v2481 = vpow.pop %v2480
    %v2482 = vadd.f32 %v2481, 1.0
    %v2483 = vrcp.pop %v2482
    %v2484 = vmul.f32 1.0, %v2483
    %v2485 = vtanh.pop %v2476
    %v2486 = vmul.f32 %v2484, %v2153
    %2488 = vrot.lane.b32.xlu0 %v2485, 104
    %v2489 = vpop.permute.xlu0 %2488
    %v2491 = vmul.f32 %v2484, %v2489
    %2493 = vrot.lane.b32.xlu0 %v2491, 8
    %v2494 = vpop.permute.xlu0 %2493
    %v2496 = vadd.f32 %v2486, %v2494
    %v2497 = vtanh.pop %v2496
    %2499 = vrot.lane.b32.xlu0 %v2497, 8
    %v2500 = vpop.permute.xlu0 %2499
    %v2502 = vmul.f32 %v2484, %v2500
    %2504 = vrot.lane.b32.xlu0 %v2502, 112
    %v2505 = vpop.permute.xlu0 %2504
    %2507 = vrot.lane.b32.xlu0 %v2276, 72
    %v2508 = vpop.permute.xlu0 %2507
    %v2510 = vsel %vm448, %v2505, %v2508
    %v2511 = vld [vmem:[%s6] sm:$0xff]
    %v2512 = vld [vmem:[%s6 + $0x8] sm:$0xff]
    %v2513 = vld [vmem:[%s6 + $0x10] sm:$0xff]
    %v2514 = vld [vmem:[%s6 + $0x18] sm:$0xff]
    %v2515 = vld [vmem:[%s6 + $0x20] sm:$0xff]
    %v2516 = vld [vmem:[%s7] sm:$0x1]
    %v2518 = vlaneseq
    %v2519 = vshrl.u32 %v2518, 7
    %v2520 = vsub.s32 0, %v2519
    %v2521 = vrot.slane %v2516, %v2520
    %v2524 = vsel %vm338, %v2510, 0
    %2526 = vmatprep.subr.mxu0 0.0
    %2527 = vmatpush1.msra.mxu0 %v2511
    %2528 = vmatprep.subr.mxu0 0.0
    %2529 = vmatpush1.msra.mxu0 %v2512
    %2530 = vmatprep.subr.mxu0 0.0
    %2531 = vmatpush1.msra.mxu0 %v2513
    %2532 = vmatprep.subr.mxu0 0.0
    %2533 = vmatpush1.msra.mxu0 %v2514
    %2534 = vmatprep.subr.mxu0 0.0
    %2535 = vmatpush1.msra.mxu0 %v2515
    %2536 = vmatprep.subr.mxu0 0.0
    %2537 = vmatpush1.msra.mxu0 0.0
    %2538 = vmatprep.subr.mxu0 0.0
    %2539 = vmatpush1.msra.mxu0 0.0
    %2540 = vmatprep.subr.mxu0 0.0
    %2541 = vmatpush1.msra.mxu0 0.0
    %2542 = vmatprep.subr.mxu0 0.0
    %2543 = vmatpush1.msra.mxu0 0.0
    %2544 = vmatprep.subr.mxu0 0.0
    %2545 = vmatpush1.msra.mxu0 0.0
    %2546 = vmatprep.subr.mxu0 0.0
    %2547 = vmatpush1.msra.mxu0 0.0
    %2548 = vmatprep.subr.mxu0 0.0
    %2549 = vmatpush1.msra.mxu0 0.0
    %2550 = vmatprep.subr.mxu0 0.0
    %2551 = vmatpush1.msra.mxu0 0.0
    %2552 = vmatprep.subr.mxu0 0.0
    %2553 = vmatpush1.msra.mxu0 0.0
    %2554 = vmatprep.subr.mxu0 0.0
    %2555 = vmatpush1.msra.mxu0 0.0
    %2556 = vmatprep.subr.mxu0 0.0
    %2557 = vmatpush1.msra.mxu0 0.0
    %2558 = vmatprep.subr.mxu0 0.0
    %2559 = vmatpush1.msra.mxu0 0.0
    %2560 = vmatprep.subr.mxu0 0.0
    %2561 = vmatpush1.msra.mxu0 0.0
    %2562 = vmatprep.subr.mxu0 0.0
    %2563 = vmatpush1.msra.mxu0 0.0
    %2564 = vmatprep.subr.mxu0 0.0
    %2565 = vmatpush1.msra.mxu0 0.0
    %2566 = vmatprep.subr.mxu0 0.0
    %2567 = vmatpush1.msra.mxu0 0.0
    %2568 = vmatprep.subr.mxu0 0.0
    %2569 = vmatpush1.msra.mxu0 0.0
    %2570 = vmatprep.subr.mxu0 0.0
    %2571 = vmatpush1.msra.mxu0 0.0
    %2572 = vmatprep.subr.mxu0 0.0
    %2573 = vmatpush1.msra.mxu0 0.0
    %2574 = vmatprep.subr.mxu0 0.0
    %2575 = vmatpush1.msra.mxu0 0.0
    %2576 = vmatprep.subr.mxu0 0.0
    %2577 = vmatpush1.msra.mxu0 0.0
    %2578 = vmatprep.subr.mxu0 0.0
    %2579 = vmatpush1.msra.mxu0 0.0
    %2580 = vmatprep.subr.mxu0 0.0
    %2581 = vmatpush1.msra.mxu0 0.0
    %2582 = vmatprep.subr.mxu0 0.0
    %2583 = vmatpush1.msra.mxu0 0.0
    %2584 = vmatprep.subr.mxu0 0.0
    %2585 = vmatpush1.msra.mxu0 0.0
    %2586 = vmatprep.subr.mxu0 0.0
    %2587 = vmatpush1.msra.mxu0 0.0
    %2588 = vmatprep.subr.mxu0 0.0
    %2589 = vmatpush1.msra.mxu0 0.0
    %2590 = vmatprep.mubr.f32.mxu0 0.0
    %2591 = vmatmul.mubr.f32.gmra.mrb[0].mxu0 %v2524
    %v2592 = vpop.f32.mrb[0].mxu0
    %v2593 = vadd.f32 %v2521, %v2592
    %v2594 = vpop.f32.mrb[0].mxu0
    %2595 = vdwg.mxu0
    %v2596 = vxor.u32 %v2593, 2147483648
    %v2597 = vmul.f32 %v2596, 1.442695
    %v2598 = vpow.pop %v2597
    %v2599 = vadd.f32 %v2598, 1.0
    %v2600 = vrcp.pop %v2599
    %v2601 = vmul.f32 1.0, %v2600
    %v2602 = vtanh.pop %v2593
    %v2603 = vmul.f32 %v2601, %v2270
    %2605 = vrot.lane.b32.xlu0 %v2602, 32
    %v2606 = vpop.permute.xlu0 %2605
    %v2608 = vmul.f32 %v2601, %v2606
    %2610 = vrot.lane.b32.xlu0 %v2608, 32
    %v2611 = vpop.permute.xlu0 %2610
    %v2613 = vadd.f32 %v2603, %v2611
    %v2614 = vtanh.pop %v2613
    %2616 = vrot.lane.b32.xlu0 %v2614, 32
    %v2617 = vpop.permute.xlu0 %2616
    %v2619 = vmul.f32 %v2601, %v2617
    %2621 = vrot.lane.b32.xlu0 %v2619, 64
    %v2622 = vpop.permute.xlu0 %2621
    %s2624 = scalar_lea.vmem [#allocation9], 48
    %2625 = vst.msk [vmem:[%s2624] sm:$0xff] %vm214, %v2622
    %s2626 = scalar_lea.vmem [#allocation8], 56
    %v2627 = vld [vmem:[%s2626] sm:$0xff]
    %v2628 = vld [vmem:[%s2] sm:$0xff]
    %v2629 = vld [vmem:[%s2 + $0x8] sm:$0xff]
    %v2630 = vld [vmem:[%s2 + $0x10] sm:$0xff]
    %v2631 = vld [vmem:[%s2 + $0x18] sm:$0xff]
    %v2632 = vsel %vm214, %v2388, 0
    %2634 = vmatprep.subr.mxu0 0.0
    %2635 = vmatpush1.msra.mxu0 %v2628
    %2636 = vmatprep.subr.mxu0 0.0
    %2637 = vmatpush1.msra.mxu0 %v2629
    %2638 = vmatprep.subr.mxu0 0.0
    %2639 = vmatpush1.msra.mxu0 %v2630
    %2640 = vmatprep.subr.mxu0 0.0
    %2641 = vmatpush1.msra.mxu0 %v2631
    %2642 = vmatprep.subr.mxu0 0.0
    %2643 = vmatpush1.msra.mxu0 0.0
    %2644 = vmatprep.subr.mxu0 0.0
    %2645 = vmatpush1.msra.mxu0 0.0
    %2646 = vmatprep.subr.mxu0 0.0
    %2647 = vmatpush1.msra.mxu0 0.0
    %2648 = vmatprep.subr.mxu0 0.0
    %2649 = vmatpush1.msra.mxu0 0.0
    %2650 = vmatprep.subr.mxu0 0.0
    %2651 = vmatpush1.msra.mxu0 0.0
    %2652 = vmatprep.subr.mxu0 0.0
    %2653 = vmatpush1.msra.mxu0 0.0
    %2654 = vmatprep.subr.mxu0 0.0
    %2655 = vmatpush1.msra.mxu0 0.0
    %2656 = vmatprep.subr.mxu0 0.0
    %2657 = vmatpush1.msra.mxu0 0.0
    %2658 = vmatprep.subr.mxu0 0.0
    %2659 = vmatpush1.msra.mxu0 0.0
    %2660 = vmatprep.subr.mxu0 0.0
    %2661 = vmatpush1.msra.mxu0 0.0
    %2662 = vmatprep.subr.mxu0 0.0
    %2663 = vmatpush1.msra.mxu0 0.0
    %2664 = vmatprep.subr.mxu0 0.0
    %2665 = vmatpush1.msra.mxu0 0.0
    %2666 = vmatprep.subr.mxu0 0.0
    %2667 = vmatpush1.msra.mxu0 0.0
    %2668 = vmatprep.subr.mxu0 0.0
    %2669 = vmatpush1.msra.mxu0 0.0
    %2670 = vmatprep.subr.mxu0 0.0
    %2671 = vmatpush1.msra.mxu0 0.0
    %2672 = vmatprep.subr.mxu0 0.0
    %2673 = vmatpush1.msra.mxu0 0.0
    %2674 = vmatprep.subr.mxu0 0.0
    %2675 = vmatpush1.msra.mxu0 0.0
    %2676 = vmatprep.subr.mxu0 0.0
    %2677 = vmatpush1.msra.mxu0 0.0
    %2678 = vmatprep.subr.mxu0 0.0
    %2679 = vmatpush1.msra.mxu0 0.0
    %2680 = vmatprep.subr.mxu0 0.0
    %2681 = vmatpush1.msra.mxu0 0.0
    %2682 = vmatprep.subr.mxu0 0.0
    %2683 = vmatpush1.msra.mxu0 0.0
    %2684 = vmatprep.subr.mxu0 0.0
    %2685 = vmatpush1.msra.mxu0 0.0
    %2686 = vmatprep.subr.mxu0 0.0
    %2687 = vmatpush1.msra.mxu0 0.0
    %2688 = vmatprep.subr.mxu0 0.0
    %2689 = vmatpush1.msra.mxu0 0.0
    %2690 = vmatprep.subr.mxu0 0.0
    %2691 = vmatpush1.msra.mxu0 0.0
    %2692 = vmatprep.subr.mxu0 0.0
    %2693 = vmatpush1.msra.mxu0 0.0
    %2694 = vmatprep.subr.mxu0 0.0
    %2695 = vmatpush1.msra.mxu0 0.0
    %2696 = vmatprep.subr.mxu0 0.0
    %2697 = vmatpush1.msra.mxu0 0.0
    %2698 = vmatprep.mubr.f32.mxu0 0.0
    %2699 = vmatmul.mubr.f32.gmra.mrb[0].mxu0 %v2632
    %v2700 = vpop.f32.mrb[0].mxu0
    %v2701 = vadd.f32 0.0, %v2700
    %v2702 = vpop.f32.mrb[0].mxu0
    %2703 = vdwg.mxu0
    %v2704 = vadd.f32 %v2627, %v2701
    %v2705 = vxor.u32 %v2704, 2147483648
    %v2706 = vmul.f32 %v2705, 1.442695
    %v2707 = vpow.pop %v2706
    %v2708 = vadd.f32 %v2707, 1.0
    %v2709 = vrcp.pop %v2708
    %v2710 = vmul.f32 1.0, %v2709
    %v2711 = vtanh.pop %v2704
    %v2712 = vmul.f32 %v2710, %v2379
    %2714 = vrot.lane.b32.xlu0 %v2711, 32
    %v2715 = vpop.permute.xlu0 %2714
    %v2717 = vmul.f32 %v2710, %v2715
    %2719 = vrot.lane.b32.xlu0 %v2717, 32
    %v2720 = vpop.permute.xlu0 %2719
    %v2722 = vadd.f32 %v2712, %v2720
    %v2723 = vtanh.pop %v2722
    %2725 = vrot.lane.b32.xlu0 %v2723, 32
    %v2726 = vpop.permute.xlu0 %2725
    %v2728 = vmul.f32 %v2710, %v2726
    %2730 = vrot.lane.b32.xlu0 %v2728, 64
    %v2731 = vpop.permute.xlu0 %2730
    %2733 = vrot.lane.b32.xlu0 %v2502, 16
    %v2734 = vpop.permute.xlu0 %2733
    %v2736 = vsel %vm214, %v2731, %v2734
    %v2737 = vld [vmem:[%s4] sm:$0xff]
    %v2738 = vld [vmem:[%s4 + $0x8] sm:$0xff]
    %v2739 = vld [vmem:[%s4 + $0x10] sm:$0xff]
    %v2740 = vld [vmem:[%s4 + $0x18] sm:$0xff]
    %v2741 = vld [vmem:[%s4 + $0x20] sm:$0xff]
    %v2742 = vld [vmem:[%s5] sm:$0x1]
    %v2744 = vlaneseq
    %v2745 = vshrl.u32 %v2744, 7
    %v2746 = vsub.s32 0, %v2745
    %v2747 = vrot.slane %v2742, %v2746
    %v2750 = vsel %vm338, %v2736, 0
    %2752 = vmatprep.subr.mxu0 0.0
    %2753 = vmatpush1.msra.mxu0 %v2737
    %2754 = vmatprep.subr.mxu0 0.0
    %2755 = vmatpush1.msra.mxu0 %v2738
    %2756 = vmatprep.subr.mxu0 0.0
    %2757 = vmatpush1.msra.mxu0 %v2739
    %2758 = vmatprep.subr.mxu0 0.0
    %2759 = vmatpush1.msra.mxu0 %v2740
    %2760 = vmatprep.subr.mxu0 0.0
    %2761 = vmatpush1.msra.mxu0 %v2741
    %2762 = vmatprep.subr.mxu0 0.0
    %2763 = vmatpush1.msra.mxu0 0.0
    %2764 = vmatprep.subr.mxu0 0.0
    %2765 = vmatpush1.msra.mxu0 0.0
    %2766 = vmatprep.subr.mxu0 0.0
    %2767 = vmatpush1.msra.mxu0 0.0
    %2768 = vmatprep.subr.mxu0 0.0
    %2769 = vmatpush1.msra.mxu0 0.0
    %2770 = vmatprep.subr.mxu0 0.0
    %2771 = vmatpush1.msra.mxu0 0.0
    %2772 = vmatprep.subr.mxu0 0.0
    %2773 = vmatpush1.msra.mxu0 0.0
    %2774 = vmatprep.subr.mxu0 0.0
    %2775 = vmatpush1.msra.mxu0 0.0
    %2776 = vmatprep.subr.mxu0 0.0
    %2777 = vmatpush1.msra.mxu0 0.0
    %2778 = vmatprep.subr.mxu0 0.0
    %2779 = vmatpush1.msra.mxu0 0.0
    %2780 = vmatprep.subr.mxu0 0.0
    %2781 = vmatpush1.msra.mxu0 0.0
    %2782 = vmatprep.subr.mxu0 0.0
    %2783 = vmatpush1.msra.mxu0 0.0
    %2784 = vmatprep.subr.mxu0 0.0
    %2785 = vmatpush1.msra.mxu0 0.0
    %2786 = vmatprep.subr.mxu0 0.0
    %2787 = vmatpush1.msra.mxu0 0.0
    %2788 = vmatprep.subr.mxu0 0.0
    %2789 = vmatpush1.msra.mxu0 0.0
    %2790 = vmatprep.subr.mxu0 0.0
    %2791 = vmatpush1.msra.mxu0 0.0
    %2792 = vmatprep.subr.mxu0 0.0
    %2793 = vmatpush1.msra.mxu0 0.0
    %2794 = vmatprep.subr.mxu0 0.0
    %2795 = vmatpush1.msra.mxu0 0.0
    %2796 = vmatprep.subr.mxu0 0.0
    %2797 = vmatpush1.msra.mxu0 0.0
    %2798 = vmatprep.subr.mxu0 0.0
    %2799 = vmatpush1.msra.mxu0 0.0
    %2800 = vmatprep.subr.mxu0 0.0
    %2801 = vmatpush1.msra.mxu0 0.0
    %2802 = vmatprep.subr.mxu0 0.0
    %2803 = vmatpush1.msra.mxu0 0.0
    %2804 = vmatprep.subr.mxu0 0.0
    %2805 = vmatpush1.msra.mxu0 0.0
    %2806 = vmatprep.subr.mxu0 0.0
    %2807 = vmatpush1.msra.mxu0 0.0
    %2808 = vmatprep.subr.mxu0 0.0
    %2809 = vmatpush1.msra.mxu0 0.0
    %2810 = vmatprep.subr.mxu0 0.0
    %2811 = vmatpush1.msra.mxu0 0.0
    %2812 = vmatprep.subr.mxu0 0.0
    %2813 = vmatpush1.msra.mxu0 0.0
    %2814 = vmatprep.subr.mxu0 0.0
    %2815 = vmatpush1.msra.mxu0 0.0
    %2816 = vmatprep.mubr.f32.mxu0 0.0
    %2817 = vmatmul.mubr.f32.gmra.mrb[0].mxu0 %v2750
    %v2818 = vpop.f32.mrb[0].mxu0
    %v2819 = vadd.f32 %v2747, %v2818
    %v2820 = vpop.f32.mrb[0].mxu0
    %2821 = vdwg.mxu0
    %v2822 = vxor.u32 %v2819, 2147483648
    %v2823 = vmul.f32 %v2822, 1.442695
    %v2824 = vpow.pop %v2823
    %v2825 = vadd.f32 %v2824, 1.0
    %v2826 = vrcp.pop %v2825
    %v2827 = vmul.f32 1.0, %v2826
    %v2828 = vtanh.pop %v2819
    %v2829 = vmul.f32 %v2827, %v2496
    %2831 = vrot.lane.b32.xlu0 %v2828, 104
    %v2832 = vpop.permute.xlu0 %2831
    %v2834 = vmul.f32 %v2827, %v2832
    %2836 = vrot.lane.b32.xlu0 %v2834, 8
    %v2837 = vpop.permute.xlu0 %2836
    %v2839 = vadd.f32 %v2829, %v2837
    %v2840 = vtanh.pop %v2839
    %2842 = vrot.lane.b32.xlu0 %v2840, 8
    %v2843 = vpop.permute.xlu0 %2842
    %v2845 = vmul.f32 %v2827, %v2843
    %2847 = vrot.lane.b32.xlu0 %v2845, 112
    %v2848 = vpop.permute.xlu0 %2847
    %2850 = vrot.lane.b32.xlu0 %v2619, 72
    %v2851 = vpop.permute.xlu0 %2850
    %v2853 = vsel %vm448, %v2848, %v2851
    %v2854 = vld [vmem:[%s6] sm:$0xff]
    %v2855 = vld [vmem:[%s6 + $0x8] sm:$0xff]
    %v2856 = vld [vmem:[%s6 + $0x10] sm:$0xff]
    %v2857 = vld [vmem:[%s6 + $0x18] sm:$0xff]
    %v2858 = vld [vmem:[%s6 + $0x20] sm:$0xff]
    %v2859 = vld [vmem:[%s7] sm:$0x1]
    %v2861 = vlaneseq
    %v2862 = vshrl.u32 %v2861, 7
    %v2863 = vsub.s32 0, %v2862
    %v2864 = vrot.slane %v2859, %v2863
    %v2867 = vsel %vm338, %v2853, 0
    %2869 = vmatprep.subr.mxu0 0.0
    %2870 = vmatpush1.msra.mxu0 %v2854
    %2871 = vmatprep.subr.mxu0 0.0
    %2872 = vmatpush1.msra.mxu0 %v2855
    %2873 = vmatprep.subr.mxu0 0.0
    %2874 = vmatpush1.msra.mxu0 %v2856
    %2875 = vmatprep.subr.mxu0 0.0
    %2876 = vmatpush1.msra.mxu0 %v2857
    %2877 = vmatprep.subr.mxu0 0.0
    %2878 = vmatpush1.msra.mxu0 %v2858
    %2879 = vmatprep.subr.mxu0 0.0
    %2880 = vmatpush1.msra.mxu0 0.0
    %2881 = vmatprep.subr.mxu0 0.0
    %2882 = vmatpush1.msra.mxu0 0.0
    %2883 = vmatprep.subr.mxu0 0.0
    %2884 = vmatpush1.msra.mxu0 0.0
    %2885 = vmatprep.subr.mxu0 0.0
    %2886 = vmatpush1.msra.mxu0 0.0
    %2887 = vmatprep.subr.mxu0 0.0
    %2888 = vmatpush1.msra.mxu0 0.0
    %2889 = vmatprep.subr.mxu0 0.0
    %2890 = vmatpush1.msra.mxu0 0.0
    %2891 = vmatprep.subr.mxu0 0.0
    %2892 = vmatpush1.msra.mxu0 0.0
    %2893 = vmatprep.subr.mxu0 0.0
    %2894 = vmatpush1.msra.mxu0 0.0
    %2895 = vmatprep.subr.mxu0 0.0
    %2896 = vmatpush1.msra.mxu0 0.0
    %2897 = vmatprep.subr.mxu0 0.0
    %2898 = vmatpush1.msra.mxu0 0.0
    %2899 = vmatprep.subr.mxu0 0.0
    %2900 = vmatpush1.msra.mxu0 0.0
    %2901 = vmatprep.subr.mxu0 0.0
    %2902 = vmatpush1.msra.mxu0 0.0
    %2903 = vmatprep.subr.mxu0 0.0
    %2904 = vmatpush1.msra.mxu0 0.0
    %2905 = vmatprep.subr.mxu0 0.0
    %2906 = vmatpush1.msra.mxu0 0.0
    %2907 = vmatprep.subr.mxu0 0.0
    %2908 = vmatpush1.msra.mxu0 0.0
    %2909 = vmatprep.subr.mxu0 0.0
    %2910 = vmatpush1.msra.mxu0 0.0
    %2911 = vmatprep.subr.mxu0 0.0
    %2912 = vmatpush1.msra.mxu0 0.0
    %2913 = vmatprep.subr.mxu0 0.0
    %2914 = vmatpush1.msra.mxu0 0.0
    %2915 = vmatprep.subr.mxu0 0.0
    %2916 = vmatpush1.msra.mxu0 0.0
    %2917 = vmatprep.subr.mxu0 0.0
    %2918 = vmatpush1.msra.mxu0 0.0
    %2919 = vmatprep.subr.mxu0 0.0
    %2920 = vmatpush1.msra.mxu0 0.0
    %2921 = vmatprep.subr.mxu0 0.0
    %2922 = vmatpush1.msra.mxu0 0.0
    %2923 = vmatprep.subr.mxu0 0.0
    %2924 = vmatpush1.msra.mxu0 0.0
    %2925 = vmatprep.subr.mxu0 0.0
    %2926 = vmatpush1.msra.mxu0 0.0
    %2927 = vmatprep.subr.mxu0 0.0
    %2928 = vmatpush1.msra.mxu0 0.0
    %2929 = vmatprep.subr.mxu0 0.0
    %2930 = vmatpush1.msra.mxu0 0.0
    %2931 = vmatprep.subr.mxu0 0.0
    %2932 = vmatpush1.msra.mxu0 0.0
    %2933 = vmatprep.mubr.f32.mxu0 0.0
    %2934 = vmatmul.mubr.f32.gmra.mrb[0].mxu0 %v2867
    %v2935 = vpop.f32.mrb[0].mxu0
    %v2936 = vadd.f32 %v2864, %v2935
    %v2937 = vpop.f32.mrb[0].mxu0
    %2938 = vdwg.mxu0
    %v2939 = vxor.u32 %v2936, 2147483648
    %v2940 = vmul.f32 %v2939, 1.442695
    %v2941 = vpow.pop %v2940
    %v2942 = vadd.f32 %v2941, 1.0
    %v2943 = vrcp.pop %v2942
    %v2944 = vmul.f32 1.0, %v2943
    %v2945 = vtanh.pop %v2936
    %v2946 = vmul.f32 %v2944, %v2613
    %2948 = vrot.lane.b32.xlu0 %v2945, 32
    %v2949 = vpop.permute.xlu0 %2948
    %v2951 = vmul.f32 %v2944, %v2949
    %2953 = vrot.lane.b32.xlu0 %v2951, 32
    %v2954 = vpop.permute.xlu0 %2953
    %v2956 = vadd.f32 %v2946, %v2954
    %v2957 = vtanh.pop %v2956
    %2959 = vrot.lane.b32.xlu0 %v2957, 32
    %v2960 = vpop.permute.xlu0 %2959
    %v2962 = vmul.f32 %v2944, %v2960
    %2964 = vrot.lane.b32.xlu0 %v2962, 64
    %v2965 = vpop.permute.xlu0 %2964
    %s2967 = scalar_lea.vmem [#allocation9], 56
    %2968 = vst.msk [vmem:[%s2967] sm:$0xff] %vm214, %v2965
    %2969 = vst.msk [vmem:[#allocation2] sm:$0xff] %vm214, %v2731
    %2971 = vrot.lane.b32.xlu0 %v2722, 96
    %v2972 = vpop.permute.xlu0 %2971
    %2974 = vst.msk [vmem:[#allocation3] sm:$0xff] %vm214, %v2972
    %2975 = vst.msk [vmem:[#allocation4] sm:$0xff] %vm448, %v2848
    %2977 = vrot.lane.b32.xlu0 %v2839, 120
    %v2978 = vpop.permute.xlu0 %2977
    %2980 = vst.msk [vmem:[#allocation5] sm:$0xff] %vm448, %v2978
    %2981 = vst.msk [vmem:[#allocation6] sm:$0xff] %vm214, %v2965
    %2983 = vrot.lane.b32.xlu0 %v2956, 96
    %v2984 = vpop.permute.xlu0 %2983
    %2986 = vst.msk [vmem:[#allocation7] sm:$0xff] %vm214, %v2984
    %v2987 = vld [vmem:[#allocation9] sm:$0xff]
    %v2988 = vld [vmem:[#allocation9 + $0x8] sm:$0xff]
    %v2989 = vld [vmem:[#allocation9 + $0x10] sm:$0xff]
    %v2990 = vld [vmem:[#allocation9 + $0x18] sm:$0xff]
    %v2991 = vld [vmem:[#allocation9 + $0x20] sm:$0xff]
    %v2992 = vld [vmem:[#allocation9 + $0x28] sm:$0xff]
    %v2993 = vld [vmem:[#allocation9 + $0x30] sm:$0xff]
    %v2994 = vld [vmem:[#allocation9 + $0x38] sm:$0xff]
    %v2995 = vld [vmem:[%s8] sm:$0xff]
    %v2996 = vld [vmem:[%s8 + $0x8] sm:$0xff]
    %v2997 = vld [vmem:[%s8 + $0x10] sm:$0xff]
    %v2998 = vld [vmem:[%s8 + $0x18] sm:$0xff]
    %v2999 = vld [vmem:[%s9] sm:$0x1]
    %v3001 = vlaneseq
    %v3002 = vshrl.u32 %v3001, 7
    %v3003 = vsub.s32 0, %v3002
    %v3004 = vrot.slane %v2999, %v3003
    %v3007 = vsel %vm214, %v2987, 0
    %v3010 = vsel %vm214, %v2988, 0
    %v3013 = vsel %vm214, %v2989, 0
    %v3016 = vsel %vm214, %v2990, 0
    %v3019 = vsel %vm214, %v2991, 0
    %v3022 = vsel %vm214, %v2992, 0
    %v3025 = vsel %vm214, %v2993, 0
    %v3028 = vsel %vm214, %v2994, 0
    %3030 = vmatprep.subr.mxu0 0.0
    %3031 = vmatpush1.msra.mxu0 %v2995
    %3032 = vmatprep.subr.mxu0 0.0
    %3033 = vmatpush1.msra.mxu0 %v2996
    %3034 = vmatprep.subr.mxu0 0.0
    %3035 = vmatpush1.msra.mxu0 %v2997
    %3036 = vmatprep.subr.mxu0 0.0
    %3037 = vmatpush1.msra.mxu0 %v2998
    %3038 = vmatprep.subr.mxu0 0.0
    %3039 = vmatpush1.msra.mxu0 0.0
    %3040 = vmatprep.subr.mxu0 0.0
    %3041 = vmatpush1.msra.mxu0 0.0
    %3042 = vmatprep.subr.mxu0 0.0
    %3043 = vmatpush1.msra.mxu0 0.0
    %3044 = vmatprep.subr.mxu0 0.0
    %3045 = vmatpush1.msra.mxu0 0.0
    %3046 = vmatprep.subr.mxu0 0.0
    %3047 = vmatpush1.msra.mxu0 0.0
    %3048 = vmatprep.subr.mxu0 0.0
    %3049 = vmatpush1.msra.mxu0 0.0
    %3050 = vmatprep.subr.mxu0 0.0
    %3051 = vmatpush1.msra.mxu0 0.0
    %3052 = vmatprep.subr.mxu0 0.0
    %3053 = vmatpush1.msra.mxu0 0.0
    %3054 = vmatprep.subr.mxu0 0.0
    %3055 = vmatpush1.msra.mxu0 0.0
    %3056 = vmatprep.subr.mxu0 0.0
    %3057 = vmatpush1.msra.mxu0 0.0
    %3058 = vmatprep.subr.mxu0 0.0
    %3059 = vmatpush1.msra.mxu0 0.0
    %3060 = vmatprep.subr.mxu0 0.0
    %3061 = vmatpush1.msra.mxu0 0.0
    %3062 = vmatprep.subr.mxu0 0.0
    %3063 = vmatpush1.msra.mxu0 0.0
    %3064 = vmatprep.subr.mxu0 0.0
    %3065 = vmatpush1.msra.mxu0 0.0
    %3066 = vmatprep.subr.mxu0 0.0
    %3067 = vmatpush1.msra.mxu0 0.0
    %3068 = vmatprep.subr.mxu0 0.0
    %3069 = vmatpush1.msra.mxu0 0.0
    %3070 = vmatprep.subr.mxu0 0.0
    %3071 = vmatpush1.msra.mxu0 0.0
    %3072 = vmatprep.subr.mxu0 0.0
    %3073 = vmatpush1.msra.mxu0 0.0
    %3074 = vmatprep.subr.mxu0 0.0
    %3075 = vmatpush1.msra.mxu0 0.0
    %3076 = vmatprep.subr.mxu0 0.0
    %3077 = vmatpush1.msra.mxu0 0.0
    %3078 = vmatprep.subr.mxu0 0.0
    %3079 = vmatpush1.msra.mxu0 0.0
    %3080 = vmatprep.subr.mxu0 0.0
    %3081 = vmatpush1.msra.mxu0 0.0
    %3082 = vmatprep.subr.mxu0 0.0
    %3083 = vmatpush1.msra.mxu0 0.0
    %3084 = vmatprep.subr.mxu0 0.0
    %3085 = vmatpush1.msra.mxu0 0.0
    %3086 = vmatprep.subr.mxu0 0.0
    %3087 = vmatpush1.msra.mxu0 0.0
    %3088 = vmatprep.subr.mxu0 0.0
    %3089 = vmatpush1.msra.mxu0 0.0
    %3090 = vmatprep.subr.mxu0 0.0
    %3091 = vmatpush1.msra.mxu0 0.0
    %3092 = vmatprep.subr.mxu0 0.0
    %3093 = vmatpush1.msra.mxu0 0.0
    %3094 = vmatprep.mubr.f32.mxu0 0.0
    %3095 = vmatmul.mubr.f32.gmra.mrb[0].mxu0 %v3007
    %v3096 = vpop.f32.mrb[0].mxu0
    %v3097 = vadd.f32 %v3004, %v3096
    %v3098 = vpop.f32.mrb[0].mxu0
    %3099 = vmatprep.mubr.f32.mxu0 0.0
    %3100 = vmatmul.mubr.f32.gmra.mrb[0].mxu0 %v3010
    %v3101 = vpop.f32.mrb[0].mxu0
    %v3102 = vadd.f32 %v3004, %v3101
    %v3103 = vpop.f32.mrb[0].mxu0
    %3104 = vmatprep.mubr.f32.mxu0 0.0
    %3105 = vmatmul.mubr.f32.gmra.mrb[0].mxu0 %v3013
    %v3106 = vpop.f32.mrb[0].mxu0
    %v3107 = vadd.f32 %v3004, %v3106
    %v3108 = vpop.f32.mrb[0].mxu0
    %3109 = vmatprep.mubr.f32.mxu0 0.0
    %3110 = vmatmul.mubr.f32.gmra.mrb[0].mxu0 %v3016
    %v3111 = vpop.f32.mrb[0].mxu0
    %v3112 = vadd.f32 %v3004, %v3111
    %v3113 = vpop.f32.mrb[0].mxu0
    %3114 = vmatprep.mubr.f32.mxu0 0.0
    %3115 = vmatmul.mubr.f32.gmra.mrb[0].mxu0 %v3019
    %v3116 = vpop.f32.mrb[0].mxu0
    %v3117 = vadd.f32 %v3004, %v3116
    %v3118 = vpop.f32.mrb[0].mxu0
    %3119 = vmatprep.mubr.f32.mxu0 0.0
    %3120 = vmatmul.mubr.f32.gmra.mrb[0].mxu0 %v3022
    %v3121 = vpop.f32.mrb[0].mxu0
    %v3122 = vadd.f32 %v3004, %v3121
    %v3123 = vpop.f32.mrb[0].mxu0
    %3124 = vmatprep.mubr.f32.mxu0 0.0
    %3125 = vmatmul.mubr.f32.gmra.mrb[0].mxu0 %v3025
    %v3126 = vpop.f32.mrb[0].mxu0
    %v3127 = vadd.f32 %v3004, %v3126
    %v3128 = vpop.f32.mrb[0].mxu0
    %3129 = vmatprep.mubr.f32.mxu0 0.0
    %3130 = vmatmul.mubr.f32.gmra.mrb[0].mxu0 %v3028
    %v3131 = vpop.f32.mrb[0].mxu0
    %v3132 = vadd.f32 %v3004, %v3131
    %v3133 = vpop.f32.mrb[0].mxu0
    %3134 = vdwg.mxu0
    %3135 = vst [vmem:[#allocation10] sm:$0xff] %v3097
    %3136 = vst [vmem:[#allocation10 + $0x8] sm:$0xff] %v3102
    %3137 = vst [vmem:[#allocation10 + $0x10] sm:$0xff] %v3107
    %3138 = vst [vmem:[#allocation10 + $0x18] sm:$0xff] %v3112
    %3139 = vst [vmem:[#allocation10 + $0x20] sm:$0xff] %v3117
    %3140 = vst [vmem:[#allocation10 + $0x28] sm:$0xff] %v3122
    %3141 = vst [vmem:[#allocation10 + $0x30] sm:$0xff] %v3127
    %3142 = vst [vmem:[#allocation10 + $0x38] sm:$0xff] %v3132
    // Predicated region
    $region46: #{tpu_custom_call.1} parent=1 // pred_check
      _
    $region47: #{tpu_custom_call.1} parent=1 // pred_check_branch
      %3144 = sbr.rel (0) target = $region49
    $region48: #{tpu_custom_call.1} parent=1 // pred_region
      %s3146 = ssub.s32 1024, 1024
      %3147 = vsyncadd [#allocation11], %s3146
      %s3148 = sshll.u32 [#allocation10], 4
      %s3149 = int_to_ptr.vmem [resolvable:$true] %s3148
      %3154 = dma.vmem_to_hbm [thread:$0]  %s3149, 1024, %s10, [#allocation11], 128, 128, 8
    $region49: #{tpu_custom_call.1} parent=1 // pred_fallthru
      _
    // Predicated region
    $region50: #{tpu_custom_call.1} parent=1 // pred_check
      _
    $region51: #{tpu_custom_call.1} parent=1 // pred_check_branch
      %3156 = sbr.rel (0) target = $region53
    $region52: #{tpu_custom_call.1} parent=1 // pred_region
      %3157 = dma.done [#allocation11], 1024
    $region53: #{tpu_custom_call.1} parent=1 // pred_fallthru
      _
    %3158 = vsyncpa [#allocation11], 1

</llo_original>
